<compile_context>
chip_gen: v5e
topology: v5e:2x2
jax: 0.10.0
libtpu: 0.0.40
codegen_flags: <defaults>
</compile_context>

<pallas_src>
import functools
import math

import jax
import jax.numpy as jnp
from jax.experimental import pallas as pl
from jax.experimental.pallas import tpu as pltpu  # noqa: F401  (TPU backend assumed)

INPUT_NC = 1
OUTPUT_NC = 1
NGF = 8
N_BLOCKS = 2
BN_EPS = 1e-5
LEAKY_SLOPE = 0.2


# ----------------------------- Pallas kernels ------------------------------
# All kernels compute the lane-dense conv-as-matmul
#     x = W(Cout, K) @ patches^T(K, M)   (bf16 operands, f32 accumulation on MXU)
# and fuse the whole per-layer epilogue before a single store.


def _conv_bn_act_kernel(p_ref, w_ref, g_ref, b_ref, o_ref, *, act, slope, eps):
    x = jnp.dot(w_ref[...], p_ref[...], preferred_element_type=jnp.float32)  # (Cout, M)
    mean = jnp.mean(x, axis=1, keepdims=True)
    xc = x - mean
    var = jnp.mean(xc * xc, axis=1, keepdims=True)      # biased variance (PyTorch BN)
    y = xc * jax.lax.rsqrt(var + eps) * g_ref[...] + b_ref[...]
    if act == "leaky":
        y = jnp.where(y >= 0.0, y, slope * y)
    elif act == "relu":
        y = jnp.maximum(y, 0.0)
    o_ref[...] = y


def _conv_bn_add_kernel(p_ref, w_ref, g_ref, b_ref, res_ref, o_ref, *, eps):
    """Second resblock conv: conv + BN (no act) + residual add, fused."""
    x = jnp.dot(w_ref[...], p_ref[...], preferred_element_type=jnp.float32)
    mean = jnp.mean(x, axis=1, keepdims=True)
    xc = x - mean
    var = jnp.mean(xc * xc, axis=1, keepdims=True)
    y = xc * jax.lax.rsqrt(var + eps) * g_ref[...] + b_ref[...]
    o_ref[...] = y + res_ref[...]


def _conv_shufflebn_relu_kernel(p_ref, w_ref, g_ref, b_ref, grp_ref, o_ref, *, r2, eps):
    """Decoder stage: conv + (BatchNorm that follows PixelShuffle) + ReLU.

    BN after PixelShuffle(r) on output channel co is identical to BN computed over
    the group of r*r conv output channels {co*r2 .. co*r2+r2-1}.  grp_ref is the
    (Cout, Cout) block-diagonal matrix of ones that sums within each group and
    broadcasts back, so no in-kernel reshapes are required.  gamma/beta arrive
    pre-expanded to (Cout, 1).
    """
    x = jnp.dot(w_ref[...], p_ref[...], preferred_element_type=jnp.float32)  # (Cout, M)
    grp = grp_ref[...]
    mean_b = jnp.mean(jnp.dot(grp, x, preferred_element_type=jnp.float32),
                      axis=1, keepdims=True) * (1.0 / r2)
    xc = x - mean_b
    var_b = jnp.mean(jnp.dot(grp, xc * xc, preferred_element_type=jnp.float32),
                     axis=1, keepdims=True) * (1.0 / r2)
    y = xc * jax.lax.rsqrt(var_b + eps) * g_ref[...] + b_ref[...]
    o_ref[...] = jnp.maximum(y, 0.0)


def _conv_bias_tanh_kernel(p_ref, w_ref, bias_ref, o_ref):
    x = jnp.dot(w_ref[...], p_ref[...], preferred_element_type=jnp.float32)
    o_ref[...] = jnp.tanh(x + bias_ref[...])


def _run_fused(kernel, out_shape, *inputs):
    """Single-block fused call; every operand is a small 2-D array resident in VMEM."""
    return pl.pallas_call(
        kernel,
        out_shape=jax.ShapeDtypeStruct(out_shape, jnp.float32),
        grid=(1,),
        in_specs=[pl.BlockSpec(a.shape, lambda i: (0, 0)) for a in inputs],
        out_specs=pl.BlockSpec(out_shape, lambda i: (0, 0)),
    )(*inputs)


# ----------------------------- conv / glue ops ------------------------------


def _im2col_T(x_cnhw, k, pad, stride):
    """CNHW activation -> transposed im2col patches (K, M) bf16, M lane-dense."""
    x = x_cnhw.astype(jnp.bfloat16)
    if pad:
        x = jnp.pad(x, ((0, 0), (0, 0), (pad, pad), (pad, pad)), mode="reflect")
    C, N, Hp, Wp = x.shape
    Ho = (Hp - k) // stride + 1
    Wo = (Wp - k) // stride + 1
    taps = [x[:, :, di:di + stride * Ho:stride, dj:dj + stride * Wo:stride]
            for di in range(k) for dj in range(k)]
    patches = jnp.stack(taps, axis=0).reshape(k * k * C, N * Ho * Wo)
    return patches, (N, Ho, Wo)


def conv_bn_act(x, w, g, b, *, k, pad, stride, act, slope=LEAKY_SLOPE):
    patches, (N, Ho, Wo) = _im2col_T(x, k, pad, stride)
    cout = w.shape[0]
    kern = functools.partial(_conv_bn_act_kernel, act=act, slope=slope, eps=BN_EPS)
    out = _run_fused(kern, (cout, N * Ho * Wo), patches, w, g, b)
    return out.reshape(cout, N, Ho, Wo)


def conv_bn_add(x, w, g, b, res, *, k, pad, stride):
    patches, (N, Ho, Wo) = _im2col_T(x, k, pad, stride)
    cout = w.shape[0]
    kern = functools.partial(_conv_bn_add_kernel, eps=BN_EPS)
    out = _run_fused(kern, (cout, N * Ho * Wo), patches, w, g, b,
                     res.reshape(cout, N * Ho * Wo).astype(jnp.float32))
    return out.reshape(cout, N, Ho, Wo)


def conv_shufflebn_relu(x, w, g, b, grp, *, k, pad, stride, r):
    patches, (N, Ho, Wo) = _im2col_T(x, k, pad, stride)
    cout = w.shape[0]
    kern = functools.partial(_conv_shufflebn_relu_kernel, r2=r * r, eps=BN_EPS)
    out = _run_fused(kern, (cout, N * Ho * Wo), patches, w, g, b, grp)
    return pixel_shuffle_cnhw(out.reshape(cout, N, Ho, Wo), r)


def conv_bias_tanh(x, w, bias, *, k, pad, stride):
    patches, (N, Ho, Wo) = _im2col_T(x, k, pad, stride)
    cout = w.shape[0]
    out = _run_fused(_conv_bias_tanh_kernel, (cout, N * Ho * Wo), patches, w, bias)
    return out.reshape(cout, N, Ho, Wo)


def pixel_shuffle_cnhw(x, r):
    """PyTorch nn.PixelShuffle semantics on a CNHW tensor (pure permutation)."""
    C, N, H, W = x.shape
    co = C // (r * r)
    x = x.reshape(co, r, r, N, H, W)
    x = jnp.transpose(x, (0, 3, 4, 1, 5, 2))
    return x.reshape(co, N, H * r, W * r)


# ----------------------------- parameters ------------------------------


def init_params(key, input_nc=INPUT_NC, output_nc=OUTPUT_NC, ngf=NGF, n_blocks=N_BLOCKS):
    """Raw parameters in PyTorch layout / init distributions."""
    cnt = [0]

    def nk():
        cnt[0] += 1
        return jax.random.fold_in(key, cnt[0])

    def conv_w(o, i, k):  # kaiming_normal_ (fan_in, gain=sqrt(2))
        fan_in = i * k * k
        return jax.random.normal(nk(), (o, i, k, k), jnp.float32) * math.sqrt(2.0 / fan_in)

    def bn(c):  # weight ~ N(1, 0.02), bias = 0
        g = 1.0 + 0.02 * jax.random.normal(nk(), (c,), jnp.float32)
        return g, jnp.zeros((c,), jnp.float32)

    p = {}
    p["enc0_w"] = conv_w(ngf, input_nc, 7)
    p["enc0_g"], p["enc0_b"] = bn(ngf)
    for i in range(n_blocks):
        cin, cout = ngf * 2 ** i, ngf * 2 ** (i + 1)
        p[f"down{i}_w"] = conv_w(cout, cin, 3)
        p[f"down{i}_g"], p[f"down{i}_b"] = bn(cout)
    dim = ngf * 2 ** n_blocks
    for i in range(n_blocks):
        p[f"res{i}_w1"] = conv_w(dim, dim, 3)
        p[f"res{i}_g1"], p[f"res{i}_b1"] = bn(dim)
        p[f"res{i}_w2"] = conv_w(dim, dim, 3)
        p[f"res{i}_g2"], p[f"res{i}_b2"] = bn(dim)
    for name in ("img", "wf"):
        for i in range(n_blocks):
            mult = 2 ** (n_blocks - i)
            p[f"dec_{name}_{i}_w"] = conv_w(ngf * mult * 2, ngf * mult, 3)
            p[f"dec_{name}_{i}_g"], p[f"dec_{name}_{i}_b"] = bn(ngf * mult // 2)
    p["dec_img_w"] = conv_w(output_nc * 3, ngf * 2, 7)
    p["dec_img_bias"] = jax.random.normal(nk(), (output_nc * 3,), jnp.float32)
    p["dec_wf_w"] = conv_w(output_nc, ngf, 7)
    p["dec_wf_bias"] = jax.random.normal(nk(), (output_nc,), jnp.float32)
    return p


def pack_params(raw, ngf=NGF, output_nc=OUTPUT_NC, n_blocks=N_BLOCKS):
    """One-time pre-packing: (O,I,kh,kw) -> (O, kh*kw*I) bf16, BN params as (C,1) f32,
    decoder gamma/beta expanded over shuffle groups, and the two heads fused."""

    def pack_w(w):
        o, i, kh, kw = w.shape
        return jnp.transpose(w, (0, 2, 3, 1)).reshape(o, kh * kw * i).astype(jnp.bfloat16)

    def col(v):
        return jnp.asarray(v, jnp.float32).reshape(-1, 1)

    p = {}
    p["enc0_w"], p["enc0_g"], p["enc0_b"] = pack_w(raw["enc0_w"]), col(raw["enc0_g"]), col(raw["enc0_b"])
    for i in range(n_blocks):
        p[f"down{i}_w"] = pack_w(raw[f"down{i}_w"])
        p[f"down{i}_g"] = col(raw[f"down{i}_g"])
        p[f"down{i}_b"] = col(raw[f"down{i}_b"])
    for i in range(n_blocks):
        for j in (1, 2):
            p[f"res{i}_w{j}"] = pack_w(raw[f"res{i}_w{j}"])
            p[f"res{i}_g{j}"] = col(raw[f"res{i}_g{j}"])
            p[f"res{i}_b{j}"] = col(raw[f"res{i}_b{j}"])
    r2 = 4  # PixelShuffle(2)
    for name in ("img", "wf"):
        for i in range(n_blocks):
            w = raw[f"dec_{name}_{i}_w"]
            cout = w.shape[0]
            co = cout // r2
            p[f"dec_{name}_{i}_w"] = pack_w(w)
            p[f"dec_{name}_{i}_g"] = col(jnp.repeat(raw[f"dec_{name}_{i}_g"], r2))
            p[f"dec_{name}_{i}_b"] = col(jnp.repeat(raw[f"dec_{name}_{i}_b"], r2))
            p[f"dec_{name}_{i}_grp"] = jnp.kron(jnp.eye(co, dtype=jnp.float32),
                                                jnp.ones((r2, r2), jnp.float32))
    # fused 7x7 output head: rows 0..2 = img head (input = [img_base, wf_base]),
    # row 3 = wf head, zero weights over the img_base channels.
    w_img = raw["dec_img_w"]                                   # (3, 2*ngf, 7, 7)
    w_wf = raw["dec_wf_w"]                                     # (1, ngf, 7, 7)
    w_wf_full = jnp.concatenate([jnp.zeros_like(w_wf), w_wf], axis=1)   # (1, 2*ngf, 7, 7)
    p["head_w"] = pack_w(jnp.concatenate([w_img, w_wf_full], axis=0))   # (4, 49*2*ngf)
    p["head_bias"] = col(jnp.concatenate([raw["dec_img_bias"], raw["dec_wf_bias"]]))
    return p


# ----------------------------- forward ------------------------------


def generator_forward(params, img_real, wf_real, color_real, n_blocks=N_BLOCKS):
    """Mirrors Generator.forward with colorguide=False, trainG=False."""
    del img_real, color_real  # only used by the (untranslated) loss branch
    x = jnp.transpose(wf_real, (1, 0, 2, 3)).astype(jnp.float32)  # NCHW -> CNHW

    # --- encoder ---
    h = conv_bn_act(x, params["enc0_w"], params["enc0_g"], params["enc0_b"],
                    k=7, pad=3, stride=1, act="leaky")
    for i in range(n_blocks):
        h = conv_bn_act(h, params[f"down{i}_w"], params[f"down{i}_g"], params[f"down{i}_b"],
                        k=3, pad=1, stride=2, act="leaky")
    for i in range(n_blocks):
        r = conv_bn_act(h, params[f"res{i}_w1"], params[f"res{i}_g1"], params[f"res{i}_b1"],
                        k=3, pad=1, stride=1, act="relu")
        h = conv_bn_add(r, params[f"res{i}_w2"], params[f"res{i}_g2"], params[f"res{i}_b2"], h,
                        k=3, pad=1, stride=1)
    embedding = h

    # --- decoders: conv + PixelShuffle + BN + ReLU fused per stage ---
    def dec_base(name):
        hh = embedding
        for i in range(n_blocks):
            hh = conv_shufflebn_relu(
                hh, params[f"dec_{name}_{i}_w"], params[f"dec_{name}_{i}_g"],
                params[f"dec_{name}_{i}_b"], params[f"dec_{name}_{i}_grp"],
                k=3, pad=1, stride=1, r=2)
        return hh

    img_base = dec_base("img")
    wf_base = dec_base("wf")

    # fused 7x7 output head (bias + tanh): rows 0..2 -> img, row 3 -> wf
    head_in = jnp.concatenate([img_base, wf_base], axis=0)       # channel axis in CNHW
    head = conv_bias_tanh(head_in, params["head_w"], params["head_bias"], k=7, pad=3, stride=1)

    img = jnp.transpose(head[:3], (1, 0, 2, 3))                  # CNHW -> NCHW
    wf = jnp.transpose(head[3:4], (1, 0, 2, 3))
    # trainG=False branch: losses are None
    return img, wf, None, None, None, None, None


# ----------------------------- main ------------------------------

if __name__ == "__main__":
    key = jax.random.PRNGKey(0)
    kp, k1, k2, k3 = jax.random.split(key, 4)

    params = pack_params(init_params(kp))

    B, H, W = 2, 16, 16
    wf_real = jax.random.normal(k1, (B, INPUT_NC, H, W), jnp.float32)        # NCHW
    img_real = jax.random.normal(k2, (B, OUTPUT_NC * 3, H, W), jnp.float32)  # NCHW
    color_real = jax.random.uniform(k3, (B, 3), jnp.float32)                 # unused (colorguide=False)

    fwd = jax.jit(generator_forward)
    img, wf, lossG, wf_ssim, img_l1, color_l1, wf_l1 = fwd(params, img_real, wf_real, color_real)
    jax.block_until_ready((img, wf))

    assert img.shape == (B, OUTPUT_NC * 3, H, W), img.shape
    assert wf.shape == (B, OUTPUT_NC, H, W), wf.shape
    assert bool(jnp.all(jnp.abs(img) <= 1.0)) and bool(jnp.all(jnp.abs(wf) <= 1.0))
    print("KERNEL_OK")
</pallas_src>

<mosaic_0001>
module attributes {stable_mosaic.version = 11 : i64} {
  func.func @_conv_bn_act_kernel(%arg0: i32, %arg1: memref<49x512xbf16, #tpu.memory_space<vmem>>, %arg2: memref<8x49xbf16, #tpu.memory_space<vmem>>, %arg3: memref<8x1xf32, #tpu.memory_space<vmem>>, %arg4: memref<8x1xf32, #tpu.memory_space<vmem>>, %arg5: memref<8x512xf32, #tpu.memory_space<vmem>>) attributes {dimension_semantics = [#tpu.dimension_semantics<arbitrary>], iteration_bounds = array<i64: 1>, scalar_prefetch = 0 : i64, scratch_operands = 0 : i64, tpu.core_type = #tpu.core_type<tc>, window_params = [{pipeline_mode = #tpu.pipeline_mode<synchronous>, transform_indices = @transform_0, window_bounds = array<i64: 49, 512>}, {pipeline_mode = #tpu.pipeline_mode<synchronous>, transform_indices = @transform_1, window_bounds = array<i64: 8, 49>}, {pipeline_mode = #tpu.pipeline_mode<synchronous>, transform_indices = @transform_2, window_bounds = array<i64: 8, 1>}, {pipeline_mode = #tpu.pipeline_mode<synchronous>, transform_indices = @transform_3, window_bounds = array<i64: 8, 1>}, {pipeline_mode = #tpu.pipeline_mode<synchronous>, transform_indices = @transform_4, window_bounds = array<i64: 8, 512>}]} {
    %c0 = arith.constant 0 : index
    %c0_0 = arith.constant 0 : index
    %0 = vector.load %arg2[%c0, %c0_0] : memref<8x49xbf16, #tpu.memory_space<vmem>>, vector<8x49xbf16>
    %c0_1 = arith.constant 0 : index
    %c0_2 = arith.constant 0 : index
    %1 = vector.load %arg1[%c0_1, %c0_2] : memref<49x512xbf16, #tpu.memory_space<vmem>>, vector<49x512xbf16>
    %cst = arith.constant dense<0.000000e+00> : vector<8x512xf32>
    %2 = tpu.matmul %0, %1, %cst {dimension_numbers = #tpu.dot_dimension_numbers<[1], [0], [0], [1], [0, 0, 1, 1], [], []>} : vector<8x49xbf16>, vector<49x512xbf16>, vector<8x512xf32> -> vector<8x512xf32>
    %cst_3 = arith.constant dense<0.000000e+00> : vector<8xf32>
    %3 = vector.multi_reduction <add>, %2, %cst_3 [1] : vector<8x512xf32> to vector<8xf32>
    %4 = vector.shape_cast %3 : vector<8xf32> to vector<8x1xf32>
    %cst_4 = arith.constant 5.120000e+02 : f32
    %5 = vector.broadcast %cst_4 : f32 to vector<8x1xf32>
    %6 = arith.divf %4, %5 : vector<8x1xf32>
    %7 = vector.broadcast %6 : vector<8x1xf32> to vector<8x512xf32>
    %8 = arith.subf %2, %7 : vector<8x512xf32>
    %9 = arith.mulf %8, %8 : vector<8x512xf32>
    %cst_5 = arith.constant dense<0.000000e+00> : vector<8xf32>
    %10 = vector.multi_reduction <add>, %9, %cst_5 [1] : vector<8x512xf32> to vector<8xf32>
    %11 = vector.shape_cast %10 : vector<8xf32> to vector<8x1xf32>
    %cst_6 = arith.constant 5.120000e+02 : f32
    %12 = vector.broadcast %cst_6 : f32 to vector<8x1xf32>
    %13 = arith.divf %11, %12 : vector<8x1xf32>
    %cst_7 = arith.constant 9.99999974E-6 : f32
    %14 = vector.broadcast %cst_7 : f32 to vector<8x1xf32>
    %15 = arith.addf %13, %14 : vector<8x1xf32>
    %16 = math.rsqrt %15 : vector<8x1xf32>
    %17 = vector.broadcast %16 : vector<8x1xf32> to vector<8x512xf32>
    %18 = arith.mulf %8, %17 : vector<8x512xf32>
    %c0_8 = arith.constant 0 : index
    %c0_9 = arith.constant 0 : index
    %19 = vector.load %arg3[%c0_8, %c0_9] : memref<8x1xf32, #tpu.memory_space<vmem>>, vector<8x1xf32>
    %20 = vector.broadcast %19 : vector<8x1xf32> to vector<8x512xf32>
    %21 = arith.mulf %18, %20 : vector<8x512xf32>
    %c0_10 = arith.constant 0 : index
    %c0_11 = arith.constant 0 : index
    %22 = vector.load %arg4[%c0_10, %c0_11] : memref<8x1xf32, #tpu.memory_space<vmem>>, vector<8x1xf32>
    %23 = vector.broadcast %22 : vector<8x1xf32> to vector<8x512xf32>
    %24 = arith.addf %21, %23 : vector<8x512xf32>
    %cst_12 = arith.constant 0.000000e+00 : f32
    %25 = vector.broadcast %cst_12 : f32 to vector<8x512xf32>
    %26 = arith.cmpf oge, %24, %25 : vector<8x512xf32>
    %cst_13 = arith.constant 2.000000e-01 : f32
    %27 = vector.broadcast %cst_13 : f32 to vector<8x512xf32>
    %28 = arith.mulf %27, %24 : vector<8x512xf32>
    %29 = arith.select %26, %24, %28 : vector<8x512xi1>, vector<8x512xf32>
    %c0_14 = arith.constant 0 : index
    %c0_15 = arith.constant 0 : index
    %30 = vector.load %arg5[%c0_14, %c0_15] : memref<8x512xf32, #tpu.memory_space<vmem>>, vector<8x512xf32>
    tpu.vector_store %arg5[%c0_14, %c0_15], %29 {strides = array<i32>} : memref<8x512xf32, #tpu.memory_space<vmem>>, vector<8x512xf32>,
    return
  }
  func.func @transform_0(%arg0: i32) -> (i32, i32) {
    %c0_i32 = arith.constant 0 : i32
    %c0_i32_0 = arith.constant 0 : i32
    %c0_i32_1 = arith.constant 0 : i32
    return %c0_i32, %c0_i32_0 : i32, i32
  }
  func.func @transform_1(%arg0: i32) -> (i32, i32) {
    %c0_i32 = arith.constant 0 : i32
    %c0_i32_0 = arith.constant 0 : i32
    %c0_i32_1 = arith.constant 0 : i32
    return %c0_i32, %c0_i32_0 : i32, i32
  }
  func.func @transform_2(%arg0: i32) -> (i32, i32) {
    %c0_i32 = arith.constant 0 : i32
    %c0_i32_0 = arith.constant 0 : i32
    %c0_i32_1 = arith.constant 0 : i32
    return %c0_i32, %c0_i32_0 : i32, i32
  }
  func.func @transform_3(%arg0: i32) -> (i32, i32) {
    %c0_i32 = arith.constant 0 : i32
    %c0_i32_0 = arith.constant 0 : i32
    %c0_i32_1 = arith.constant 0 : i32
    return %c0_i32, %c0_i32_0 : i32, i32
  }
  func.func @transform_4(%arg0: i32) -> (i32, i32) {
    %c0_i32 = arith.constant 0 : i32
    %c0_i32_0 = arith.constant 0 : i32
    %c0_i32_1 = arith.constant 0 : i32
    return %c0_i32, %c0_i32_0 : i32, i32
  }
}

module attributes {stable_mosaic.version = 11 : i64} {
  func.func @_conv_bn_act_kernel(%arg0: i32, %arg1: memref<72x128xbf16, #tpu.memory_space<vmem>>, %arg2: memref<16x72xbf16, #tpu.memory_space<vmem>>, %arg3: memref<16x1xf32, #tpu.memory_space<vmem>>, %arg4: memref<16x1xf32, #tpu.memory_space<vmem>>, %arg5: memref<16x128xf32, #tpu.memory_space<vmem>>) attributes {dimension_semantics = [#tpu.dimension_semantics<arbitrary>], iteration_bounds = array<i64: 1>, scalar_prefetch = 0 : i64, scratch_operands = 0 : i64, tpu.core_type = #tpu.core_type<tc>, window_params = [{pipeline_mode = #tpu.pipeline_mode<synchronous>, transform_indices = @transform_0, window_bounds = array<i64: 72, 128>}, {pipeline_mode = #tpu.pipeline_mode<synchronous>, transform_indices = @transform_1, window_bounds = array<i64: 16, 72>}, {pipeline_mode = #tpu.pipeline_mode<synchronous>, transform_indices = @transform_2, window_bounds = array<i64: 16, 1>}, {pipeline_mode = #tpu.pipeline_mode<synchronous>, transform_indices = @transform_3, window_bounds = array<i64: 16, 1>}, {pipeline_mode = #tpu.pipeline_mode<synchronous>, transform_indices = @transform_4, window_bounds = array<i64: 16, 128>}]} {
    %c0 = arith.constant 0 : index
    %c0_0 = arith.constant 0 : index
    %0 = vector.load %arg2[%c0, %c0_0] : memref<16x72xbf16, #tpu.memory_space<vmem>>, vector<16x72xbf16>
    %c0_1 = arith.constant 0 : index
    %c0_2 = arith.constant 0 : index
    %1 = vector.load %arg1[%c0_1, %c0_2] : memref<72x128xbf16, #tpu.memory_space<vmem>>, vector<72x128xbf16>
    %cst = arith.constant dense<0.000000e+00> : vector<16x128xf32>
    %2 = tpu.matmul %0, %1, %cst {dimension_numbers = #tpu.dot_dimension_numbers<[1], [0], [0], [1], [0, 0, 1, 1], [], []>} : vector<16x72xbf16>, vector<72x128xbf16>, vector<16x128xf32> -> vector<16x128xf32>
    %cst_3 = arith.constant dense<0.000000e+00> : vector<16xf32>
    %3 = vector.multi_reduction <add>, %2, %cst_3 [1] : vector<16x128xf32> to vector<16xf32>
    %4 = vector.shape_cast %3 : vector<16xf32> to vector<16x1xf32>
    %cst_4 = arith.constant 1.280000e+02 : f32
    %5 = vector.broadcast %cst_4 : f32 to vector<16x1xf32>
    %6 = arith.divf %4, %5 : vector<16x1xf32>
    %7 = vector.broadcast %6 : vector<16x1xf32> to vector<16x128xf32>
    %8 = arith.subf %2, %7 : vector<16x128xf32>
    %9 = arith.mulf %8, %8 : vector<16x128xf32>
    %cst_5 = arith.constant dense<0.000000e+00> : vector<16xf32>
    %10 = vector.multi_reduction <add>, %9, %cst_5 [1] : vector<16x128xf32> to vector<16xf32>
    %11 = vector.shape_cast %10 : vector<16xf32> to vector<16x1xf32>
    %cst_6 = arith.constant 1.280000e+02 : f32
    %12 = vector.broadcast %cst_6 : f32 to vector<16x1xf32>
    %13 = arith.divf %11, %12 : vector<16x1xf32>
    %cst_7 = arith.constant 9.99999974E-6 : f32
    %14 = vector.broadcast %cst_7 : f32 to vector<16x1xf32>
    %15 = arith.addf %13, %14 : vector<16x1xf32>
    %16 = math.rsqrt %15 : vector<16x1xf32>
    %17 = vector.broadcast %16 : vector<16x1xf32> to vector<16x128xf32>
    %18 = arith.mulf %8, %17 : vector<16x128xf32>
    %c0_8 = arith.constant 0 : index
    %c0_9 = arith.constant 0 : index
    %19 = vector.load %arg3[%c0_8, %c0_9] : memref<16x1xf32, #tpu.memory_space<vmem>>, vector<16x1xf32>
    %20 = vector.broadcast %19 : vector<16x1xf32> to vector<16x128xf32>
    %21 = arith.mulf %18, %20 : vector<16x128xf32>
    %c0_10 = arith.constant 0 : index
    %c0_11 = arith.constant 0 : index
    %22 = vector.load %arg4[%c0_10, %c0_11] : memref<16x1xf32, #tpu.memory_space<vmem>>, vector<16x1xf32>
    %23 = vector.broadcast %22 : vector<16x1xf32> to vector<16x128xf32>
    %24 = arith.addf %21, %23 : vector<16x128xf32>
    %cst_12 = arith.constant 0.000000e+00 : f32
    %25 = vector.broadcast %cst_12 : f32 to vector<16x128xf32>
    %26 = arith.cmpf oge, %24, %25 : vector<16x128xf32>
    %cst_13 = arith.constant 2.000000e-01 : f32
    %27 = vector.broadcast %cst_13 : f32 to vector<16x128xf32>
    %28 = arith.mulf %27, %24 : vector<16x128xf32>
    %29 = arith.select %26, %24, %28 : vector<16x128xi1>, vector<16x128xf32>
    %c0_14 = arith.constant 0 : index
    %c0_15 = arith.constant 0 : index
    %30 = vector.load %arg5[%c0_14, %c0_15] : memref<16x128xf32, #tpu.memory_space<vmem>>, vector<16x128xf32>
    tpu.vector_store %arg5[%c0_14, %c0_15], %29 {strides = array<i32>} : memref<16x128xf32, #tpu.memory_space<vmem>>, vector<16x128xf32>,
    return
  }
  func.func @transform_0(%arg0: i32) -> (i32, i32) {
    %c0_i32 = arith.constant 0 : i32
    %c0_i32_0 = arith.constant 0 : i32
    %c0_i32_1 = arith.constant 0 : i32
    return %c0_i32, %c0_i32_0 : i32, i32
  }
  func.func @transform_1(%arg0: i32) -> (i32, i32) {
    %c0_i32 = arith.constant 0 : i32
    %c0_i32_0 = arith.constant 0 : i32
    %c0_i32_1 = arith.constant 0 : i32
    return %c0_i32, %c0_i32_0 : i32, i32
  }
  func.func @transform_2(%arg0: i32) -> (i32, i32) {
    %c0_i32 = arith.constant 0 : i32
    %c0_i32_0 = arith.constant 0 : i32
    %c0_i32_1 = arith.constant 0 : i32
    return %c0_i32, %c0_i32_0 : i32, i32
  }
  func.func @transform_3(%arg0: i32) -> (i32, i32) {
    %c0_i32 = arith.constant 0 : i32
    %c0_i32_0 = arith.constant 0 : i32
    %c0_i32_1 = arith.constant 0 : i32
    return %c0_i32, %c0_i32_0 : i32, i32
  }
  func.func @transform_4(%arg0: i32) -> (i32, i32) {
    %c0_i32 = arith.constant 0 : i32
    %c0_i32_0 = arith.constant 0 : i32
    %c0_i32_1 = arith.constant 0 : i32
    return %c0_i32, %c0_i32_0 : i32, i32
  }
}

module attributes {stable_mosaic.version = 11 : i64} {
  func.func @_conv_bn_act_kernel(%arg0: i32, %arg1: memref<144x32xbf16, #tpu.memory_space<vmem>>, %arg2: memref<32x144xbf16, #tpu.memory_space<vmem>>, %arg3: memref<32x1xf32, #tpu.memory_space<vmem>>, %arg4: memref<32x1xf32, #tpu.memory_space<vmem>>, %arg5: memref<32x32xf32, #tpu.memory_space<vmem>>) attributes {dimension_semantics = [#tpu.dimension_semantics<arbitrary>], iteration_bounds = array<i64: 1>, scalar_prefetch = 0 : i64, scratch_operands = 0 : i64, tpu.core_type = #tpu.core_type<tc>, window_params = [{pipeline_mode = #tpu.pipeline_mode<synchronous>, transform_indices = @transform_0, window_bounds = array<i64: 144, 32>}, {pipeline_mode = #tpu.pipeline_mode<synchronous>, transform_indices = @transform_1, window_bounds = array<i64: 32, 144>}, {pipeline_mode = #tpu.pipeline_mode<synchronous>, transform_indices = @transform_2, window_bounds = array<i64: 32, 1>}, {pipeline_mode = #tpu.pipeline_mode<synchronous>, transform_indices = @transform_3, window_bounds = array<i64: 32, 1>}, {pipeline_mode = #tpu.pipeline_mode<synchronous>, transform_indices = @transform_4, window_bounds = array<i64: 32, 32>}]} {
    %c0 = arith.constant 0 : index
    %c0_0 = arith.constant 0 : index
    %0 = vector.load %arg2[%c0, %c0_0] : memref<32x144xbf16, #tpu.memory_space<vmem>>, vector<32x144xbf16>
    %c0_1 = arith.constant 0 : index
    %c0_2 = arith.constant 0 : index
    %1 = vector.load %arg1[%c0_1, %c0_2] : memref<144x32xbf16, #tpu.memory_space<vmem>>, vector<144x32xbf16>
    %cst = arith.constant dense<0.000000e+00> : vector<32x32xf32>
    %2 = tpu.matmul %0, %1, %cst {dimension_numbers = #tpu.dot_dimension_numbers<[1], [0], [0], [1], [0, 0, 1, 1], [], []>} : vector<32x144xbf16>, vector<144x32xbf16>, vector<32x32xf32> -> vector<32x32xf32>
    %cst_3 = arith.constant dense<0.000000e+00> : vector<32xf32>
    %3 = vector.multi_reduction <add>, %2, %cst_3 [1] : vector<32x32xf32> to vector<32xf32>
    %4 = vector.shape_cast %3 : vector<32xf32> to vector<32x1xf32>
    %cst_4 = arith.constant 3.200000e+01 : f32
    %5 = vector.broadcast %cst_4 : f32 to vector<32x1xf32>
    %6 = arith.divf %4, %5 : vector<32x1xf32>
    %7 = vector.broadcast %6 : vector<32x1xf32> to vector<32x32xf32>
    %8 = arith.subf %2, %7 : vector<32x32xf32>
    %9 = arith.mulf %8, %8 : vector<32x32xf32>
    %cst_5 = arith.constant dense<0.000000e+00> : vector<32xf32>
    %10 = vector.multi_reduction <add>, %9, %cst_5 [1] : vector<32x32xf32> to vector<32xf32>
    %11 = vector.shape_cast %10 : vector<32xf32> to vector<32x1xf32>
    %cst_6 = arith.constant 3.200000e+01 : f32
    %12 = vector.broadcast %cst_6 : f32 to vector<32x1xf32>
    %13 = arith.divf %11, %12 : vector<32x1xf32>
    %cst_7 = arith.constant 9.99999974E-6 : f32
    %14 = vector.broadcast %cst_7 : f32 to vector<32x1xf32>
    %15 = arith.addf %13, %14 : vector<32x1xf32>
    %16 = math.rsqrt %15 : vector<32x1xf32>
    %17 = vector.broadcast %16 : vector<32x1xf32> to vector<32x32xf32>
    %18 = arith.mulf %8, %17 : vector<32x32xf32>
    %c0_8 = arith.constant 0 : index
    %c0_9 = arith.constant 0 : index
    %19 = vector.load %arg3[%c0_8, %c0_9] : memref<32x1xf32, #tpu.memory_space<vmem>>, vector<32x1xf32>
    %20 = vector.broadcast %19 : vector<32x1xf32> to vector<32x32xf32>
    %21 = arith.mulf %18, %20 : vector<32x32xf32>
    %c0_10 = arith.constant 0 : index
    %c0_11 = arith.constant 0 : index
    %22 = vector.load %arg4[%c0_10, %c0_11] : memref<32x1xf32, #tpu.memory_space<vmem>>, vector<32x1xf32>
    %23 = vector.broadcast %22 : vector<32x1xf32> to vector<32x32xf32>
    %24 = arith.addf %21, %23 : vector<32x32xf32>
    %cst_12 = arith.constant 0.000000e+00 : f32
    %25 = vector.broadcast %cst_12 : f32 to vector<32x32xf32>
    %26 = arith.cmpf oge, %24, %25 : vector<32x32xf32>
    %cst_13 = arith.constant 2.000000e-01 : f32
    %27 = vector.broadcast %cst_13 : f32 to vector<32x32xf32>
    %28 = arith.mulf %27, %24 : vector<32x32xf32>
    %29 = arith.select %26, %24, %28 : vector<32x32xi1>, vector<32x32xf32>
    %c0_14 = arith.constant 0 : index
    %c0_15 = arith.constant 0 : index
    %30 = vector.load %arg5[%c0_14, %c0_15] : memref<32x32xf32, #tpu.memory_space<vmem>>, vector<32x32xf32>
    tpu.vector_store %arg5[%c0_14, %c0_15], %29 {strides = array<i32>} : memref<32x32xf32, #tpu.memory_space<vmem>>, vector<32x32xf32>,
    return
  }
  func.func @transform_0(%arg0: i32) -> (i32, i32) {
    %c0_i32 = arith.constant 0 : i32
    %c0_i32_0 = arith.constant 0 : i32
    %c0_i32_1 = arith.constant 0 : i32
    return %c0_i32, %c0_i32_0 : i32, i32
  }
  func.func @transform_1(%arg0: i32) -> (i32, i32) {
    %c0_i32 = arith.constant 0 : i32
    %c0_i32_0 = arith.constant 0 : i32
    %c0_i32_1 = arith.constant 0 : i32
    return %c0_i32, %c0_i32_0 : i32, i32
  }
  func.func @transform_2(%arg0: i32) -> (i32, i32) {
    %c0_i32 = arith.constant 0 : i32
    %c0_i32_0 = arith.constant 0 : i32
    %c0_i32_1 = arith.constant 0 : i32
    return %c0_i32, %c0_i32_0 : i32, i32
  }
  func.func @transform_3(%arg0: i32) -> (i32, i32) {
    %c0_i32 = arith.constant 0 : i32
    %c0_i32_0 = arith.constant 0 : i32
    %c0_i32_1 = arith.constant 0 : i32
    return %c0_i32, %c0_i32_0 : i32, i32
  }
  func.func @transform_4(%arg0: i32) -> (i32, i32) {
    %c0_i32 = arith.constant 0 : i32
    %c0_i32_0 = arith.constant 0 : i32
    %c0_i32_1 = arith.constant 0 : i32
    return %c0_i32, %c0_i32_0 : i32, i32
  }
}

module attributes {stable_mosaic.version = 11 : i64} {
  func.func @_conv_bn_act_kernel(%arg0: i32, %arg1: memref<288x32xbf16, #tpu.memory_space<vmem>>, %arg2: memref<32x288xbf16, #tpu.memory_space<vmem>>, %arg3: memref<32x1xf32, #tpu.memory_space<vmem>>, %arg4: memref<32x1xf32, #tpu.memory_space<vmem>>, %arg5: memref<32x32xf32, #tpu.memory_space<vmem>>) attributes {dimension_semantics = [#tpu.dimension_semantics<arbitrary>], iteration_bounds = array<i64: 1>, scalar_prefetch = 0 : i64, scratch_operands = 0 : i64, tpu.core_type = #tpu.core_type<tc>, window_params = [{pipeline_mode = #tpu.pipeline_mode<synchronous>, transform_indices = @transform_0, window_bounds = array<i64: 288, 32>}, {pipeline_mode = #tpu.pipeline_mode<synchronous>, transform_indices = @transform_1, window_bounds = array<i64: 32, 288>}, {pipeline_mode = #tpu.pipeline_mode<synchronous>, transform_indices = @transform_2, window_bounds = array<i64: 32, 1>}, {pipeline_mode = #tpu.pipeline_mode<synchronous>, transform_indices = @transform_3, window_bounds = array<i64: 32, 1>}, {pipeline_mode = #tpu.pipeline_mode<synchronous>, transform_indices = @transform_4, window_bounds = array<i64: 32, 32>}]} {
    %c0 = arith.constant 0 : index
    %c0_0 = arith.constant 0 : index
    %0 = vector.load %arg2[%c0, %c0_0] : memref<32x288xbf16, #tpu.memory_space<vmem>>, vector<32x288xbf16>
    %c0_1 = arith.constant 0 : index
    %c0_2 = arith.constant 0 : index
    %1 = vector.load %arg1[%c0_1, %c0_2] : memref<288x32xbf16, #tpu.memory_space<vmem>>, vector<288x32xbf16>
    %cst = arith.constant dense<0.000000e+00> : vector<32x32xf32>
    %2 = tpu.matmul %0, %1, %cst {dimension_numbers = #tpu.dot_dimension_numbers<[1], [0], [0], [1], [0, 0, 1, 1], [], []>} : vector<32x288xbf16>, vector<288x32xbf16>, vector<32x32xf32> -> vector<32x32xf32>
    %cst_3 = arith.constant dense<0.000000e+00> : vector<32xf32>
    %3 = vector.multi_reduction <add>, %2, %cst_3 [1] : vector<32x32xf32> to vector<32xf32>
    %4 = vector.shape_cast %3 : vector<32xf32> to vector<32x1xf32>
    %cst_4 = arith.constant 3.200000e+01 : f32
    %5 = vector.broadcast %cst_4 : f32 to vector<32x1xf32>
    %6 = arith.divf %4, %5 : vector<32x1xf32>
    %7 = vector.broadcast %6 : vector<32x1xf32> to vector<32x32xf32>
    %8 = arith.subf %2, %7 : vector<32x32xf32>
    %9 = arith.mulf %8, %8 : vector<32x32xf32>
    %cst_5 = arith.constant dense<0.000000e+00> : vector<32xf32>
    %10 = vector.multi_reduction <add>, %9, %cst_5 [1] : vector<32x32xf32> to vector<32xf32>
    %11 = vector.shape_cast %10 : vector<32xf32> to vector<32x1xf32>
    %cst_6 = arith.constant 3.200000e+01 : f32
    %12 = vector.broadcast %cst_6 : f32 to vector<32x1xf32>
    %13 = arith.divf %11, %12 : vector<32x1xf32>
    %cst_7 = arith.constant 9.99999974E-6 : f32
    %14 = vector.broadcast %cst_7 : f32 to vector<32x1xf32>
    %15 = arith.addf %13, %14 : vector<32x1xf32>
    %16 = math.rsqrt %15 : vector<32x1xf32>
    %17 = vector.broadcast %16 : vector<32x1xf32> to vector<32x32xf32>
    %18 = arith.mulf %8, %17 : vector<32x32xf32>
    %c0_8 = arith.constant 0 : index
    %c0_9 = arith.constant 0 : index
    %19 = vector.load %arg3[%c0_8, %c0_9] : memref<32x1xf32, #tpu.memory_space<vmem>>, vector<32x1xf32>
    %20 = vector.broadcast %19 : vector<32x1xf32> to vector<32x32xf32>
    %21 = arith.mulf %18, %20 : vector<32x32xf32>
    %c0_10 = arith.constant 0 : index
    %c0_11 = arith.constant 0 : index
    %22 = vector.load %arg4[%c0_10, %c0_11] : memref<32x1xf32, #tpu.memory_space<vmem>>, vector<32x1xf32>
    %23 = vector.broadcast %22 : vector<32x1xf32> to vector<32x32xf32>
    %24 = arith.addf %21, %23 : vector<32x32xf32>
    %cst_12 = arith.constant 0.000000e+00 : f32
    %25 = vector.broadcast %cst_12 : f32 to vector<32x32xf32>
    %26 = arith.maximumf %24, %25 : vector<32x32xf32>
    %c0_13 = arith.constant 0 : index
    %c0_14 = arith.constant 0 : index
    %27 = vector.load %arg5[%c0_13, %c0_14] : memref<32x32xf32, #tpu.memory_space<vmem>>, vector<32x32xf32>
    tpu.vector_store %arg5[%c0_13, %c0_14], %26 {strides = array<i32>} : memref<32x32xf32, #tpu.memory_space<vmem>>, vector<32x32xf32>,
    return
  }
  func.func @transform_0(%arg0: i32) -> (i32, i32) {
    %c0_i32 = arith.constant 0 : i32
    %c0_i32_0 = arith.constant 0 : i32
    %c0_i32_1 = arith.constant 0 : i32
    return %c0_i32, %c0_i32_0 : i32, i32
  }
  func.func @transform_1(%arg0: i32) -> (i32, i32) {
    %c0_i32 = arith.constant 0 : i32
    %c0_i32_0 = arith.constant 0 : i32
    %c0_i32_1 = arith.constant 0 : i32
    return %c0_i32, %c0_i32_0 : i32, i32
  }
  func.func @transform_2(%arg0: i32) -> (i32, i32) {
    %c0_i32 = arith.constant 0 : i32
    %c0_i32_0 = arith.constant 0 : i32
    %c0_i32_1 = arith.constant 0 : i32
    return %c0_i32, %c0_i32_0 : i32, i32
  }
  func.func @transform_3(%arg0: i32) -> (i32, i32) {
    %c0_i32 = arith.constant 0 : i32
    %c0_i32_0 = arith.constant 0 : i32
    %c0_i32_1 = arith.constant 0 : i32
    return %c0_i32, %c0_i32_0 : i32, i32
  }
  func.func @transform_4(%arg0: i32) -> (i32, i32) {
    %c0_i32 = arith.constant 0 : i32
    %c0_i32_0 = arith.constant 0 : i32
    %c0_i32_1 = arith.constant 0 : i32
    return %c0_i32, %c0_i32_0 : i32, i32
  }
}

module attributes {stable_mosaic.version = 11 : i64} {
  func.func @_conv_bn_act_kernel(%arg0: i32, %arg1: memref<288x32xbf16, #tpu.memory_space<vmem>>, %arg2: memref<32x288xbf16, #tpu.memory_space<vmem>>, %arg3: memref<32x1xf32, #tpu.memory_space<vmem>>, %arg4: memref<32x1xf32, #tpu.memory_space<vmem>>, %arg5: memref<32x32xf32, #tpu.memory_space<vmem>>) attributes {dimension_semantics = [#tpu.dimension_semantics<arbitrary>], iteration_bounds = array<i64: 1>, scalar_prefetch = 0 : i64, scratch_operands = 0 : i64, tpu.core_type = #tpu.core_type<tc>, window_params = [{pipeline_mode = #tpu.pipeline_mode<synchronous>, transform_indices = @transform_0, window_bounds = array<i64: 288, 32>}, {pipeline_mode = #tpu.pipeline_mode<synchronous>, transform_indices = @transform_1, window_bounds = array<i64: 32, 288>}, {pipeline_mode = #tpu.pipeline_mode<synchronous>, transform_indices = @transform_2, window_bounds = array<i64: 32, 1>}, {pipeline_mode = #tpu.pipeline_mode<synchronous>, transform_indices = @transform_3, window_bounds = array<i64: 32, 1>}, {pipeline_mode = #tpu.pipeline_mode<synchronous>, transform_indices = @transform_4, window_bounds = array<i64: 32, 32>}]} {
    %c0 = arith.constant 0 : index
    %c0_0 = arith.constant 0 : index
    %0 = vector.load %arg2[%c0, %c0_0] : memref<32x288xbf16, #tpu.memory_space<vmem>>, vector<32x288xbf16>
    %c0_1 = arith.constant 0 : index
    %c0_2 = arith.constant 0 : index
    %1 = vector.load %arg1[%c0_1, %c0_2] : memref<288x32xbf16, #tpu.memory_space<vmem>>, vector<288x32xbf16>
    %cst = arith.constant dense<0.000000e+00> : vector<32x32xf32>
    %2 = tpu.matmul %0, %1, %cst {dimension_numbers = #tpu.dot_dimension_numbers<[1], [0], [0], [1], [0, 0, 1, 1], [], []>} : vector<32x288xbf16>, vector<288x32xbf16>, vector<32x32xf32> -> vector<32x32xf32>
    %cst_3 = arith.constant dense<0.000000e+00> : vector<32xf32>
    %3 = vector.multi_reduction <add>, %2, %cst_3 [1] : vector<32x32xf32> to vector<32xf32>
    %4 = vector.shape_cast %3 : vector<32xf32> to vector<32x1xf32>
    %cst_4 = arith.constant 3.200000e+01 : f32
    %5 = vector.broadcast %cst_4 : f32 to vector<32x1xf32>
    %6 = arith.divf %4, %5 : vector<32x1xf32>
    %7 = vector.broadcast %6 : vector<32x1xf32> to vector<32x32xf32>
    %8 = arith.subf %2, %7 : vector<32x32xf32>
    %9 = arith.mulf %8, %8 : vector<32x32xf32>
    %cst_5 = arith.constant dense<0.000000e+00> : vector<32xf32>
    %10 = vector.multi_reduction <add>, %9, %cst_5 [1] : vector<32x32xf32> to vector<32xf32>
    %11 = vector.shape_cast %10 : vector<32xf32> to vector<32x1xf32>
    %cst_6 = arith.constant 3.200000e+01 : f32
    %12 = vector.broadcast %cst_6 : f32 to vector<32x1xf32>
    %13 = arith.divf %11, %12 : vector<32x1xf32>
    %cst_7 = arith.constant 9.99999974E-6 : f32
    %14 = vector.broadcast %cst_7 : f32 to vector<32x1xf32>
    %15 = arith.addf %13, %14 : vector<32x1xf32>
    %16 = math.rsqrt %15 : vector<32x1xf32>
    %17 = vector.broadcast %16 : vector<32x1xf32> to vector<32x32xf32>
    %18 = arith.mulf %8, %17 : vector<32x32xf32>
    %c0_8 = arith.constant 0 : index
    %c0_9 = arith.constant 0 : index
    %19 = vector.load %arg3[%c0_8, %c0_9] : memref<32x1xf32, #tpu.memory_space<vmem>>, vector<32x1xf32>
    %20 = vector.broadcast %19 : vector<32x1xf32> to vector<32x32xf32>
    %21 = arith.mulf %18, %20 : vector<32x32xf32>
    %c0_10 = arith.constant 0 : index
    %c0_11 = arith.constant 0 : index
    %22 = vector.load %arg4[%c0_10, %c0_11] : memref<32x1xf32, #tpu.memory_space<vmem>>, vector<32x1xf32>
    %23 = vector.broadcast %22 : vector<32x1xf32> to vector<32x32xf32>
    %24 = arith.addf %21, %23 : vector<32x32xf32>
    %cst_12 = arith.constant 0.000000e+00 : f32
    %25 = vector.broadcast %cst_12 : f32 to vector<32x32xf32>
    %26 = arith.maximumf %24, %25 : vector<32x32xf32>
    %c0_13 = arith.constant 0 : index
    %c0_14 = arith.constant 0 : index
    %27 = vector.load %arg5[%c0_13, %c0_14] : memref<32x32xf32, #tpu.memory_space<vmem>>, vector<32x32xf32>
    tpu.vector_store %arg5[%c0_13, %c0_14], %26 {strides = array<i32>} : memref<32x32xf32, #tpu.memory_space<vmem>>, vector<32x32xf32>,
    return
  }
  func.func @transform_0(%arg0: i32) -> (i32, i32) {
    %c0_i32 = arith.constant 0 : i32
    %c0_i32_0 = arith.constant 0 : i32
    %c0_i32_1 = arith.constant 0 : i32
    return %c0_i32, %c0_i32_0 : i32, i32
  }
  func.func @transform_1(%arg0: i32) -> (i32, i32) {
    %c0_i32 = arith.constant 0 : i32
    %c0_i32_0 = arith.constant 0 : i32
    %c0_i32_1 = arith.constant 0 : i32
    return %c0_i32, %c0_i32_0 : i32, i32
  }
  func.func @transform_2(%arg0: i32) -> (i32, i32) {
    %c0_i32 = arith.constant 0 : i32
    %c0_i32_0 = arith.constant 0 : i32
    %c0_i32_1 = arith.constant 0 : i32
    return %c0_i32, %c0_i32_0 : i32, i32
  }
  func.func @transform_3(%arg0: i32) -> (i32, i32) {
    %c0_i32 = arith.constant 0 : i32
    %c0_i32_0 = arith.constant 0 : i32
    %c0_i32_1 = arith.constant 0 : i32
    return %c0_i32, %c0_i32_0 : i32, i32
  }
  func.func @transform_4(%arg0: i32) -> (i32, i32) {
    %c0_i32 = arith.constant 0 : i32
    %c0_i32_0 = arith.constant 0 : i32
    %c0_i32_1 = arith.constant 0 : i32
    return %c0_i32, %c0_i32_0 : i32, i32
  }
}

module attributes {stable_mosaic.version = 11 : i64} {
  func.func @_conv_bn_add_kernel(%arg0: i32, %arg1: memref<288x32xbf16, #tpu.memory_space<vmem>>, %arg2: memref<32x288xbf16, #tpu.memory_space<vmem>>, %arg3: memref<32x1xf32, #tpu.memory_space<vmem>>, %arg4: memref<32x1xf32, #tpu.memory_space<vmem>>, %arg5: memref<32x32xf32, #tpu.memory_space<vmem>>, %arg6: memref<32x32xf32, #tpu.memory_space<vmem>>) attributes {dimension_semantics = [#tpu.dimension_semantics<arbitrary>], iteration_bounds = array<i64: 1>, scalar_prefetch = 0 : i64, scratch_operands = 0 : i64, tpu.core_type = #tpu.core_type<tc>, window_params = [{pipeline_mode = #tpu.pipeline_mode<synchronous>, transform_indices = @transform_0, window_bounds = array<i64: 288, 32>}, {pipeline_mode = #tpu.pipeline_mode<synchronous>, transform_indices = @transform_1, window_bounds = array<i64: 32, 288>}, {pipeline_mode = #tpu.pipeline_mode<synchronous>, transform_indices = @transform_2, window_bounds = array<i64: 32, 1>}, {pipeline_mode = #tpu.pipeline_mode<synchronous>, transform_indices = @transform_3, window_bounds = array<i64: 32, 1>}, {pipeline_mode = #tpu.pipeline_mode<synchronous>, transform_indices = @transform_4, window_bounds = array<i64: 32, 32>}, {pipeline_mode = #tpu.pipeline_mode<synchronous>, transform_indices = @transform_5, window_bounds = array<i64: 32, 32>}]} {
    %c0 = arith.constant 0 : index
    %c0_0 = arith.constant 0 : index
    %0 = vector.load %arg2[%c0, %c0_0] : memref<32x288xbf16, #tpu.memory_space<vmem>>, vector<32x288xbf16>
    %c0_1 = arith.constant 0 : index
    %c0_2 = arith.constant 0 : index
    %1 = vector.load %arg1[%c0_1, %c0_2] : memref<288x32xbf16, #tpu.memory_space<vmem>>, vector<288x32xbf16>
    %cst = arith.constant dense<0.000000e+00> : vector<32x32xf32>
    %2 = tpu.matmul %0, %1, %cst {dimension_numbers = #tpu.dot_dimension_numbers<[1], [0], [0], [1], [0, 0, 1, 1], [], []>} : vector<32x288xbf16>, vector<288x32xbf16>, vector<32x32xf32> -> vector<32x32xf32>
    %cst_3 = arith.constant dense<0.000000e+00> : vector<32xf32>
    %3 = vector.multi_reduction <add>, %2, %cst_3 [1] : vector<32x32xf32> to vector<32xf32>
    %4 = vector.shape_cast %3 : vector<32xf32> to vector<32x1xf32>
    %cst_4 = arith.constant 3.200000e+01 : f32
    %5 = vector.broadcast %cst_4 : f32 to vector<32x1xf32>
    %6 = arith.divf %4, %5 : vector<32x1xf32>
    %7 = vector.broadcast %6 : vector<32x1xf32> to vector<32x32xf32>
    %8 = arith.subf %2, %7 : vector<32x32xf32>
    %9 = arith.mulf %8, %8 : vector<32x32xf32>
    %cst_5 = arith.constant dense<0.000000e+00> : vector<32xf32>
    %10 = vector.multi_reduction <add>, %9, %cst_5 [1] : vector<32x32xf32> to vector<32xf32>
    %11 = vector.shape_cast %10 : vector<32xf32> to vector<32x1xf32>
    %cst_6 = arith.constant 3.200000e+01 : f32
    %12 = vector.broadcast %cst_6 : f32 to vector<32x1xf32>
    %13 = arith.divf %11, %12 : vector<32x1xf32>
    %cst_7 = arith.constant 9.99999974E-6 : f32
    %14 = vector.broadcast %cst_7 : f32 to vector<32x1xf32>
    %15 = arith.addf %13, %14 : vector<32x1xf32>
    %16 = math.rsqrt %15 : vector<32x1xf32>
    %17 = vector.broadcast %16 : vector<32x1xf32> to vector<32x32xf32>
    %18 = arith.mulf %8, %17 : vector<32x32xf32>
    %c0_8 = arith.constant 0 : index
    %c0_9 = arith.constant 0 : index
    %19 = vector.load %arg3[%c0_8, %c0_9] : memref<32x1xf32, #tpu.memory_space<vmem>>, vector<32x1xf32>
    %20 = vector.broadcast %19 : vector<32x1xf32> to vector<32x32xf32>
    %21 = arith.mulf %18, %20 : vector<32x32xf32>
    %c0_10 = arith.constant 0 : index
    %c0_11 = arith.constant 0 : index
    %22 = vector.load %arg4[%c0_10, %c0_11] : memref<32x1xf32, #tpu.memory_space<vmem>>, vector<32x1xf32>
    %23 = vector.broadcast %22 : vector<32x1xf32> to vector<32x32xf32>
    %24 = arith.addf %21, %23 : vector<32x32xf32>
    %c0_12 = arith.constant 0 : index
    %c0_13 = arith.constant 0 : index
    %25 = vector.load %arg5[%c0_12, %c0_13] : memref<32x32xf32, #tpu.memory_space<vmem>>, vector<32x32xf32>
    %26 = arith.addf %24, %25 : vector<32x32xf32>
    %c0_14 = arith.constant 0 : index
    %c0_15 = arith.constant 0 : index
    %27 = vector.load %arg6[%c0_14, %c0_15] : memref<32x32xf32, #tpu.memory_space<vmem>>, vector<32x32xf32>
    tpu.vector_store %arg6[%c0_14, %c0_15], %26 {strides = array<i32>} : memref<32x32xf32, #tpu.memory_space<vmem>>, vector<32x32xf32>,
    return
  }
  func.func @transform_0(%arg0: i32) -> (i32, i32) {
    %c0_i32 = arith.constant 0 : i32
    %c0_i32_0 = arith.constant 0 : i32
    %c0_i32_1 = arith.constant 0 : i32
    return %c0_i32, %c0_i32_0 : i32, i32
  }
  func.func @transform_1(%arg0: i32) -> (i32, i32) {
    %c0_i32 = arith.constant 0 : i32
    %c0_i32_0 = arith.constant 0 : i32
    %c0_i32_1 = arith.constant 0 : i32
    return %c0_i32, %c0_i32_0 : i32, i32
  }
  func.func @transform_2(%arg0: i32) -> (i32, i32) {
    %c0_i32 = arith.constant 0 : i32
    %c0_i32_0 = arith.constant 0 : i32
    %c0_i32_1 = arith.constant 0 : i32
    return %c0_i32, %c0_i32_0 : i32, i32
  }
  func.func @transform_3(%arg0: i32) -> (i32, i32) {
    %c0_i32 = arith.constant 0 : i32
    %c0_i32_0 = arith.constant 0 : i32
    %c0_i32_1 = arith.constant 0 : i32
    return %c0_i32, %c0_i32_0 : i32, i32
  }
  func.func @transform_4(%arg0: i32) -> (i32, i32) {
    %c0_i32 = arith.constant 0 : i32
    %c0_i32_0 = arith.constant 0 : i32
    %c0_i32_1 = arith.constant 0 : i32
    return %c0_i32, %c0_i32_0 : i32, i32
  }
  func.func @transform_5(%arg0: i32) -> (i32, i32) {
    %c0_i32 = arith.constant 0 : i32
    %c0_i32_0 = arith.constant 0 : i32
    %c0_i32_1 = arith.constant 0 : i32
    return %c0_i32, %c0_i32_0 : i32, i32
  }
}

module attributes {stable_mosaic.version = 11 : i64} {
  func.func @_conv_shufflebn_relu_kernel(%arg0: i32, %arg1: memref<288x32xbf16, #tpu.memory_space<vmem>>, %arg2: memref<64x288xbf16, #tpu.memory_space<vmem>>, %arg3: memref<64x1xf32, #tpu.memory_space<vmem>>, %arg4: memref<64x1xf32, #tpu.memory_space<vmem>>, %arg5: memref<64x64xf32, #tpu.memory_space<vmem>>, %arg6: memref<64x32xf32, #tpu.memory_space<vmem>>) attributes {dimension_semantics = [#tpu.dimension_semantics<arbitrary>], iteration_bounds = array<i64: 1>, scalar_prefetch = 0 : i64, scratch_operands = 0 : i64, tpu.core_type = #tpu.core_type<tc>, window_params = [{pipeline_mode = #tpu.pipeline_mode<synchronous>, transform_indices = @transform_0, window_bounds = array<i64: 288, 32>}, {pipeline_mode = #tpu.pipeline_mode<synchronous>, transform_indices = @transform_1, window_bounds = array<i64: 64, 288>}, {pipeline_mode = #tpu.pipeline_mode<synchronous>, transform_indices = @transform_2, window_bounds = array<i64: 64, 1>}, {pipeline_mode = #tpu.pipeline_mode<synchronous>, transform_indices = @transform_3, window_bounds = array<i64: 64, 1>}, {pipeline_mode = #tpu.pipeline_mode<synchronous>, transform_indices = @transform_4, window_bounds = array<i64: 64, 64>}, {pipeline_mode = #tpu.pipeline_mode<synchronous>, transform_indices = @transform_5, window_bounds = array<i64: 64, 32>}]} {
    %c0 = arith.constant 0 : index
    %c0_0 = arith.constant 0 : index
    %0 = vector.load %arg2[%c0, %c0_0] : memref<64x288xbf16, #tpu.memory_space<vmem>>, vector<64x288xbf16>
    %c0_1 = arith.constant 0 : index
    %c0_2 = arith.constant 0 : index
    %1 = vector.load %arg1[%c0_1, %c0_2] : memref<288x32xbf16, #tpu.memory_space<vmem>>, vector<288x32xbf16>
    %cst = arith.constant dense<0.000000e+00> : vector<64x32xf32>
    %2 = tpu.matmul %0, %1, %cst {dimension_numbers = #tpu.dot_dimension_numbers<[1], [0], [0], [1], [0, 0, 1, 1], [], []>} : vector<64x288xbf16>, vector<288x32xbf16>, vector<64x32xf32> -> vector<64x32xf32>
    %c0_3 = arith.constant 0 : index
    %c0_4 = arith.constant 0 : index
    %3 = vector.load %arg5[%c0_3, %c0_4] : memref<64x64xf32, #tpu.memory_space<vmem>>, vector<64x64xf32>
    %cst_5 = arith.constant dense<0.000000e+00> : vector<64x32xf32>
    %4 = tpu.matmul %3, %2, %cst_5 {dimension_numbers = #tpu.dot_dimension_numbers<[1], [0], [0], [1], [0, 0, 1, 1], [], []>} : vector<64x64xf32>, vector<64x32xf32>, vector<64x32xf32> -> vector<64x32xf32>
    %cst_6 = arith.constant dense<0.000000e+00> : vector<64xf32>
    %5 = vector.multi_reduction <add>, %4, %cst_6 [1] : vector<64x32xf32> to vector<64xf32>
    %6 = vector.shape_cast %5 : vector<64xf32> to vector<64x1xf32>
    %cst_7 = arith.constant 3.200000e+01 : f32
    %7 = vector.broadcast %cst_7 : f32 to vector<64x1xf32>
    %8 = arith.divf %6, %7 : vector<64x1xf32>
    %cst_8 = arith.constant 2.500000e-01 : f32
    %9 = vector.broadcast %cst_8 : f32 to vector<64x1xf32>
    %10 = arith.mulf %8, %9 : vector<64x1xf32>
    %11 = vector.broadcast %10 : vector<64x1xf32> to vector<64x32xf32>
    %12 = arith.subf %2, %11 : vector<64x32xf32>
    %13 = arith.mulf %12, %12 : vector<64x32xf32>
    %cst_9 = arith.constant dense<0.000000e+00> : vector<64x32xf32>
    %14 = tpu.matmul %3, %13, %cst_9 {dimension_numbers = #tpu.dot_dimension_numbers<[1], [0], [0], [1], [0, 0, 1, 1], [], []>} : vector<64x64xf32>, vector<64x32xf32>, vector<64x32xf32> -> vector<64x32xf32>
    %cst_10 = arith.constant dense<0.000000e+00> : vector<64xf32>
    %15 = vector.multi_reduction <add>, %14, %cst_10 [1] : vector<64x32xf32> to vector<64xf32>
    %16 = vector.shape_cast %15 : vector<64xf32> to vector<64x1xf32>
    %cst_11 = arith.constant 3.200000e+01 : f32
    %17 = vector.broadcast %cst_11 : f32 to vector<64x1xf32>
    %18 = arith.divf %16, %17 : vector<64x1xf32>
    %cst_12 = arith.constant 2.500000e-01 : f32
    %19 = vector.broadcast %cst_12 : f32 to vector<64x1xf32>
    %20 = arith.mulf %18, %19 : vector<64x1xf32>
    %cst_13 = arith.constant 9.99999974E-6 : f32
    %21 = vector.broadcast %cst_13 : f32 to vector<64x1xf32>
    %22 = arith.addf %20, %21 : vector<64x1xf32>
    %23 = math.rsqrt %22 : vector<64x1xf32>
    %24 = vector.broadcast %23 : vector<64x1xf32> to vector<64x32xf32>
    %25 = arith.mulf %12, %24 : vector<64x32xf32>
    %c0_14 = arith.constant 0 : index
    %c0_15 = arith.constant 0 : index
    %26 = vector.load %arg3[%c0_14, %c0_15] : memref<64x1xf32, #tpu.memory_space<vmem>>, vector<64x1xf32>
    %27 = vector.broadcast %26 : vector<64x1xf32> to vector<64x32xf32>
    %28 = arith.mulf %25, %27 : vector<64x32xf32>
    %c0_16 = arith.constant 0 : index
    %c0_17 = arith.constant 0 : index
    %29 = vector.load %arg4[%c0_16, %c0_17] : memref<64x1xf32, #tpu.memory_space<vmem>>, vector<64x1xf32>
    %30 = vector.broadcast %29 : vector<64x1xf32> to vector<64x32xf32>
    %31 = arith.addf %28, %30 : vector<64x32xf32>
    %cst_18 = arith.constant 0.000000e+00 : f32
    %32 = vector.broadcast %cst_18 : f32 to vector<64x32xf32>
    %33 = arith.maximumf %31, %32 : vector<64x32xf32>
    %c0_19 = arith.constant 0 : index
    %c0_20 = arith.constant 0 : index
    %34 = vector.load %arg6[%c0_19, %c0_20] : memref<64x32xf32, #tpu.memory_space<vmem>>, vector<64x32xf32>
    tpu.vector_store %arg6[%c0_19, %c0_20], %33 {strides = array<i32>} : memref<64x32xf32, #tpu.memory_space<vmem>>, vector<64x32xf32>,
    return
  }
  func.func @transform_0(%arg0: i32) -> (i32, i32) {
    %c0_i32 = arith.constant 0 : i32
    %c0_i32_0 = arith.constant 0 : i32
    %c0_i32_1 = arith.constant 0 : i32
    return %c0_i32, %c0_i32_0 : i32, i32
  }
  func.func @transform_1(%arg0: i32) -> (i32, i32) {
    %c0_i32 = arith.constant 0 : i32
    %c0_i32_0 = arith.constant 0 : i32
    %c0_i32_1 = arith.constant 0 : i32
    return %c0_i32, %c0_i32_0 : i32, i32
  }
  func.func @transform_2(%arg0: i32) -> (i32, i32) {
    %c0_i32 = arith.constant 0 : i32
    %c0_i32_0 = arith.constant 0 : i32
    %c0_i32_1 = arith.constant 0 : i32
    return %c0_i32, %c0_i32_0 : i32, i32
  }
  func.func @transform_3(%arg0: i32) -> (i32, i32) {
    %c0_i32 = arith.constant 0 : i32
    %c0_i32_0 = arith.constant 0 : i32
    %c0_i32_1 = arith.constant 0 : i32
    return %c0_i32, %c0_i32_0 : i32, i32
  }
  func.func @transform_4(%arg0: i32) -> (i32, i32) {
    %c0_i32 = arith.constant 0 : i32
    %c0_i32_0 = arith.constant 0 : i32
    %c0_i32_1 = arith.constant 0 : i32
    return %c0_i32, %c0_i32_0 : i32, i32
  }
  func.func @transform_5(%arg0: i32) -> (i32, i32) {
    %c0_i32 = arith.constant 0 : i32
    %c0_i32_0 = arith.constant 0 : i32
    %c0_i32_1 = arith.constant 0 : i32
    return %c0_i32, %c0_i32_0 : i32, i32
  }
}

module attributes {stable_mosaic.version = 11 : i64} {
  func.func @_conv_shufflebn_relu_kernel(%arg0: i32, %arg1: memref<144x128xbf16, #tpu.memory_space<vmem>>, %arg2: memref<32x144xbf16, #tpu.memory_space<vmem>>, %arg3: memref<32x1xf32, #tpu.memory_space<vmem>>, %arg4: memref<32x1xf32, #tpu.memory_space<vmem>>, %arg5: memref<32x32xf32, #tpu.memory_space<vmem>>, %arg6: memref<32x128xf32, #tpu.memory_space<vmem>>) attributes {dimension_semantics = [#tpu.dimension_semantics<arbitrary>], iteration_bounds = array<i64: 1>, scalar_prefetch = 0 : i64, scratch_operands = 0 : i64, tpu.core_type = #tpu.core_type<tc>, window_params = [{pipeline_mode = #tpu.pipeline_mode<synchronous>, transform_indices = @transform_0, window_bounds = array<i64: 144, 128>}, {pipeline_mode = #tpu.pipeline_mode<synchronous>, transform_indices = @transform_1, window_bounds = array<i64: 32, 144>}, {pipeline_mode = #tpu.pipeline_mode<synchronous>, transform_indices = @transform_2, window_bounds = array<i64: 32, 1>}, {pipeline_mode = #tpu.pipeline_mode<synchronous>, transform_indices = @transform_3, window_bounds = array<i64: 32, 1>}, {pipeline_mode = #tpu.pipeline_mode<synchronous>, transform_indices = @transform_4, window_bounds = array<i64: 32, 32>}, {pipeline_mode = #tpu.pipeline_mode<synchronous>, transform_indices = @transform_5, window_bounds = array<i64: 32, 128>}]} {
    %c0 = arith.constant 0 : index
    %c0_0 = arith.constant 0 : index
    %0 = vector.load %arg2[%c0, %c0_0] : memref<32x144xbf16, #tpu.memory_space<vmem>>, vector<32x144xbf16>
    %c0_1 = arith.constant 0 : index
    %c0_2 = arith.constant 0 : index
    %1 = vector.load %arg1[%c0_1, %c0_2] : memref<144x128xbf16, #tpu.memory_space<vmem>>, vector<144x128xbf16>
    %cst = arith.constant dense<0.000000e+00> : vector<32x128xf32>
    %2 = tpu.matmul %0, %1, %cst {dimension_numbers = #tpu.dot_dimension_numbers<[1], [0], [0], [1], [0, 0, 1, 1], [], []>} : vector<32x144xbf16>, vector<144x128xbf16>, vector<32x128xf32> -> vector<32x128xf32>
    %c0_3 = arith.constant 0 : index
    %c0_4 = arith.constant 0 : index
    %3 = vector.load %arg5[%c0_3, %c0_4] : memref<32x32xf32, #tpu.memory_space<vmem>>, vector<32x32xf32>
    %cst_5 = arith.constant dense<0.000000e+00> : vector<32x128xf32>
    %4 = tpu.matmul %3, %2, %cst_5 {dimension_numbers = #tpu.dot_dimension_numbers<[1], [0], [0], [1], [0, 0, 1, 1], [], []>} : vector<32x32xf32>, vector<32x128xf32>, vector<32x128xf32> -> vector<32x128xf32>
    %cst_6 = arith.constant dense<0.000000e+00> : vector<32xf32>
    %5 = vector.multi_reduction <add>, %4, %cst_6 [1] : vector<32x128xf32> to vector<32xf32>
    %6 = vector.shape_cast %5 : vector<32xf32> to vector<32x1xf32>
    %cst_7 = arith.constant 1.280000e+02 : f32
    %7 = vector.broadcast %cst_7 : f32 to vector<32x1xf32>
    %8 = arith.divf %6, %7 : vector<32x1xf32>
    %cst_8 = arith.constant 2.500000e-01 : f32
    %9 = vector.broadcast %cst_8 : f32 to vector<32x1xf32>
    %10 = arith.mulf %8, %9 : vector<32x1xf32>
    %11 = vector.broadcast %10 : vector<32x1xf32> to vector<32x128xf32>
    %12 = arith.subf %2, %11 : vector<32x128xf32>
    %13 = arith.mulf %12, %12 : vector<32x128xf32>
    %cst_9 = arith.constant dense<0.000000e+00> : vector<32x128xf32>
    %14 = tpu.matmul %3, %13, %cst_9 {dimension_numbers = #tpu.dot_dimension_numbers<[1], [0], [0], [1], [0, 0, 1, 1], [], []>} : vector<32x32xf32>, vector<32x128xf32>, vector<32x128xf32> -> vector<32x128xf32>
    %cst_10 = arith.constant dense<0.000000e+00> : vector<32xf32>
    %15 = vector.multi_reduction <add>, %14, %cst_10 [1] : vector<32x128xf32> to vector<32xf32>
    %16 = vector.shape_cast %15 : vector<32xf32> to vector<32x1xf32>
    %cst_11 = arith.constant 1.280000e+02 : f32
    %17 = vector.broadcast %cst_11 : f32 to vector<32x1xf32>
    %18 = arith.divf %16, %17 : vector<32x1xf32>
    %cst_12 = arith.constant 2.500000e-01 : f32
    %19 = vector.broadcast %cst_12 : f32 to vector<32x1xf32>
    %20 = arith.mulf %18, %19 : vector<32x1xf32>
    %cst_13 = arith.constant 9.99999974E-6 : f32
    %21 = vector.broadcast %cst_13 : f32 to vector<32x1xf32>
    %22 = arith.addf %20, %21 : vector<32x1xf32>
    %23 = math.rsqrt %22 : vector<32x1xf32>
    %24 = vector.broadcast %23 : vector<32x1xf32> to vector<32x128xf32>
    %25 = arith.mulf %12, %24 : vector<32x128xf32>
    %c0_14 = arith.constant 0 : index
    %c0_15 = arith.constant 0 : index
    %26 = vector.load %arg3[%c0_14, %c0_15] : memref<32x1xf32, #tpu.memory_space<vmem>>, vector<32x1xf32>
    %27 = vector.broadcast %26 : vector<32x1xf32> to vector<32x128xf32>
    %28 = arith.mulf %25, %27 : vector<32x128xf32>
    %c0_16 = arith.constant 0 : index
    %c0_17 = arith.constant 0 : index
    %29 = vector.load %arg4[%c0_16, %c0_17] : memref<32x1xf32, #tpu.memory_space<vmem>>, vector<32x1xf32>
    %30 = vector.broadcast %29 : vector<32x1xf32> to vector<32x128xf32>
    %31 = arith.addf %28, %30 : vector<32x128xf32>
    %cst_18 = arith.constant 0.000000e+00 : f32
    %32 = vector.broadcast %cst_18 : f32 to vector<32x128xf32>
    %33 = arith.maximumf %31, %32 : vector<32x128xf32>
    %c0_19 = arith.constant 0 : index
    %c0_20 = arith.constant 0 : index
    %34 = vector.load %arg6[%c0_19, %c0_20] : memref<32x128xf32, #tpu.memory_space<vmem>>, vector<32x128xf32>
    tpu.vector_store %arg6[%c0_19, %c0_20], %33 {strides = array<i32>} : memref<32x128xf32, #tpu.memory_space<vmem>>, vector<32x128xf32>,
    return
  }
  func.func @transform_0(%arg0: i32) -> (i32, i32) {
    %c0_i32 = arith.constant 0 : i32
    %c0_i32_0 = arith.constant 0 : i32
    %c0_i32_1 = arith.constant 0 : i32
    return %c0_i32, %c0_i32_0 : i32, i32
  }
  func.func @transform_1(%arg0: i32) -> (i32, i32) {
    %c0_i32 = arith.constant 0 : i32
    %c0_i32_0 = arith.constant 0 : i32
    %c0_i32_1 = arith.constant 0 : i32
    return %c0_i32, %c0_i32_0 : i32, i32
  }
  func.func @transform_2(%arg0: i32) -> (i32, i32) {
    %c0_i32 = arith.constant 0 : i32
    %c0_i32_0 = arith.constant 0 : i32
    %c0_i32_1 = arith.constant 0 : i32
    return %c0_i32, %c0_i32_0 : i32, i32
  }
  func.func @transform_3(%arg0: i32) -> (i32, i32) {
    %c0_i32 = arith.constant 0 : i32
    %c0_i32_0 = arith.constant 0 : i32
    %c0_i32_1 = arith.constant 0 : i32
    return %c0_i32, %c0_i32_0 : i32, i32
  }
  func.func @transform_4(%arg0: i32) -> (i32, i32) {
    %c0_i32 = arith.constant 0 : i32
    %c0_i32_0 = arith.constant 0 : i32
    %c0_i32_1 = arith.constant 0 : i32
    return %c0_i32, %c0_i32_0 : i32, i32
  }
  func.func @transform_5(%arg0: i32) -> (i32, i32) {
    %c0_i32 = arith.constant 0 : i32
    %c0_i32_0 = arith.constant 0 : i32
    %c0_i32_1 = arith.constant 0 : i32
    return %c0_i32, %c0_i32_0 : i32, i32
  }
}

module attributes {stable_mosaic.version = 11 : i64} {
  func.func @_conv_bias_tanh_kernel(%arg0: i32, %arg1: memref<784x512xbf16, #tpu.memory_space<vmem>>, %arg2: memref<4x784xbf16, #tpu.memory_space<vmem>>, %arg3: memref<4x1xf32, #tpu.memory_space<vmem>>, %arg4: memref<4x512xf32, #tpu.memory_space<vmem>>) attributes {dimension_semantics = [#tpu.dimension_semantics<arbitrary>], iteration_bounds = array<i64: 1>, scalar_prefetch = 0 : i64, scratch_operands = 0 : i64, tpu.core_type = #tpu.core_type<tc>, window_params = [{pipeline_mode = #tpu.pipeline_mode<synchronous>, transform_indices = @transform_0, window_bounds = array<i64: 784, 512>}, {pipeline_mode = #tpu.pipeline_mode<synchronous>, transform_indices = @transform_1, window_bounds = array<i64: 4, 784>}, {pipeline_mode = #tpu.pipeline_mode<synchronous>, transform_indices = @transform_2, window_bounds = array<i64: 4, 1>}, {pipeline_mode = #tpu.pipeline_mode<synchronous>, transform_indices = @transform_3, window_bounds = array<i64: 4, 512>}]} {
    %c0 = arith.constant 0 : index
    %c0_0 = arith.constant 0 : index
    %0 = vector.load %arg2[%c0, %c0_0] : memref<4x784xbf16, #tpu.memory_space<vmem>>, vector<4x784xbf16>
    %c0_1 = arith.constant 0 : index
    %c0_2 = arith.constant 0 : index
    %1 = vector.load %arg1[%c0_1, %c0_2] : memref<784x512xbf16, #tpu.memory_space<vmem>>, vector<784x512xbf16>
    %cst = arith.constant dense<0.000000e+00> : vector<4x512xf32>
    %2 = tpu.matmul %0, %1, %cst {dimension_numbers = #tpu.dot_dimension_numbers<[1], [0], [0], [1], [0, 0, 1, 1], [], []>} : vector<4x784xbf16>, vector<784x512xbf16>, vector<4x512xf32> -> vector<4x512xf32>
    %c0_3 = arith.constant 0 : index
    %c0_4 = arith.constant 0 : index
    %3 = vector.load %arg3[%c0_3, %c0_4] : memref<4x1xf32, #tpu.memory_space<vmem>>, vector<4x1xf32>
    %4 = vector.broadcast %3 : vector<4x1xf32> to vector<4x512xf32>
    %5 = arith.addf %2, %4 : vector<4x512xf32>
    %6 = math.tanh %5 : vector<4x512xf32>
    %c0_5 = arith.constant 0 : index
    %c0_6 = arith.constant 0 : index
    %7 = vector.load %arg4[%c0_5, %c0_6] : memref<4x512xf32, #tpu.memory_space<vmem>>, vector<4x512xf32>
    tpu.vector_store %arg4[%c0_5, %c0_6], %6 {strides = array<i32>} : memref<4x512xf32, #tpu.memory_space<vmem>>, vector<4x512xf32>,
    return
  }
  func.func @transform_0(%arg0: i32) -> (i32, i32) {
    %c0_i32 = arith.constant 0 : i32
    %c0_i32_0 = arith.constant 0 : i32
    %c0_i32_1 = arith.constant 0 : i32
    return %c0_i32, %c0_i32_0 : i32, i32
  }
  func.func @transform_1(%arg0: i32) -> (i32, i32) {
    %c0_i32 = arith.constant 0 : i32
    %c0_i32_0 = arith.constant 0 : i32
    %c0_i32_1 = arith.constant 0 : i32
    return %c0_i32, %c0_i32_0 : i32, i32
  }
  func.func @transform_2(%arg0: i32) -> (i32, i32) {
    %c0_i32 = arith.constant 0 : i32
    %c0_i32_0 = arith.constant 0 : i32
    %c0_i32_1 = arith.constant 0 : i32
    return %c0_i32, %c0_i32_0 : i32, i32
  }
  func.func @transform_3(%arg0: i32) -> (i32, i32) {
    %c0_i32 = arith.constant 0 : i32
    %c0_i32_0 = arith.constant 0 : i32
    %c0_i32_1 = arith.constant 0 : i32
    return %c0_i32, %c0_i32_0 : i32, i32
  }
}

</mosaic_0001>

<llo_original>
// kernel: generator_forward.12
$region0: #{generator_forward.12}
  #allocation0 [shape = 'u32[]', space=smem, size = 0x4, offset = 0x4, fixed_abs, tag = 'smem constant byte address 0x4 - core index']
  #allocation1 [shape = 'u32[72,128]{1,0:T(1,128)}', space=vmem, size = 0x9000, scoped, tag = 'internal scratch']
  %s0 = inlined_call_operand.vmem [shape: bf16[49,512], index: 0, kind: input, shape index: {}]
  %s1 = inlined_call_operand.hbm [shape: bf16[8,49], index: 1, kind: input, shape index: {}]
  %s2 = inlined_call_operand.vmem [shape: f32[8,1], index: 2, kind: input, shape index: {}]
  %s3 = inlined_call_operand.vmem [shape: f32[8,1], index: 3, kind: input, shape index: {}]
  %s4 = inlined_call_operand.vmem [shape: f32[8,512], index: 4, kind: output, shape index: {}]
  %s5 = sld [smem:[#allocation0]]
  $region30: #{generator_forward.12} parent=0
    _
  %s7 = ssub.s32 1, %s5
  %s8 = scalar_select 0, %s7, %s5
  $region1: #{generator_forward.12} parent=0
    #allocation2 [shape = 'u8[2048]{0}', space=vmem, size = 0x800, scoped, tag = 'input window, operand 1, single buffered']
    #allocation3 [shape = 's32[1]{0}', space=sflag, size = 0x4, scoped, tag = 'scoped memory for generator_forward.12']
    %9 = vsyncpa [#allocation3], 0
    // Predicated region
    $region2: #{generator_forward.12} parent=1 // pred_check
      _
    $region3: #{generator_forward.12} parent=1 // pred_check_branch
      %11 = sbr.rel (0) target = $region5
    $region4: #{generator_forward.12} parent=1 // pred_region
      _
    $region5: #{generator_forward.12} parent=1 // pred_fallthru
      _
    // Predicated region
    $region6: #{generator_forward.12} parent=1 // pred_check
      _
    $region7: #{generator_forward.12} parent=1 // pred_check_branch
      %13 = sbr.rel (0) target = $region9
    $region8: #{generator_forward.12} parent=1 // pred_region
      %15 = vsyncadd [#allocation3], 0
      %s17 = sshll.u32 %s1, 4
      %s18 = int_to_ptr.hbm [resolvable:$true] %s17
      %s19 = sshll.u32 [#allocation2], 4
      %s20 = int_to_ptr.vmem [resolvable:$true] %s19
      %22 = dma.hbm_to_vmem [thread:$0]  %s18, 64, %s20, [#allocation3]
    $region9: #{generator_forward.12} parent=1 // pred_fallthru
      _
    // Predicated region
    $region10: #{generator_forward.12} parent=1 // pred_check
      _
    $region11: #{generator_forward.12} parent=1 // pred_check_branch
      %24 = sbr.rel (0) target = $region13
    $region12: #{generator_forward.12} parent=1 // pred_region
      _
    $region13: #{generator_forward.12} parent=1 // pred_fallthru
      _
    // Predicated region
    $region14: #{generator_forward.12} parent=1 // pred_check
      _
    $region15: #{generator_forward.12} parent=1 // pred_check_branch
      %26 = sbr.rel (0) target = $region17
    $region16: #{generator_forward.12} parent=1 // pred_region
      _
    $region17: #{generator_forward.12} parent=1 // pred_fallthru
      _
    // Predicated region
    $region18: #{generator_forward.12} parent=1 // pred_check
      _
    $region19: #{generator_forward.12} parent=1 // pred_check_branch
      %28 = sbr.rel (0) target = $region21
    $region20: #{generator_forward.12} parent=1 // pred_region
      %30 = dma.done [#allocation3], 64
    $region21: #{generator_forward.12} parent=1 // pred_fallthru
      _
    %v32 = vld [vmem:[#allocation2] sm:$0xf]
    %v33 = vld [vmem:[%s0] sm:$0xff]
    %v34 = vld [vmem:[%s0 + $0x8] sm:$0xff]
    %v35 = vld [vmem:[%s0 + $0x10] sm:$0xff]
    %v36 = vld [vmem:[%s0 + $0x18] sm:$0xff]
    %v37 = vld [vmem:[%s0 + $0x20] sm:$0xff]
    %v38 = vld [vmem:[%s0 + $0x28] sm:$0xff]
    %v39 = vld [vmem:[%s0 + $0x30] sm:$0xff]
    %v40 = vld [vmem:[%s0 + $0x38] sm:$0xff]
    %v41 = vld [vmem:[%s0 + $0x40] sm:$0xff]
    %v42 = vld [vmem:[%s0 + $0x48] sm:$0xff]
    %v43 = vld [vmem:[%s0 + $0x50] sm:$0xff]
    %v44 = vld [vmem:[%s0 + $0x58] sm:$0xff]
    %v45 = vld [vmem:[%s0 + $0x60] sm:$0x11]
    %v46 = vld [vmem:[%s0 + $0x68] sm:$0x11]
    %v61 = vunpack.c.l.b16 %v33
    %v62 = vunpack.c.h.b16 %v33
    %v63 = vunpack.c.l.b16 %v34
    %v64 = vunpack.c.h.b16 %v34
    %v65 = vunpack.c.l.b16 %v35
    %v66 = vunpack.c.h.b16 %v35
    %v67 = vunpack.c.l.b16 %v36
    %v68 = vunpack.c.h.b16 %v36
    %v69 = vunpack.c.l.b16 %v37
    %v70 = vunpack.c.h.b16 %v37
    %v71 = vunpack.c.l.b16 %v38
    %v72 = vunpack.c.h.b16 %v38
    %v73 = vunpack.c.l.b16 %v39
    %v74 = vunpack.c.h.b16 %v39
    %v75 = vunpack.c.l.b16 %v40
    %v76 = vunpack.c.h.b16 %v40
    %v77 = vunpack.c.l.b16 %v41
    %v78 = vunpack.c.h.b16 %v41
    %v79 = vunpack.c.l.b16 %v42
    %v80 = vunpack.c.h.b16 %v42
    %v81 = vunpack.c.l.b16 %v43
    %v82 = vunpack.c.h.b16 %v43
    %v83 = vunpack.c.l.b16 %v44
    %v84 = vunpack.c.h.b16 %v44
    %v85 = vunpack.c.l.b16 %v45
    %v86 = vunpack.c.h.b16 %v45
    %v87 = vunpack.c.l.b16 %v46
    %v88 = vunpack.c.h.b16 %v46
    %v89 = vpack.c.b16 %v65, %v61
    %v90 = vpack.c.b16 %v66, %v62
    %v91 = vpack.c.b16 %v67, %v63
    %v92 = vpack.c.b16 %v68, %v64
    %v93 = vpack.c.b16 %v73, %v69
    %v94 = vpack.c.b16 %v74, %v70
    %v95 = vpack.c.b16 %v75, %v71
    %v96 = vpack.c.b16 %v76, %v72
    %v97 = vpack.c.b16 %v81, %v77
    %v98 = vpack.c.b16 %v82, %v78
    %v99 = vpack.c.b16 %v83, %v79
    %v100 = vpack.c.b16 %v84, %v80
    %v101 = vpack.c.b16 %v85, %v85
    %v102 = vpack.c.b16 %v86, %v86
    %v103 = vpack.c.b16 %v87, %v87
    %v104 = vpack.c.b16 %v88, %v88
    %vm117 = vcmask 400384
    %v119 = vsel %vm117, %v32, 0
    %vm121 = vcmask 1040384
    %v122 = vsel 0, 4294967295, 65535
    %v123 = vsel %vm121, %v122, 0
    %v125 = vand.u32 %v101, %v123
    %v128 = vand.u32 %v102, %v123
    %v131 = vand.u32 %v103, %v123
    %v134 = vand.u32 %v104, %v123
    %136 = vmatpush.bf16.msra.mxu0 0
    %137 = vmatpush.bf16.msra.mxu0 0
    %138 = vmatpush.bf16.msra.mxu0 0
    %139 = vmatpush.bf16.msra.mxu0 0
    %140 = vmatpush.bf16.msra.mxu0 %v125
    %141 = vmatpush.bf16.msra.mxu0 %v97
    %142 = vmatpush.bf16.msra.mxu0 %v93
    %143 = vmatpush.bf16.msra.mxu0 %v89
    %144 = vmatmul.bf16.gmra.mxu0 %v119
    %v145 = vpop.f32.mrf.mxu0
    %v146 = vadd.f32 0.0, %v145
    %v147 = vpop.f32.mrf.mxu0
    %148 = vdwg.mxu0
    %149 = vmatpush.bf16.msra.mxu0 0
    %150 = vmatpush.bf16.msra.mxu0 0
    %151 = vmatpush.bf16.msra.mxu0 0
    %152 = vmatpush.bf16.msra.mxu0 0
    %153 = vmatpush.bf16.msra.mxu0 %v128
    %154 = vmatpush.bf16.msra.mxu0 %v98
    %155 = vmatpush.bf16.msra.mxu0 %v94
    %156 = vmatpush.bf16.msra.mxu0 %v90
    %157 = vmatmul.bf16.gmra.mxu0 %v119
    %v158 = vpop.f32.mrf.mxu0
    %v159 = vadd.f32 0.0, %v158
    %v160 = vpop.f32.mrf.mxu0
    %161 = vdwg.mxu0
    %162 = vmatpush.bf16.msra.mxu0 0
    %163 = vmatpush.bf16.msra.mxu0 0
    %164 = vmatpush.bf16.msra.mxu0 0
    %165 = vmatpush.bf16.msra.mxu0 0
    %166 = vmatpush.bf16.msra.mxu0 %v131
    %167 = vmatpush.bf16.msra.mxu0 %v99
    %168 = vmatpush.bf16.msra.mxu0 %v95
    %169 = vmatpush.bf16.msra.mxu0 %v91
    %170 = vmatmul.bf16.gmra.mxu0 %v119
    %v171 = vpop.f32.mrf.mxu0
    %v172 = vadd.f32 0.0, %v171
    %v173 = vpop.f32.mrf.mxu0
    %174 = vdwg.mxu0
    %175 = vmatpush.bf16.msra.mxu0 0
    %176 = vmatpush.bf16.msra.mxu0 0
    %177 = vmatpush.bf16.msra.mxu0 0
    %178 = vmatpush.bf16.msra.mxu0 0
    %179 = vmatpush.bf16.msra.mxu0 %v134
    %180 = vmatpush.bf16.msra.mxu0 %v100
    %181 = vmatpush.bf16.msra.mxu0 %v96
    %182 = vmatpush.bf16.msra.mxu0 %v92
    %183 = vmatmul.bf16.gmra.mxu0 %v119
    %v184 = vpop.f32.mrf.mxu0
    %v185 = vadd.f32 0.0, %v184
    %v186 = vpop.f32.mrf.mxu0
    %187 = vdwg.mxu0
    %v188 = vadd.f32 %v146, %v159
    %v189 = vadd.f32 %v188, %v172
    %v190 = vadd.f32 %v189, %v185
    %191 = vadd.xlane.f32.xlu0 %v190
    %v192 = vpop.xlane.xlu0 %191
    %v193 = vrcp.pop 512.0
    %v194 = vmul.f32 512.0, %v193
    %v195 = vsub.f32 1.0, %v194
    %v196 = vmul.f32 %v193, %v195
    %v197 = vadd.f32 %v193, %v196
    %vm198 = vweird.f32 %v193
    %v199 = vsel %vm198, %v193, %v197
    %v200 = vmul.f32 %v192, %v199
    %v201 = vsub.f32 %v146, %v200
    %v202 = vsub.f32 %v159, %v200
    %v203 = vsub.f32 %v172, %v200
    %v204 = vsub.f32 %v185, %v200
    %v205 = vmul.f32 %v201, %v201
    %v206 = vmul.f32 %v202, %v202
    %v207 = vmul.f32 %v203, %v203
    %v208 = vmul.f32 %v204, %v204
    %v209 = vadd.f32 %v205, %v206
    %v210 = vadd.f32 %v209, %v207
    %v211 = vadd.f32 %v210, %v208
    %212 = vadd.xlane.f32.xlu0 %v211
    %v213 = vpop.xlane.xlu0 %212
    %v214 = vmul.f32 %v213, %v199
    %v215 = vadd.f32 %v214, 1e-05
    %v216 = vrsqrt.pop %v215
    %v217 = vmul.f32 %v216, %v215
    %v218 = vmul.f32 %v217, %v216
    %v219 = vmul.f32 0.5, %v218
    %v220 = vsub.f32 1.5, %v219
    %v221 = vmul.f32 %v216, %v220
    %vm222 = vweird.f32 %v215
    %vm223 = vweird.f32 %v216
    %vm224 = vmor %vm222, %vm223
    %v225 = vsel %vm224, %v216, %v221
    %v226 = vmul.f32 %v201, %v225
    %v227 = vmul.f32 %v202, %v225
    %v228 = vmul.f32 %v203, %v225
    %v229 = vmul.f32 %v204, %v225
    %v230 = vld [vmem:[%s2] sm:$0xff]
    %232 = vset.pattern.permute.xlu0 0
    %233 = vperm.xlu0 %232, %v230
    %v234 = vpop.permute.xlu0 %233
    %v236 = vmul.f32 %v226, %v234
    %v237 = vmul.f32 %v227, %v234
    %v238 = vmul.f32 %v228, %v234
    %v239 = vmul.f32 %v229, %v234
    %v240 = vld [vmem:[%s3] sm:$0xff]
    %242 = vset.pattern.permute.xlu0 0
    %243 = vperm.xlu0 %242, %v240
    %v244 = vpop.permute.xlu0 %243
    %v246 = vadd.f32 %v236, %v244
    %v247 = vadd.f32 %v237, %v244
    %v248 = vadd.f32 %v238, %v244
    %v249 = vadd.f32 %v239, %v244
    %vm250 = vcmp.ge.f32.partialorder %v246, 0.0
    %vm251 = vcmp.ge.f32.partialorder %v247, 0.0
    %vm252 = vcmp.ge.f32.partialorder %v248, 0.0
    %vm253 = vcmp.ge.f32.partialorder %v249, 0.0
    %v254 = vmul.f32 %v246, 0.2
    %v255 = vmul.f32 %v247, 0.2
    %v256 = vmul.f32 %v248, 0.2
    %v257 = vmul.f32 %v249, 0.2
    %v258 = vsel %vm250, %v246, %v254
    %v259 = vsel %vm251, %v247, %v255
    %v260 = vsel %vm252, %v248, %v256
    %v261 = vsel %vm253, %v249, %v257
    %262 = vst [vmem:[%s4] sm:$0xff] %v258
    %263 = vst [vmem:[%s4 + $0x8] sm:$0xff] %v259
    %264 = vst [vmem:[%s4 + $0x10] sm:$0xff] %v260
    %265 = vst [vmem:[%s4 + $0x18] sm:$0xff] %v261
    // Predicated region
    $region22: #{generator_forward.12} parent=1 // pred_check
      _
    $region23: #{generator_forward.12} parent=1 // pred_check_branch
      %267 = sbr.rel (0) target = $region25
    $region24: #{generator_forward.12} parent=1 // pred_region
      _
    $region25: #{generator_forward.12} parent=1 // pred_fallthru
      _
    // Predicated region
    $region26: #{generator_forward.12} parent=1 // pred_check
      _
    $region27: #{generator_forward.12} parent=1 // pred_check_branch
      %269 = sbr.rel (0) target = $region29
    $region28: #{generator_forward.12} parent=1 // pred_region
      _
    $region29: #{generator_forward.12} parent=1 // pred_fallthru
      _
    %270 = vsyncpa [#allocation3], 1

// kernel: generator_forward.13
$region0: #{generator_forward.13}
  #allocation0 [shape = 'u32[]', space=smem, size = 0x4, offset = 0x4, fixed_abs, tag = 'smem constant byte address 0x4 - core index']
  #allocation1 [shape = 'u32[72,128]{1,0:T(1,128)}', space=vmem, size = 0x9000, scoped, tag = 'internal scratch']
  %s0 = inlined_call_operand.vmem [shape: bf16[72,128], index: 0, kind: input, shape index: {}]
  %s1 = inlined_call_operand.hbm [shape: bf16[16,72], index: 1, kind: input, shape index: {}]
  %s2 = inlined_call_operand.vmem [shape: f32[16,1], index: 2, kind: input, shape index: {}]
  %s3 = inlined_call_operand.vmem [shape: f32[16,1], index: 3, kind: input, shape index: {}]
  %s4 = inlined_call_operand.vmem [shape: f32[16,128], index: 4, kind: output, shape index: {}]
  %s5 = sld [smem:[#allocation0]]
  $region30: #{generator_forward.13} parent=0
    _
  %s7 = ssub.s32 1, %s5
  %s8 = scalar_select 0, %s7, %s5
  $region1: #{generator_forward.13} parent=0
    #allocation2 [shape = 'u8[4096]{0}', space=vmem, size = 0x1000, scoped, tag = 'input window, operand 1, single buffered']
    #allocation3 [shape = 's32[1]{0}', space=sflag, size = 0x4, scoped, tag = 'scoped memory for generator_forward.13']
    %9 = vsyncpa [#allocation3], 0
    // Predicated region
    $region2: #{generator_forward.13} parent=1 // pred_check
      _
    $region3: #{generator_forward.13} parent=1 // pred_check_branch
      %11 = sbr.rel (0) target = $region5
    $region4: #{generator_forward.13} parent=1 // pred_region
      _
    $region5: #{generator_forward.13} parent=1 // pred_fallthru
      _
    // Predicated region
    $region6: #{generator_forward.13} parent=1 // pred_check
      _
    $region7: #{generator_forward.13} parent=1 // pred_check_branch
      %13 = sbr.rel (0) target = $region9
    $region8: #{generator_forward.13} parent=1 // pred_region
      %15 = vsyncadd [#allocation3], 0
      %s16 = sshll.u32 %s1, 4
      %s17 = int_to_ptr.hbm [resolvable:$true] %s16
      %s18 = sshll.u32 [#allocation2], 4
      %s19 = int_to_ptr.vmem [resolvable:$true] %s18
      %24 = dma.hbm_to_vmem [thread:$0]  %s17, 128, %s19, [#allocation3], 64, 64, 4
    $region9: #{generator_forward.13} parent=1 // pred_fallthru
      _
    // Predicated region
    $region10: #{generator_forward.13} parent=1 // pred_check
      _
    $region11: #{generator_forward.13} parent=1 // pred_check_branch
      %26 = sbr.rel (0) target = $region13
    $region12: #{generator_forward.13} parent=1 // pred_region
      _
    $region13: #{generator_forward.13} parent=1 // pred_fallthru
      _
    // Predicated region
    $region14: #{generator_forward.13} parent=1 // pred_check
      _
    $region15: #{generator_forward.13} parent=1 // pred_check_branch
      %28 = sbr.rel (0) target = $region17
    $region16: #{generator_forward.13} parent=1 // pred_region
      _
    $region17: #{generator_forward.13} parent=1 // pred_fallthru
      _
    // Predicated region
    $region18: #{generator_forward.13} parent=1 // pred_check
      _
    $region19: #{generator_forward.13} parent=1 // pred_check_branch
      %30 = sbr.rel (0) target = $region21
    $region20: #{generator_forward.13} parent=1 // pred_region
      %32 = dma.done [#allocation3], 128
    $region21: #{generator_forward.13} parent=1 // pred_fallthru
      _
    %v34 = vld [vmem:[#allocation2] sm:$0xf]
    %v35 = vld [vmem:[#allocation2 + $0x4] sm:$0xf]
    %v36 = vld [vmem:[%s0] sm:$0xf]
    %v37 = vld [vmem:[%s0 + $0x4] sm:$0xf]
    %v38 = vld [vmem:[%s0 + $0x8] sm:$0xf]
    %v39 = vld [vmem:[%s0 + $0xc] sm:$0xf]
    %v40 = vld [vmem:[%s0 + $0x10] sm:$0xf]
    %v41 = vld [vmem:[%s0 + $0x14] sm:$0xf]
    %v42 = vld [vmem:[%s0 + $0x18] sm:$0xf]
    %v43 = vld [vmem:[%s0 + $0x1c] sm:$0xf]
    %v44 = vld [vmem:[%s0 + $0x20] sm:$0xf]
    %v47 = vunpack.c.l.b16 %v34
    %v48 = vunpack.c.l.b16 %v35
    %v49 = vpack.c.b16 %v48, %v47
    %v59 = vunpack.c.l.b16 %v36
    %v60 = vunpack.c.l.b16 %v37
    %v61 = vunpack.c.l.b16 %v38
    %v62 = vunpack.c.l.b16 %v39
    %v63 = vunpack.c.l.b16 %v40
    %v64 = vunpack.c.l.b16 %v41
    %v65 = vunpack.c.l.b16 %v42
    %v66 = vunpack.c.l.b16 %v43
    %v67 = vunpack.c.l.b16 %v44
    %v68 = vpack.c.b16 %v60, %v59
    %v69 = vpack.c.b16 %v62, %v61
    %v70 = vpack.c.b16 %v64, %v63
    %v71 = vpack.c.b16 %v66, %v65
    %v72 = vpack.c.b16 %v67, %v67
    %vm77 = vcmask 588800
    %v79 = vsel %vm77, %v49, 0
    %vm81 = vcmask 1043456
    %v83 = vsel %vm81, %v72, 0
    %85 = vmatpush.bf16.msra.mxu0 0
    %86 = vmatpush.bf16.msra.mxu0 0
    %87 = vmatpush.bf16.msra.mxu0 0
    %88 = vmatpush.bf16.msra.mxu0 %v83
    %89 = vmatpush.bf16.msra.mxu0 %v71
    %90 = vmatpush.bf16.msra.mxu0 %v70
    %91 = vmatpush.bf16.msra.mxu0 %v69
    %92 = vmatpush.bf16.msra.mxu0 %v68
    %93 = vmatmul.bf16.gmra.mxu0 %v79
    %v94 = vpop.f32.mrf.mxu0
    %v95 = vadd.f32 0.0, %v94
    %v96 = vpop.f32.mrf.mxu0
    %v97 = vadd.f32 0.0, %v96
    %98 = vdwg.mxu0
    %99 = vadd.xlane.f32.xlu0 %v95
    %v100 = vpop.xlane.xlu0 %99
    %101 = vadd.xlane.f32.xlu0 %v97
    %v102 = vpop.xlane.xlu0 %101
    %v103 = vrcp.pop 128.0
    %v104 = vmul.f32 128.0, %v103
    %v105 = vsub.f32 1.0, %v104
    %v106 = vmul.f32 %v103, %v105
    %v107 = vadd.f32 %v103, %v106
    %vm108 = vweird.f32 %v103
    %v109 = vsel %vm108, %v103, %v107
    %v110 = vmul.f32 %v100, %v109
    %v111 = vmul.f32 %v102, %v109
    %v112 = vsub.f32 %v95, %v110
    %v113 = vsub.f32 %v97, %v111
    %v114 = vmul.f32 %v112, %v112
    %v115 = vmul.f32 %v113, %v113
    %116 = vadd.xlane.f32.xlu0 %v114
    %v117 = vpop.xlane.xlu0 %116
    %118 = vadd.xlane.f32.xlu0 %v115
    %v119 = vpop.xlane.xlu0 %118
    %v120 = vmul.f32 %v117, %v109
    %v121 = vmul.f32 %v119, %v109
    %v122 = vadd.f32 %v120, 1e-05
    %v123 = vadd.f32 %v121, 1e-05
    %v124 = vrsqrt.pop %v122
    %v125 = vmul.f32 %v124, %v122
    %v126 = vmul.f32 %v125, %v124
    %v127 = vmul.f32 0.5, %v126
    %v128 = vsub.f32 1.5, %v127
    %v129 = vmul.f32 %v124, %v128
    %vm130 = vweird.f32 %v122
    %vm131 = vweird.f32 %v124
    %vm132 = vmor %vm130, %vm131
    %v133 = vsel %vm132, %v124, %v129
    %v134 = vrsqrt.pop %v123
    %v135 = vmul.f32 %v134, %v123
    %v136 = vmul.f32 %v135, %v134
    %v137 = vmul.f32 0.5, %v136
    %v138 = vsub.f32 1.5, %v137
    %v139 = vmul.f32 %v134, %v138
    %vm140 = vweird.f32 %v123
    %vm141 = vweird.f32 %v134
    %vm142 = vmor %vm140, %vm141
    %v143 = vsel %vm142, %v134, %v139
    %v144 = vmul.f32 %v112, %v133
    %v145 = vmul.f32 %v113, %v143
    %v146 = vld [vmem:[%s2] sm:$0xff]
    %v147 = vld [vmem:[%s2 + $0x8] sm:$0xff]
    %149 = vset.pattern.permute.xlu0 0
    %150 = vperm.xlu0 %149, %v146
    %v151 = vpop.permute.xlu0 %150
    %154 = vset.pattern.permute.xlu0 0
    %155 = vperm.xlu0 %154, %v147
    %v156 = vpop.permute.xlu0 %155
    %v158 = vmul.f32 %v144, %v151
    %v159 = vmul.f32 %v145, %v156
    %v160 = vld [vmem:[%s3] sm:$0xff]
    %v161 = vld [vmem:[%s3 + $0x8] sm:$0xff]
    %163 = vset.pattern.permute.xlu0 0
    %164 = vperm.xlu0 %163, %v160
    %v165 = vpop.permute.xlu0 %164
    %168 = vset.pattern.permute.xlu0 0
    %169 = vperm.xlu0 %168, %v161
    %v170 = vpop.permute.xlu0 %169
    %v172 = vadd.f32 %v158, %v165
    %v173 = vadd.f32 %v159, %v170
    %vm174 = vcmp.ge.f32.partialorder %v172, 0.0
    %vm175 = vcmp.ge.f32.partialorder %v173, 0.0
    %v176 = vmul.f32 %v172, 0.2
    %v177 = vmul.f32 %v173, 0.2
    %v178 = vsel %vm174, %v172, %v176
    %v179 = vsel %vm175, %v173, %v177
    %180 = vst [vmem:[%s4] sm:$0xff] %v178
    %181 = vst [vmem:[%s4 + $0x8] sm:$0xff] %v179
    // Predicated region
    $region22: #{generator_forward.13} parent=1 // pred_check
      _
    $region23: #{generator_forward.13} parent=1 // pred_check_branch
      %183 = sbr.rel (0) target = $region25
    $region24: #{generator_forward.13} parent=1 // pred_region
      _
    $region25: #{generator_forward.13} parent=1 // pred_fallthru
      _
    // Predicated region
    $region26: #{generator_forward.13} parent=1 // pred_check
      _
    $region27: #{generator_forward.13} parent=1 // pred_check_branch
      %185 = sbr.rel (0) target = $region29
    $region28: #{generator_forward.13} parent=1 // pred_region
      _
    $region29: #{generator_forward.13} parent=1 // pred_fallthru
      _
    %186 = vsyncpa [#allocation3], 1

// kernel: generator_forward.14
$region0: #{generator_forward.14}
  #allocation0 [shape = 'u32[]', space=smem, size = 0x4, offset = 0x4, fixed_abs, tag = 'smem constant byte address 0x4 - core index']
  #allocation1 [shape = 'u32[72,128]{1,0:T(1,128)}', space=vmem, size = 0x9000, scoped, tag = 'internal scratch']
  %s0 = inlined_call_operand.vmem [shape: bf16[144,32], index: 0, kind: input, shape index: {}]
  %s1 = inlined_call_operand.hbm [shape: bf16[32,144], index: 1, kind: input, shape index: {}]
  %s2 = inlined_call_operand.vmem [shape: f32[32,1], index: 2, kind: input, shape index: {}]
  %s3 = inlined_call_operand.vmem [shape: f32[32,1], index: 3, kind: input, shape index: {}]
  %s4 = inlined_call_operand.vmem [shape: f32[32,32], index: 4, kind: output, shape index: {}]
  %s5 = sld [smem:[#allocation0]]
  $region30: #{generator_forward.14} parent=0
    _
  %s7 = ssub.s32 1, %s5
  %s8 = scalar_select 0, %s7, %s5
  $region1: #{generator_forward.14} parent=0
    #allocation2 [shape = 'u8[16384]{0}', space=vmem, size = 0x4000, scoped, tag = 'input window, operand 1, single buffered']
    #allocation3 [shape = 's32[1]{0}', space=sflag, size = 0x4, scoped, tag = 'scoped memory for generator_forward.14']
    %9 = vsyncpa [#allocation3], 0
    // Predicated region
    $region2: #{generator_forward.14} parent=1 // pred_check
      _
    $region3: #{generator_forward.14} parent=1 // pred_check_branch
      %11 = sbr.rel (0) target = $region5
    $region4: #{generator_forward.14} parent=1 // pred_region
      _
    $region5: #{generator_forward.14} parent=1 // pred_fallthru
      _
    // Predicated region
    $region6: #{generator_forward.14} parent=1 // pred_check
      _
    $region7: #{generator_forward.14} parent=1 // pred_check_branch
      %13 = sbr.rel (0) target = $region9
    $region8: #{generator_forward.14} parent=1 // pred_region
      %15 = vsyncadd [#allocation3], 0
      %s16 = sshll.u32 %s1, 4
      %s17 = int_to_ptr.hbm [resolvable:$true] %s16
      %s18 = sshll.u32 [#allocation2], 4
      %s19 = int_to_ptr.vmem [resolvable:$true] %s18
      %24 = dma.hbm_to_vmem [thread:$0]  %s17, 512, %s19, [#allocation3], 128, 128, 8
    $region9: #{generator_forward.14} parent=1 // pred_fallthru
      _
    // Predicated region
    $region10: #{generator_forward.14} parent=1 // pred_check
      _
    $region11: #{generator_forward.14} parent=1 // pred_check_branch
      %26 = sbr.rel (0) target = $region13
    $region12: #{generator_forward.14} parent=1 // pred_region
      _
    $region13: #{generator_forward.14} parent=1 // pred_fallthru
      _
    // Predicated region
    $region14: #{generator_forward.14} parent=1 // pred_check
      _
    $region15: #{generator_forward.14} parent=1 // pred_check_branch
      %28 = sbr.rel (0) target = $region17
    $region16: #{generator_forward.14} parent=1 // pred_region
      _
    $region17: #{generator_forward.14} parent=1 // pred_fallthru
      _
    // Predicated region
    $region18: #{generator_forward.14} parent=1 // pred_check
      _
    $region19: #{generator_forward.14} parent=1 // pred_check_branch
      %30 = sbr.rel (0) target = $region21
    $region20: #{generator_forward.14} parent=1 // pred_region
      %32 = dma.done [#allocation3], 512
    $region21: #{generator_forward.14} parent=1 // pred_fallthru
      _
    %v34 = vld [vmem:[#allocation2] sm:$0xff]
    %v35 = vld [vmem:[#allocation2 + $0x8] sm:$0xff]
    %v36 = vld [vmem:[#allocation2 + $0x10] sm:$0xff]
    %v37 = vld [vmem:[#allocation2 + $0x18] sm:$0xff]
    %v38 = vld [vmem:[%s0] sm:$0xf]
    %v39 = vld [vmem:[%s0 + $0x4] sm:$0xf]
    %v40 = vld [vmem:[%s0 + $0x8] sm:$0xf]
    %v41 = vld [vmem:[%s0 + $0xc] sm:$0xf]
    %v42 = vld [vmem:[%s0 + $0x10] sm:$0xf]
    %v43 = vld [vmem:[%s0 + $0x14] sm:$0xf]
    %v44 = vld [vmem:[%s0 + $0x18] sm:$0xf]
    %v45 = vld [vmem:[%s0 + $0x1c] sm:$0xf]
    %v46 = vld [vmem:[%s0 + $0x20] sm:$0xf]
    %v47 = vld [vmem:[%s0 + $0x24] sm:$0xf]
    %v48 = vld [vmem:[%s0 + $0x28] sm:$0xf]
    %v49 = vld [vmem:[%s0 + $0x2c] sm:$0xf]
    %v50 = vld [vmem:[%s0 + $0x30] sm:$0xf]
    %v51 = vld [vmem:[%s0 + $0x34] sm:$0xf]
    %v52 = vld [vmem:[%s0 + $0x38] sm:$0xf]
    %v53 = vld [vmem:[%s0 + $0x3c] sm:$0xf]
    %v54 = vld [vmem:[%s0 + $0x40] sm:$0xf]
    %v55 = vld [vmem:[%s0 + $0x44] sm:$0xf]
    %v60 = vunpack.c.l.b16 %v34
    %v61 = vunpack.c.h.b16 %v34
    %v62 = vunpack.c.l.b16 %v35
    %v63 = vunpack.c.h.b16 %v35
    %v64 = vunpack.c.l.b16 %v36
    %v65 = vunpack.c.h.b16 %v36
    %v66 = vunpack.c.l.b16 %v37
    %v67 = vunpack.c.h.b16 %v37
    %v68 = vpack.c.b16 %v62, %v60
    %v69 = vpack.c.b16 %v63, %v61
    %v70 = vpack.c.b16 %v66, %v64
    %v71 = vpack.c.b16 %v67, %v65
    %v92 = vunpack.c.l.b16 %v38
    %v93 = vunpack.c.l.b16 %v39
    %v94 = vunpack.c.l.b16 %v40
    %v95 = vunpack.c.l.b16 %v41
    %v96 = vunpack.c.l.b16 %v42
    %v97 = vunpack.c.l.b16 %v43
    %v98 = vunpack.c.l.b16 %v44
    %v99 = vunpack.c.l.b16 %v45
    %v100 = vunpack.c.l.b16 %v46
    %v101 = vunpack.c.l.b16 %v47
    %v102 = vunpack.c.l.b16 %v48
    %v103 = vunpack.c.l.b16 %v49
    %v104 = vunpack.c.l.b16 %v50
    %v105 = vunpack.c.l.b16 %v51
    %v106 = vunpack.c.l.b16 %v52
    %v107 = vunpack.c.l.b16 %v53
    %v108 = vunpack.c.l.b16 %v54
    %v109 = vunpack.c.l.b16 %v55
    %v110 = vpack.c.b16 %v93, %v92
    %v111 = vpack.c.b16 %v95, %v94
    %v112 = vpack.c.b16 %v97, %v96
    %v113 = vpack.c.b16 %v99, %v98
    %v114 = vpack.c.b16 %v101, %v100
    %v115 = vpack.c.b16 %v103, %v102
    %v116 = vpack.c.b16 %v105, %v104
    %v117 = vpack.c.b16 %v107, %v106
    %v118 = vpack.c.b16 %v109, %v108
    %vm128 = vcmask 130048
    %v130 = vsel %vm128, %v69, 0
    %v133 = vsel %vm128, %v71, 0
    %135 = vmatpush.bf16.msra.mxu0 %v117
    %136 = vmatpush.bf16.msra.mxu0 %v116
    %137 = vmatpush.bf16.msra.mxu0 %v115
    %138 = vmatpush.bf16.msra.mxu0 %v114
    %139 = vmatpush.bf16.msra.mxu0 %v113
    %140 = vmatpush.bf16.msra.mxu0 %v112
    %141 = vmatpush.bf16.msra.mxu0 %v111
    %142 = vmatpush.bf16.msra.mxu0 %v110
    %143 = vmatmul.bf16.gmra.mxu0 %v68
    %v144 = vpop.f32.mrf.mxu0
    %v145 = vadd.f32 0.0, %v144
    %v146 = vpop.f32.mrf.mxu0
    %v147 = vadd.f32 0.0, %v146
    %148 = vmatmul.bf16.gmra.mxu0 %v70
    %v149 = vpop.f32.mrf.mxu0
    %v150 = vadd.f32 0.0, %v149
    %v151 = vpop.f32.mrf.mxu0
    %v152 = vadd.f32 0.0, %v151
    %153 = vdwg.mxu0
    %154 = vmatpush.bf16.msra.mxu0 0
    %155 = vmatpush.bf16.msra.mxu0 0
    %156 = vmatpush.bf16.msra.mxu0 0
    %157 = vmatpush.bf16.msra.mxu0 0
    %158 = vmatpush.bf16.msra.mxu0 0
    %159 = vmatpush.bf16.msra.mxu0 0
    %160 = vmatpush.bf16.msra.mxu0 0
    %161 = vmatpush.bf16.msra.mxu0 %v118
    %162 = vmatmul.bf16.gmra.mxu0 %v130
    %v163 = vpop.f32.mrf.mxu0
    %v164 = vadd.f32 %v145, %v163
    %v165 = vpop.f32.mrf.mxu0
    %v166 = vadd.f32 %v147, %v165
    %167 = vmatmul.bf16.gmra.mxu0 %v133
    %v168 = vpop.f32.mrf.mxu0
    %v169 = vadd.f32 %v150, %v168
    %v170 = vpop.f32.mrf.mxu0
    %v171 = vadd.f32 %v152, %v170
    %172 = vdwg.mxu0
    %vm173 = vcmask 261120
    %v174 = vsel %vm173, %v164, 0.0
    %175 = vadd.xlane.f32.xlu0 %v174
    %v176 = vpop.xlane.xlu0 %175
    %v177 = vsel %vm173, %v166, 0.0
    %178 = vadd.xlane.f32.xlu0 %v177
    %v179 = vpop.xlane.xlu0 %178
    %v180 = vsel %vm173, %v169, 0.0
    %181 = vadd.xlane.f32.xlu0 %v180
    %v182 = vpop.xlane.xlu0 %181
    %v183 = vsel %vm173, %v171, 0.0
    %184 = vadd.xlane.f32.xlu0 %v183
    %v185 = vpop.xlane.xlu0 %184
    %v186 = vrcp.pop 32.0
    %v187 = vmul.f32 32.0, %v186
    %v188 = vsub.f32 1.0, %v187
    %v189 = vmul.f32 %v186, %v188
    %v190 = vadd.f32 %v186, %v189
    %vm191 = vweird.f32 %v186
    %v192 = vsel %vm191, %v186, %v190
    %v193 = vmul.f32 %v176, %v192
    %v194 = vmul.f32 %v179, %v192
    %v195 = vmul.f32 %v182, %v192
    %v196 = vmul.f32 %v185, %v192
    %v197 = vsub.f32 %v164, %v193
    %v198 = vsub.f32 %v166, %v194
    %v199 = vsub.f32 %v169, %v195
    %v200 = vsub.f32 %v171, %v196
    %v201 = vmul.f32 %v197, %v197
    %v202 = vmul.f32 %v198, %v198
    %v203 = vmul.f32 %v199, %v199
    %v204 = vmul.f32 %v200, %v200
    %v205 = vsel %vm173, %v201, 0.0
    %206 = vadd.xlane.f32.xlu0 %v205
    %v207 = vpop.xlane.xlu0 %206
    %v208 = vsel %vm173, %v202, 0.0
    %209 = vadd.xlane.f32.xlu0 %v208
    %v210 = vpop.xlane.xlu0 %209
    %v211 = vsel %vm173, %v203, 0.0
    %212 = vadd.xlane.f32.xlu0 %v211
    %v213 = vpop.xlane.xlu0 %212
    %v214 = vsel %vm173, %v204, 0.0
    %215 = vadd.xlane.f32.xlu0 %v214
    %v216 = vpop.xlane.xlu0 %215
    %v217 = vmul.f32 %v207, %v192
    %v218 = vmul.f32 %v210, %v192
    %v219 = vmul.f32 %v213, %v192
    %v220 = vmul.f32 %v216, %v192
    %v221 = vadd.f32 %v217, 1e-05
    %v222 = vadd.f32 %v218, 1e-05
    %v223 = vadd.f32 %v219, 1e-05
    %v224 = vadd.f32 %v220, 1e-05
    %v225 = vrsqrt.pop %v221
    %v226 = vmul.f32 %v225, %v221
    %v227 = vmul.f32 %v226, %v225
    %v228 = vmul.f32 0.5, %v227
    %v229 = vsub.f32 1.5, %v228
    %v230 = vmul.f32 %v225, %v229
    %vm231 = vweird.f32 %v221
    %vm232 = vweird.f32 %v225
    %vm233 = vmor %vm231, %vm232
    %v234 = vsel %vm233, %v225, %v230
    %v235 = vrsqrt.pop %v222
    %v236 = vmul.f32 %v235, %v222
    %v237 = vmul.f32 %v236, %v235
    %v238 = vmul.f32 0.5, %v237
    %v239 = vsub.f32 1.5, %v238
    %v240 = vmul.f32 %v235, %v239
    %vm241 = vweird.f32 %v222
    %vm242 = vweird.f32 %v235
    %vm243 = vmor %vm241, %vm242
    %v244 = vsel %vm243, %v235, %v240
    %v245 = vrsqrt.pop %v223
    %v246 = vmul.f32 %v245, %v223
    %v247 = vmul.f32 %v246, %v245
    %v248 = vmul.f32 0.5, %v247
    %v249 = vsub.f32 1.5, %v248
    %v250 = vmul.f32 %v245, %v249
    %vm251 = vweird.f32 %v223
    %vm252 = vweird.f32 %v245
    %vm253 = vmor %vm251, %vm252
    %v254 = vsel %vm253, %v245, %v250
    %v255 = vrsqrt.pop %v224
    %v256 = vmul.f32 %v255, %v224
    %v257 = vmul.f32 %v256, %v255
    %v258 = vmul.f32 0.5, %v257
    %v259 = vsub.f32 1.5, %v258
    %v260 = vmul.f32 %v255, %v259
    %vm261 = vweird.f32 %v224
    %vm262 = vweird.f32 %v255
    %vm263 = vmor %vm261, %vm262
    %v264 = vsel %vm263, %v255, %v260
    %v265 = vmul.f32 %v197, %v234
    %v266 = vmul.f32 %v198, %v244
    %v267 = vmul.f32 %v199, %v254
    %v268 = vmul.f32 %v200, %v264
    %v269 = vld [vmem:[%s2] sm:$0xff]
    %v270 = vld [vmem:[%s2 + $0x8] sm:$0xff]
    %v271 = vld [vmem:[%s2 + $0x10] sm:$0xff]
    %v272 = vld [vmem:[%s2 + $0x18] sm:$0xff]
    %274 = vset.pattern.permute.xlu0 0
    %275 = vperm.xlu0 %274, %v269
    %v276 = vpop.permute.xlu0 %275
    %279 = vset.pattern.permute.xlu0 0
    %280 = vperm.xlu0 %279, %v270
    %v281 = vpop.permute.xlu0 %280
    %284 = vset.pattern.permute.xlu0 0
    %285 = vperm.xlu0 %284, %v271
    %v286 = vpop.permute.xlu0 %285
    %289 = vset.pattern.permute.xlu0 0
    %290 = vperm.xlu0 %289, %v272
    %v291 = vpop.permute.xlu0 %290
    %v293 = vmul.f32 %v265, %v276
    %v294 = vmul.f32 %v266, %v281
    %v295 = vmul.f32 %v267, %v286
    %v296 = vmul.f32 %v268, %v291
    %v297 = vld [vmem:[%s3] sm:$0xff]
    %v298 = vld [vmem:[%s3 + $0x8] sm:$0xff]
    %v299 = vld [vmem:[%s3 + $0x10] sm:$0xff]
    %v300 = vld [vmem:[%s3 + $0x18] sm:$0xff]
    %302 = vset.pattern.permute.xlu0 0
    %303 = vperm.xlu0 %302, %v297
    %v304 = vpop.permute.xlu0 %303
    %307 = vset.pattern.permute.xlu0 0
    %308 = vperm.xlu0 %307, %v298
    %v309 = vpop.permute.xlu0 %308
    %312 = vset.pattern.permute.xlu0 0
    %313 = vperm.xlu0 %312, %v299
    %v314 = vpop.permute.xlu0 %313
    %317 = vset.pattern.permute.xlu0 0
    %318 = vperm.xlu0 %317, %v300
    %v319 = vpop.permute.xlu0 %318
    %v321 = vadd.f32 %v293, %v304
    %v322 = vadd.f32 %v294, %v309
    %v323 = vadd.f32 %v295, %v314
    %v324 = vadd.f32 %v296, %v319
    %vm325 = vcmp.ge.f32.partialorder %v321, 0.0
    %vm326 = vcmp.ge.f32.partialorder %v322, 0.0
    %vm327 = vcmp.ge.f32.partialorder %v323, 0.0
    %vm328 = vcmp.ge.f32.partialorder %v324, 0.0
    %v329 = vmul.f32 %v321, 0.2
    %v330 = vmul.f32 %v322, 0.2
    %v331 = vmul.f32 %v323, 0.2
    %v332 = vmul.f32 %v324, 0.2
    %v333 = vsel %vm325, %v321, %v329
    %v334 = vsel %vm326, %v322, %v330
    %v335 = vsel %vm327, %v323, %v331
    %v336 = vsel %vm328, %v324, %v332
    %337 = vst.msk [vmem:[%s4] sm:$0xff] %vm173, %v333
    %338 = vst.msk [vmem:[%s4 + $0x8] sm:$0xff] %vm173, %v334
    %339 = vst.msk [vmem:[%s4 + $0x10] sm:$0xff] %vm173, %v335
    %340 = vst.msk [vmem:[%s4 + $0x18] sm:$0xff] %vm173, %v336
    // Predicated region
    $region22: #{generator_forward.14} parent=1 // pred_check
      _
    $region23: #{generator_forward.14} parent=1 // pred_check_branch
      %342 = sbr.rel (0) target = $region25
    $region24: #{generator_forward.14} parent=1 // pred_region
      _
    $region25: #{generator_forward.14} parent=1 // pred_fallthru
      _
    // Predicated region
    $region26: #{generator_forward.14} parent=1 // pred_check
      _
    $region27: #{generator_forward.14} parent=1 // pred_check_branch
      %344 = sbr.rel (0) target = $region29
    $region28: #{generator_forward.14} parent=1 // pred_region
      _
    $region29: #{generator_forward.14} parent=1 // pred_fallthru
      _
    %345 = vsyncpa [#allocation3], 1

// kernel: generator_forward.15
$region0: #{generator_forward.15}
  #allocation0 [shape = 'u32[]', space=smem, size = 0x4, offset = 0x4, fixed_abs, tag = 'smem constant byte address 0x4 - core index']
  #allocation1 [shape = 'u32[72,128]{1,0:T(1,128)}', space=vmem, size = 0x9000, scoped, tag = 'internal scratch']
  %s0 = inlined_call_operand.vmem [shape: bf16[288,32], index: 0, kind: input, shape index: {}]
  %s1 = inlined_call_operand.hbm [shape: bf16[32,288], index: 1, kind: input, shape index: {}]
  %s2 = inlined_call_operand.vmem [shape: f32[32,1], index: 2, kind: input, shape index: {}]
  %s3 = inlined_call_operand.vmem [shape: f32[32,1], index: 3, kind: input, shape index: {}]
  %s4 = inlined_call_operand.vmem [shape: f32[32,32], index: 4, kind: output, shape index: {}]
  %s5 = sld [smem:[#allocation0]]
  $region30: #{generator_forward.15} parent=0
    _
  %s7 = ssub.s32 1, %s5
  %s8 = scalar_select 0, %s7, %s5
  $region1: #{generator_forward.15} parent=0
    #allocation2 [shape = 'u8[24576]{0}', space=vmem, size = 0x6000, scoped, tag = 'input window, operand 1, single buffered']
    #allocation3 [shape = 's32[1]{0}', space=sflag, size = 0x4, scoped, tag = 'scoped memory for generator_forward.15']
    %9 = vsyncpa [#allocation3], 0
    // Predicated region
    $region2: #{generator_forward.15} parent=1 // pred_check
      _
    $region3: #{generator_forward.15} parent=1 // pred_check_branch
      %11 = sbr.rel (0) target = $region5
    $region4: #{generator_forward.15} parent=1 // pred_region
      _
    $region5: #{generator_forward.15} parent=1 // pred_fallthru
      _
    // Predicated region
    $region6: #{generator_forward.15} parent=1 // pred_check
      _
    $region7: #{generator_forward.15} parent=1 // pred_check_branch
      %13 = sbr.rel (0) target = $region9
    $region8: #{generator_forward.15} parent=1 // pred_region
      %15 = vsyncadd [#allocation3], 0
      %s16 = sshll.u32 %s1, 4
      %s17 = int_to_ptr.hbm [resolvable:$true] %s16
      %s18 = sshll.u32 [#allocation2], 4
      %s19 = int_to_ptr.vmem [resolvable:$true] %s18
      %24 = dma.hbm_to_vmem [thread:$0]  %s17, 768, %s19, [#allocation3], 192, 192, 12
    $region9: #{generator_forward.15} parent=1 // pred_fallthru
      _
    // Predicated region
    $region10: #{generator_forward.15} parent=1 // pred_check
      _
    $region11: #{generator_forward.15} parent=1 // pred_check_branch
      %26 = sbr.rel (0) target = $region13
    $region12: #{generator_forward.15} parent=1 // pred_region
      _
    $region13: #{generator_forward.15} parent=1 // pred_fallthru
      _
    // Predicated region
    $region14: #{generator_forward.15} parent=1 // pred_check
      _
    $region15: #{generator_forward.15} parent=1 // pred_check_branch
      %28 = sbr.rel (0) target = $region17
    $region16: #{generator_forward.15} parent=1 // pred_region
      _
    $region17: #{generator_forward.15} parent=1 // pred_fallthru
      _
    // Predicated region
    $region18: #{generator_forward.15} parent=1 // pred_check
      _
    $region19: #{generator_forward.15} parent=1 // pred_check_branch
      %30 = sbr.rel (0) target = $region21
    $region20: #{generator_forward.15} parent=1 // pred_region
      %32 = dma.done [#allocation3], 768
    $region21: #{generator_forward.15} parent=1 // pred_fallthru
      _
    %v34 = vld [vmem:[#allocation2] sm:$0xff]
    %v35 = vld [vmem:[#allocation2 + $0x8] sm:$0xf]
    %v36 = vld [vmem:[#allocation2 + $0xc] sm:$0xff]
    %v37 = vld [vmem:[#allocation2 + $0x14] sm:$0xf]
    %v38 = vld [vmem:[#allocation2 + $0x18] sm:$0xff]
    %v39 = vld [vmem:[#allocation2 + $0x20] sm:$0xf]
    %v40 = vld [vmem:[#allocation2 + $0x24] sm:$0xff]
    %v41 = vld [vmem:[#allocation2 + $0x2c] sm:$0xf]
    %v42 = vld [vmem:[%s0] sm:$0xf]
    %v43 = vld [vmem:[%s0 + $0x4] sm:$0xf]
    %v44 = vld [vmem:[%s0 + $0x8] sm:$0xf]
    %v45 = vld [vmem:[%s0 + $0xc] sm:$0xf]
    %v46 = vld [vmem:[%s0 + $0x10] sm:$0xf]
    %v47 = vld [vmem:[%s0 + $0x14] sm:$0xf]
    %v48 = vld [vmem:[%s0 + $0x18] sm:$0xf]
    %v49 = vld [vmem:[%s0 + $0x1c] sm:$0xf]
    %v50 = vld [vmem:[%s0 + $0x20] sm:$0xf]
    %v51 = vld [vmem:[%s0 + $0x24] sm:$0xf]
    %v52 = vld [vmem:[%s0 + $0x28] sm:$0xf]
    %v53 = vld [vmem:[%s0 + $0x2c] sm:$0xf]
    %v54 = vld [vmem:[%s0 + $0x30] sm:$0xf]
    %v55 = vld [vmem:[%s0 + $0x34] sm:$0xf]
    %v56 = vld [vmem:[%s0 + $0x38] sm:$0xf]
    %v57 = vld [vmem:[%s0 + $0x3c] sm:$0xf]
    %v58 = vld [vmem:[%s0 + $0x40] sm:$0xf]
    %v59 = vld [vmem:[%s0 + $0x44] sm:$0xf]
    %v60 = vld [vmem:[%s0 + $0x48] sm:$0xf]
    %v61 = vld [vmem:[%s0 + $0x4c] sm:$0xf]
    %v62 = vld [vmem:[%s0 + $0x50] sm:$0xf]
    %v63 = vld [vmem:[%s0 + $0x54] sm:$0xf]
    %v64 = vld [vmem:[%s0 + $0x58] sm:$0xf]
    %v65 = vld [vmem:[%s0 + $0x5c] sm:$0xf]
    %v66 = vld [vmem:[%s0 + $0x60] sm:$0xf]
    %v67 = vld [vmem:[%s0 + $0x64] sm:$0xf]
    %v68 = vld [vmem:[%s0 + $0x68] sm:$0xf]
    %v69 = vld [vmem:[%s0 + $0x6c] sm:$0xf]
    %v70 = vld [vmem:[%s0 + $0x70] sm:$0xf]
    %v71 = vld [vmem:[%s0 + $0x74] sm:$0xf]
    %v72 = vld [vmem:[%s0 + $0x78] sm:$0xf]
    %v73 = vld [vmem:[%s0 + $0x7c] sm:$0xf]
    %v74 = vld [vmem:[%s0 + $0x80] sm:$0xf]
    %v75 = vld [vmem:[%s0 + $0x84] sm:$0xf]
    %v76 = vld [vmem:[%s0 + $0x88] sm:$0xf]
    %v77 = vld [vmem:[%s0 + $0x8c] sm:$0xf]
    %v86 = vunpack.c.l.b16 %v34
    %v87 = vunpack.c.h.b16 %v34
    %v88 = vunpack.c.l.b16 %v35
    %v89 = vunpack.c.l.b16 %v36
    %v90 = vunpack.c.h.b16 %v36
    %v91 = vunpack.c.l.b16 %v37
    %v92 = vunpack.c.l.b16 %v38
    %v93 = vunpack.c.h.b16 %v38
    %v94 = vunpack.c.l.b16 %v39
    %v95 = vunpack.c.l.b16 %v40
    %v96 = vunpack.c.h.b16 %v40
    %v97 = vunpack.c.l.b16 %v41
    %v98 = vpack.c.b16 %v89, %v86
    %v99 = vpack.c.b16 %v90, %v87
    %v100 = vpack.c.b16 %v91, %v88
    %v101 = vpack.c.b16 %v95, %v92
    %v102 = vpack.c.b16 %v96, %v93
    %v103 = vpack.c.b16 %v97, %v94
    %v144 = vunpack.c.l.b16 %v42
    %v145 = vunpack.c.l.b16 %v43
    %v146 = vunpack.c.l.b16 %v44
    %v147 = vunpack.c.l.b16 %v45
    %v148 = vunpack.c.l.b16 %v46
    %v149 = vunpack.c.l.b16 %v47
    %v150 = vunpack.c.l.b16 %v48
    %v151 = vunpack.c.l.b16 %v49
    %v152 = vunpack.c.l.b16 %v50
    %v153 = vunpack.c.l.b16 %v51
    %v154 = vunpack.c.l.b16 %v52
    %v155 = vunpack.c.l.b16 %v53
    %v156 = vunpack.c.l.b16 %v54
    %v157 = vunpack.c.l.b16 %v55
    %v158 = vunpack.c.l.b16 %v56
    %v159 = vunpack.c.l.b16 %v57
    %v160 = vunpack.c.l.b16 %v58
    %v161 = vunpack.c.l.b16 %v59
    %v162 = vunpack.c.l.b16 %v60
    %v163 = vunpack.c.l.b16 %v61
    %v164 = vunpack.c.l.b16 %v62
    %v165 = vunpack.c.l.b16 %v63
    %v166 = vunpack.c.l.b16 %v64
    %v167 = vunpack.c.l.b16 %v65
    %v168 = vunpack.c.l.b16 %v66
    %v169 = vunpack.c.l.b16 %v67
    %v170 = vunpack.c.l.b16 %v68
    %v171 = vunpack.c.l.b16 %v69
    %v172 = vunpack.c.l.b16 %v70
    %v173 = vunpack.c.l.b16 %v71
    %v174 = vunpack.c.l.b16 %v72
    %v175 = vunpack.c.l.b16 %v73
    %v176 = vunpack.c.l.b16 %v74
    %v177 = vunpack.c.l.b16 %v75
    %v178 = vunpack.c.l.b16 %v76
    %v179 = vunpack.c.l.b16 %v77
    %v180 = vpack.c.b16 %v145, %v144
    %v181 = vpack.c.b16 %v147, %v146
    %v182 = vpack.c.b16 %v149, %v148
    %v183 = vpack.c.b16 %v151, %v150
    %v184 = vpack.c.b16 %v153, %v152
    %v185 = vpack.c.b16 %v155, %v154
    %v186 = vpack.c.b16 %v157, %v156
    %v187 = vpack.c.b16 %v159, %v158
    %v188 = vpack.c.b16 %v161, %v160
    %v189 = vpack.c.b16 %v163, %v162
    %v190 = vpack.c.b16 %v165, %v164
    %v191 = vpack.c.b16 %v167, %v166
    %v192 = vpack.c.b16 %v169, %v168
    %v193 = vpack.c.b16 %v171, %v170
    %v194 = vpack.c.b16 %v173, %v172
    %v195 = vpack.c.b16 %v175, %v174
    %v196 = vpack.c.b16 %v177, %v176
    %v197 = vpack.c.b16 %v179, %v178
    %vm216 = vcmask 261120
    %v218 = vsel %vm216, %v100, 0
    %v221 = vsel %vm216, %v103, 0
    %223 = vmatpush.bf16.msra.mxu0 %v187
    %224 = vmatpush.bf16.msra.mxu0 %v186
    %225 = vmatpush.bf16.msra.mxu0 %v185
    %226 = vmatpush.bf16.msra.mxu0 %v184
    %227 = vmatpush.bf16.msra.mxu0 %v183
    %228 = vmatpush.bf16.msra.mxu0 %v182
    %229 = vmatpush.bf16.msra.mxu0 %v181
    %230 = vmatpush.bf16.msra.mxu0 %v180
    %231 = vmatmul.bf16.gmra.mxu0 %v98
    %v232 = vpop.f32.mrf.mxu0
    %v233 = vadd.f32 0.0, %v232
    %v234 = vpop.f32.mrf.mxu0
    %v235 = vadd.f32 0.0, %v234
    %236 = vmatmul.bf16.gmra.mxu0 %v101
    %v237 = vpop.f32.mrf.mxu0
    %v238 = vadd.f32 0.0, %v237
    %v239 = vpop.f32.mrf.mxu0
    %v240 = vadd.f32 0.0, %v239
    %241 = vdwg.mxu0
    %242 = vmatpush.bf16.msra.mxu0 %v195
    %243 = vmatpush.bf16.msra.mxu0 %v194
    %244 = vmatpush.bf16.msra.mxu0 %v193
    %245 = vmatpush.bf16.msra.mxu0 %v192
    %246 = vmatpush.bf16.msra.mxu0 %v191
    %247 = vmatpush.bf16.msra.mxu0 %v190
    %248 = vmatpush.bf16.msra.mxu0 %v189
    %249 = vmatpush.bf16.msra.mxu0 %v188
    %250 = vmatmul.bf16.gmra.mxu0 %v99
    %v251 = vpop.f32.mrf.mxu0
    %v252 = vadd.f32 %v233, %v251
    %v253 = vpop.f32.mrf.mxu0
    %v254 = vadd.f32 %v235, %v253
    %255 = vmatmul.bf16.gmra.mxu0 %v102
    %v256 = vpop.f32.mrf.mxu0
    %v257 = vadd.f32 %v238, %v256
    %v258 = vpop.f32.mrf.mxu0
    %v259 = vadd.f32 %v240, %v258
    %260 = vdwg.mxu0
    %261 = vmatpush.bf16.msra.mxu0 0
    %262 = vmatpush.bf16.msra.mxu0 0
    %263 = vmatpush.bf16.msra.mxu0 0
    %264 = vmatpush.bf16.msra.mxu0 0
    %265 = vmatpush.bf16.msra.mxu0 0
    %266 = vmatpush.bf16.msra.mxu0 0
    %267 = vmatpush.bf16.msra.mxu0 %v197
    %268 = vmatpush.bf16.msra.mxu0 %v196
    %269 = vmatmul.bf16.gmra.mxu0 %v218
    %v270 = vpop.f32.mrf.mxu0
    %v271 = vadd.f32 %v252, %v270
    %v272 = vpop.f32.mrf.mxu0
    %v273 = vadd.f32 %v254, %v272
    %274 = vmatmul.bf16.gmra.mxu0 %v221
    %v275 = vpop.f32.mrf.mxu0
    %v276 = vadd.f32 %v257, %v275
    %v277 = vpop.f32.mrf.mxu0
    %v278 = vadd.f32 %v259, %v277
    %279 = vdwg.mxu0
    %v280 = vsel %vm216, %v271, 0.0
    %281 = vadd.xlane.f32.xlu0 %v280
    %v282 = vpop.xlane.xlu0 %281
    %v283 = vsel %vm216, %v273, 0.0
    %284 = vadd.xlane.f32.xlu0 %v283
    %v285 = vpop.xlane.xlu0 %284
    %v286 = vsel %vm216, %v276, 0.0
    %287 = vadd.xlane.f32.xlu0 %v286
    %v288 = vpop.xlane.xlu0 %287
    %v289 = vsel %vm216, %v278, 0.0
    %290 = vadd.xlane.f32.xlu0 %v289
    %v291 = vpop.xlane.xlu0 %290
    %v292 = vrcp.pop 32.0
    %v293 = vmul.f32 32.0, %v292
    %v294 = vsub.f32 1.0, %v293
    %v295 = vmul.f32 %v292, %v294
    %v296 = vadd.f32 %v292, %v295
    %vm297 = vweird.f32 %v292
    %v298 = vsel %vm297, %v292, %v296
    %v299 = vmul.f32 %v282, %v298
    %v300 = vmul.f32 %v285, %v298
    %v301 = vmul.f32 %v288, %v298
    %v302 = vmul.f32 %v291, %v298
    %v303 = vsub.f32 %v271, %v299
    %v304 = vsub.f32 %v273, %v300
    %v305 = vsub.f32 %v276, %v301
    %v306 = vsub.f32 %v278, %v302
    %v307 = vmul.f32 %v303, %v303
    %v308 = vmul.f32 %v304, %v304
    %v309 = vmul.f32 %v305, %v305
    %v310 = vmul.f32 %v306, %v306
    %v311 = vsel %vm216, %v307, 0.0
    %312 = vadd.xlane.f32.xlu0 %v311
    %v313 = vpop.xlane.xlu0 %312
    %v314 = vsel %vm216, %v308, 0.0
    %315 = vadd.xlane.f32.xlu0 %v314
    %v316 = vpop.xlane.xlu0 %315
    %v317 = vsel %vm216, %v309, 0.0
    %318 = vadd.xlane.f32.xlu0 %v317
    %v319 = vpop.xlane.xlu0 %318
    %v320 = vsel %vm216, %v310, 0.0
    %321 = vadd.xlane.f32.xlu0 %v320
    %v322 = vpop.xlane.xlu0 %321
    %v323 = vmul.f32 %v313, %v298
    %v324 = vmul.f32 %v316, %v298
    %v325 = vmul.f32 %v319, %v298
    %v326 = vmul.f32 %v322, %v298
    %v327 = vadd.f32 %v323, 1e-05
    %v328 = vadd.f32 %v324, 1e-05
    %v329 = vadd.f32 %v325, 1e-05
    %v330 = vadd.f32 %v326, 1e-05
    %v331 = vrsqrt.pop %v327
    %v332 = vmul.f32 %v331, %v327
    %v333 = vmul.f32 %v332, %v331
    %v334 = vmul.f32 0.5, %v333
    %v335 = vsub.f32 1.5, %v334
    %v336 = vmul.f32 %v331, %v335
    %vm337 = vweird.f32 %v327
    %vm338 = vweird.f32 %v331
    %vm339 = vmor %vm337, %vm338
    %v340 = vsel %vm339, %v331, %v336
    %v341 = vrsqrt.pop %v328
    %v342 = vmul.f32 %v341, %v328
    %v343 = vmul.f32 %v342, %v341
    %v344 = vmul.f32 0.5, %v343
    %v345 = vsub.f32 1.5, %v344
    %v346 = vmul.f32 %v341, %v345
    %vm347 = vweird.f32 %v328
    %vm348 = vweird.f32 %v341
    %vm349 = vmor %vm347, %vm348
    %v350 = vsel %vm349, %v341, %v346
    %v351 = vrsqrt.pop %v329
    %v352 = vmul.f32 %v351, %v329
    %v353 = vmul.f32 %v352, %v351
    %v354 = vmul.f32 0.5, %v353
    %v355 = vsub.f32 1.5, %v354
    %v356 = vmul.f32 %v351, %v355
    %vm357 = vweird.f32 %v329
    %vm358 = vweird.f32 %v351
    %vm359 = vmor %vm357, %vm358
    %v360 = vsel %vm359, %v351, %v356
    %v361 = vrsqrt.pop %v330
    %v362 = vmul.f32 %v361, %v330
    %v363 = vmul.f32 %v362, %v361
    %v364 = vmul.f32 0.5, %v363
    %v365 = vsub.f32 1.5, %v364
    %v366 = vmul.f32 %v361, %v365
    %vm367 = vweird.f32 %v330
    %vm368 = vweird.f32 %v361
    %vm369 = vmor %vm367, %vm368
    %v370 = vsel %vm369, %v361, %v366
    %v371 = vmul.f32 %v303, %v340
    %v372 = vmul.f32 %v304, %v350
    %v373 = vmul.f32 %v305, %v360
    %v374 = vmul.f32 %v306, %v370
    %v375 = vld [vmem:[%s2] sm:$0xff]
    %v376 = vld [vmem:[%s2 + $0x8] sm:$0xff]
    %v377 = vld [vmem:[%s2 + $0x10] sm:$0xff]
    %v378 = vld [vmem:[%s2 + $0x18] sm:$0xff]
    %380 = vset.pattern.permute.xlu0 0
    %381 = vperm.xlu0 %380, %v375
    %v382 = vpop.permute.xlu0 %381
    %385 = vset.pattern.permute.xlu0 0
    %386 = vperm.xlu0 %385, %v376
    %v387 = vpop.permute.xlu0 %386
    %390 = vset.pattern.permute.xlu0 0
    %391 = vperm.xlu0 %390, %v377
    %v392 = vpop.permute.xlu0 %391
    %395 = vset.pattern.permute.xlu0 0
    %396 = vperm.xlu0 %395, %v378
    %v397 = vpop.permute.xlu0 %396
    %v399 = vmul.f32 %v371, %v382
    %v400 = vmul.f32 %v372, %v387
    %v401 = vmul.f32 %v373, %v392
    %v402 = vmul.f32 %v374, %v397
    %v403 = vld [vmem:[%s3] sm:$0xff]
    %v404 = vld [vmem:[%s3 + $0x8] sm:$0xff]
    %v405 = vld [vmem:[%s3 + $0x10] sm:$0xff]
    %v406 = vld [vmem:[%s3 + $0x18] sm:$0xff]
    %408 = vset.pattern.permute.xlu0 0
    %409 = vperm.xlu0 %408, %v403
    %v410 = vpop.permute.xlu0 %409
    %413 = vset.pattern.permute.xlu0 0
    %414 = vperm.xlu0 %413, %v404
    %v415 = vpop.permute.xlu0 %414
    %418 = vset.pattern.permute.xlu0 0
    %419 = vperm.xlu0 %418, %v405
    %v420 = vpop.permute.xlu0 %419
    %423 = vset.pattern.permute.xlu0 0
    %424 = vperm.xlu0 %423, %v406
    %v425 = vpop.permute.xlu0 %424
    %v427 = vadd.f32 %v399, %v410
    %v428 = vadd.f32 %v400, %v415
    %v429 = vadd.f32 %v401, %v420
    %v430 = vadd.f32 %v402, %v425
    %v431 = vmax.f32 %v427, 0.0
    %v432 = vmax.f32 %v428, 0.0
    %v433 = vmax.f32 %v429, 0.0
    %v434 = vmax.f32 %v430, 0.0
    %435 = vst.msk [vmem:[%s4] sm:$0xff] %vm216, %v431
    %436 = vst.msk [vmem:[%s4 + $0x8] sm:$0xff] %vm216, %v432
    %437 = vst.msk [vmem:[%s4 + $0x10] sm:$0xff] %vm216, %v433
    %438 = vst.msk [vmem:[%s4 + $0x18] sm:$0xff] %vm216, %v434
    // Predicated region
    $region22: #{generator_forward.15} parent=1 // pred_check
      _
    $region23: #{generator_forward.15} parent=1 // pred_check_branch
      %440 = sbr.rel (0) target = $region25
    $region24: #{generator_forward.15} parent=1 // pred_region
      _
    $region25: #{generator_forward.15} parent=1 // pred_fallthru
      _
    // Predicated region
    $region26: #{generator_forward.15} parent=1 // pred_check
      _
    $region27: #{generator_forward.15} parent=1 // pred_check_branch
      %442 = sbr.rel (0) target = $region29
    $region28: #{generator_forward.15} parent=1 // pred_region
      _
    $region29: #{generator_forward.15} parent=1 // pred_fallthru
      _
    %443 = vsyncpa [#allocation3], 1

// kernel: generator_forward.16
$region0: #{generator_forward.16}
  #allocation0 [shape = 'u32[]', space=smem, size = 0x4, offset = 0x4, fixed_abs, tag = 'smem constant byte address 0x4 - core index']
  #allocation1 [shape = 'u32[72,128]{1,0:T(1,128)}', space=vmem, size = 0x9000, scoped, tag = 'internal scratch']
  %s0 = inlined_call_operand.vmem [shape: bf16[288,32], index: 0, kind: input, shape index: {}]
  %s1 = inlined_call_operand.vmem [shape: bf16[32,288], index: 1, kind: input, shape index: {}]
  %s2 = inlined_call_operand.vmem [shape: f32[32,1], index: 2, kind: input, shape index: {}]
  %s3 = inlined_call_operand.vmem [shape: f32[32,1], index: 3, kind: input, shape index: {}]
  %s4 = inlined_call_operand.vmem [shape: f32[32,32], index: 4, kind: input, shape index: {}]
  %s5 = inlined_call_operand.vmem [shape: f32[32,32], index: 5, kind: output, shape index: {}]
  %s6 = sld [smem:[#allocation0]]
  $region30: #{generator_forward.16} parent=0
    _
  %s8 = ssub.s32 1, %s6
  %s9 = scalar_select 0, %s8, %s6
  // Predicated region
  $region2: #{generator_forward.16} parent=0 // pred_check
    _
  $region3: #{generator_forward.16} parent=0 // pred_check_branch
    %11 = sbr.rel (0) target = $region5
  $region4: #{generator_forward.16} parent=0 // pred_region
    _
  $region5: #{generator_forward.16} parent=0 // pred_fallthru
    _
  // Predicated region
  $region6: #{generator_forward.16} parent=0 // pred_check
    _
  $region7: #{generator_forward.16} parent=0 // pred_check_branch
    %13 = sbr.rel (0) target = $region9
  $region8: #{generator_forward.16} parent=0 // pred_region
    _
  $region9: #{generator_forward.16} parent=0 // pred_fallthru
    _
  // Predicated region
  $region10: #{generator_forward.16} parent=0 // pred_check
    _
  $region11: #{generator_forward.16} parent=0 // pred_check_branch
    %15 = sbr.rel (0) target = $region13
  $region12: #{generator_forward.16} parent=0 // pred_region
    _
  $region13: #{generator_forward.16} parent=0 // pred_fallthru
    _
  // Predicated region
  $region14: #{generator_forward.16} parent=0 // pred_check
    _
  $region15: #{generator_forward.16} parent=0 // pred_check_branch
    %17 = sbr.rel (0) target = $region17
  $region16: #{generator_forward.16} parent=0 // pred_region
    _
  $region17: #{generator_forward.16} parent=0 // pred_fallthru
    _
  // Predicated region
  $region18: #{generator_forward.16} parent=0 // pred_check
    _
  $region19: #{generator_forward.16} parent=0 // pred_check_branch
    %19 = sbr.rel (0) target = $region21
  $region20: #{generator_forward.16} parent=0 // pred_region
    _
  $region21: #{generator_forward.16} parent=0 // pred_fallthru
    _
  %v21 = vld [vmem:[%s1] sm:$0xff]
  %v22 = vld [vmem:[%s1 + $0x8] sm:$0xf]
  %v23 = vld [vmem:[%s1 + $0xc] sm:$0xff]
  %v24 = vld [vmem:[%s1 + $0x14] sm:$0xf]
  %v25 = vld [vmem:[%s1 + $0x18] sm:$0xff]
  %v26 = vld [vmem:[%s1 + $0x20] sm:$0xf]
  %v27 = vld [vmem:[%s1 + $0x24] sm:$0xff]
  %v28 = vld [vmem:[%s1 + $0x2c] sm:$0xf]
  %v29 = vld [vmem:[%s0] sm:$0xf]
  %v30 = vld [vmem:[%s0 + $0x4] sm:$0xf]
  %v31 = vld [vmem:[%s0 + $0x8] sm:$0xf]
  %v32 = vld [vmem:[%s0 + $0xc] sm:$0xf]
  %v33 = vld [vmem:[%s0 + $0x10] sm:$0xf]
  %v34 = vld [vmem:[%s0 + $0x14] sm:$0xf]
  %v35 = vld [vmem:[%s0 + $0x18] sm:$0xf]
  %v36 = vld [vmem:[%s0 + $0x1c] sm:$0xf]
  %v37 = vld [vmem:[%s0 + $0x20] sm:$0xf]
  %v38 = vld [vmem:[%s0 + $0x24] sm:$0xf]
  %v39 = vld [vmem:[%s0 + $0x28] sm:$0xf]
  %v40 = vld [vmem:[%s0 + $0x2c] sm:$0xf]
  %v41 = vld [vmem:[%s0 + $0x30] sm:$0xf]
  %v42 = vld [vmem:[%s0 + $0x34] sm:$0xf]
  %v43 = vld [vmem:[%s0 + $0x38] sm:$0xf]
  %v44 = vld [vmem:[%s0 + $0x3c] sm:$0xf]
  %v45 = vld [vmem:[%s0 + $0x40] sm:$0xf]
  %v46 = vld [vmem:[%s0 + $0x44] sm:$0xf]
  %v47 = vld [vmem:[%s0 + $0x48] sm:$0xf]
  %v48 = vld [vmem:[%s0 + $0x4c] sm:$0xf]
  %v49 = vld [vmem:[%s0 + $0x50] sm:$0xf]
  %v50 = vld [vmem:[%s0 + $0x54] sm:$0xf]
  %v51 = vld [vmem:[%s0 + $0x58] sm:$0xf]
  %v52 = vld [vmem:[%s0 + $0x5c] sm:$0xf]
  %v53 = vld [vmem:[%s0 + $0x60] sm:$0xf]
  %v54 = vld [vmem:[%s0 + $0x64] sm:$0xf]
  %v55 = vld [vmem:[%s0 + $0x68] sm:$0xf]
  %v56 = vld [vmem:[%s0 + $0x6c] sm:$0xf]
  %v57 = vld [vmem:[%s0 + $0x70] sm:$0xf]
  %v58 = vld [vmem:[%s0 + $0x74] sm:$0xf]
  %v59 = vld [vmem:[%s0 + $0x78] sm:$0xf]
  %v60 = vld [vmem:[%s0 + $0x7c] sm:$0xf]
  %v61 = vld [vmem:[%s0 + $0x80] sm:$0xf]
  %v62 = vld [vmem:[%s0 + $0x84] sm:$0xf]
  %v63 = vld [vmem:[%s0 + $0x88] sm:$0xf]
  %v64 = vld [vmem:[%s0 + $0x8c] sm:$0xf]
  %v73 = vunpack.c.l.b16 %v21
  %v74 = vunpack.c.h.b16 %v21
  %v75 = vunpack.c.l.b16 %v22
  %v76 = vunpack.c.l.b16 %v23
  %v77 = vunpack.c.h.b16 %v23
  %v78 = vunpack.c.l.b16 %v24
  %v79 = vunpack.c.l.b16 %v25
  %v80 = vunpack.c.h.b16 %v25
  %v81 = vunpack.c.l.b16 %v26
  %v82 = vunpack.c.l.b16 %v27
  %v83 = vunpack.c.h.b16 %v27
  %v84 = vunpack.c.l.b16 %v28
  %v85 = vpack.c.b16 %v76, %v73
  %v86 = vpack.c.b16 %v77, %v74
  %v87 = vpack.c.b16 %v78, %v75
  %v88 = vpack.c.b16 %v82, %v79
  %v89 = vpack.c.b16 %v83, %v80
  %v90 = vpack.c.b16 %v84, %v81
  %v131 = vunpack.c.l.b16 %v29
  %v132 = vunpack.c.l.b16 %v30
  %v133 = vunpack.c.l.b16 %v31
  %v134 = vunpack.c.l.b16 %v32
  %v135 = vunpack.c.l.b16 %v33
  %v136 = vunpack.c.l.b16 %v34
  %v137 = vunpack.c.l.b16 %v35
  %v138 = vunpack.c.l.b16 %v36
  %v139 = vunpack.c.l.b16 %v37
  %v140 = vunpack.c.l.b16 %v38
  %v141 = vunpack.c.l.b16 %v39
  %v142 = vunpack.c.l.b16 %v40
  %v143 = vunpack.c.l.b16 %v41
  %v144 = vunpack.c.l.b16 %v42
  %v145 = vunpack.c.l.b16 %v43
  %v146 = vunpack.c.l.b16 %v44
  %v147 = vunpack.c.l.b16 %v45
  %v148 = vunpack.c.l.b16 %v46
  %v149 = vunpack.c.l.b16 %v47
  %v150 = vunpack.c.l.b16 %v48
  %v151 = vunpack.c.l.b16 %v49
  %v152 = vunpack.c.l.b16 %v50
  %v153 = vunpack.c.l.b16 %v51
  %v154 = vunpack.c.l.b16 %v52
  %v155 = vunpack.c.l.b16 %v53
  %v156 = vunpack.c.l.b16 %v54
  %v157 = vunpack.c.l.b16 %v55
  %v158 = vunpack.c.l.b16 %v56
  %v159 = vunpack.c.l.b16 %v57
  %v160 = vunpack.c.l.b16 %v58
  %v161 = vunpack.c.l.b16 %v59
  %v162 = vunpack.c.l.b16 %v60
  %v163 = vunpack.c.l.b16 %v61
  %v164 = vunpack.c.l.b16 %v62
  %v165 = vunpack.c.l.b16 %v63
  %v166 = vunpack.c.l.b16 %v64
  %v167 = vpack.c.b16 %v132, %v131
  %v168 = vpack.c.b16 %v134, %v133
  %v169 = vpack.c.b16 %v136, %v135
  %v170 = vpack.c.b16 %v138, %v137
  %v171 = vpack.c.b16 %v140, %v139
  %v172 = vpack.c.b16 %v142, %v141
  %v173 = vpack.c.b16 %v144, %v143
  %v174 = vpack.c.b16 %v146, %v145
  %v175 = vpack.c.b16 %v148, %v147
  %v176 = vpack.c.b16 %v150, %v149
  %v177 = vpack.c.b16 %v152, %v151
  %v178 = vpack.c.b16 %v154, %v153
  %v179 = vpack.c.b16 %v156, %v155
  %v180 = vpack.c.b16 %v158, %v157
  %v181 = vpack.c.b16 %v160, %v159
  %v182 = vpack.c.b16 %v162, %v161
  %v183 = vpack.c.b16 %v164, %v163
  %v184 = vpack.c.b16 %v166, %v165
  %vm203 = vcmask 261120
  %v205 = vsel %vm203, %v87, 0
  %v208 = vsel %vm203, %v90, 0
  %210 = vmatpush.bf16.msra.mxu0 %v174
  %211 = vmatpush.bf16.msra.mxu0 %v173
  %212 = vmatpush.bf16.msra.mxu0 %v172
  %213 = vmatpush.bf16.msra.mxu0 %v171
  %214 = vmatpush.bf16.msra.mxu0 %v170
  %215 = vmatpush.bf16.msra.mxu0 %v169
  %216 = vmatpush.bf16.msra.mxu0 %v168
  %217 = vmatpush.bf16.msra.mxu0 %v167
  %218 = vmatmul.bf16.gmra.mxu0 %v85
  %v219 = vpop.f32.mrf.mxu0
  %v220 = vadd.f32 0.0, %v219
  %v221 = vpop.f32.mrf.mxu0
  %v222 = vadd.f32 0.0, %v221
  %223 = vmatmul.bf16.gmra.mxu0 %v88
  %v224 = vpop.f32.mrf.mxu0
  %v225 = vadd.f32 0.0, %v224
  %v226 = vpop.f32.mrf.mxu0
  %v227 = vadd.f32 0.0, %v226
  %228 = vdwg.mxu0
  %229 = vmatpush.bf16.msra.mxu0 %v182
  %230 = vmatpush.bf16.msra.mxu0 %v181
  %231 = vmatpush.bf16.msra.mxu0 %v180
  %232 = vmatpush.bf16.msra.mxu0 %v179
  %233 = vmatpush.bf16.msra.mxu0 %v178
  %234 = vmatpush.bf16.msra.mxu0 %v177
  %235 = vmatpush.bf16.msra.mxu0 %v176
  %236 = vmatpush.bf16.msra.mxu0 %v175
  %237 = vmatmul.bf16.gmra.mxu0 %v86
  %v238 = vpop.f32.mrf.mxu0
  %v239 = vadd.f32 %v220, %v238
  %v240 = vpop.f32.mrf.mxu0
  %v241 = vadd.f32 %v222, %v240
  %242 = vmatmul.bf16.gmra.mxu0 %v89
  %v243 = vpop.f32.mrf.mxu0
  %v244 = vadd.f32 %v225, %v243
  %v245 = vpop.f32.mrf.mxu0
  %v246 = vadd.f32 %v227, %v245
  %247 = vdwg.mxu0
  %248 = vmatpush.bf16.msra.mxu0 0
  %249 = vmatpush.bf16.msra.mxu0 0
  %250 = vmatpush.bf16.msra.mxu0 0
  %251 = vmatpush.bf16.msra.mxu0 0
  %252 = vmatpush.bf16.msra.mxu0 0
  %253 = vmatpush.bf16.msra.mxu0 0
  %254 = vmatpush.bf16.msra.mxu0 %v184
  %255 = vmatpush.bf16.msra.mxu0 %v183
  %256 = vmatmul.bf16.gmra.mxu0 %v205
  %v257 = vpop.f32.mrf.mxu0
  %v258 = vadd.f32 %v239, %v257
  %v259 = vpop.f32.mrf.mxu0
  %v260 = vadd.f32 %v241, %v259
  %261 = vmatmul.bf16.gmra.mxu0 %v208
  %v262 = vpop.f32.mrf.mxu0
  %v263 = vadd.f32 %v244, %v262
  %v264 = vpop.f32.mrf.mxu0
  %v265 = vadd.f32 %v246, %v264
  %266 = vdwg.mxu0
  %v267 = vsel %vm203, %v258, 0.0
  %268 = vadd.xlane.f32.xlu0 %v267
  %v269 = vpop.xlane.xlu0 %268
  %v270 = vsel %vm203, %v260, 0.0
  %271 = vadd.xlane.f32.xlu0 %v270
  %v272 = vpop.xlane.xlu0 %271
  %v273 = vsel %vm203, %v263, 0.0
  %274 = vadd.xlane.f32.xlu0 %v273
  %v275 = vpop.xlane.xlu0 %274
  %v276 = vsel %vm203, %v265, 0.0
  %277 = vadd.xlane.f32.xlu0 %v276
  %v278 = vpop.xlane.xlu0 %277
  %v279 = vrcp.pop 32.0
  %v280 = vmul.f32 32.0, %v279
  %v281 = vsub.f32 1.0, %v280
  %v282 = vmul.f32 %v279, %v281
  %v283 = vadd.f32 %v279, %v282
  %vm284 = vweird.f32 %v279
  %v285 = vsel %vm284, %v279, %v283
  %v286 = vmul.f32 %v269, %v285
  %v287 = vmul.f32 %v272, %v285
  %v288 = vmul.f32 %v275, %v285
  %v289 = vmul.f32 %v278, %v285
  %v290 = vsub.f32 %v258, %v286
  %v291 = vsub.f32 %v260, %v287
  %v292 = vsub.f32 %v263, %v288
  %v293 = vsub.f32 %v265, %v289
  %v294 = vmul.f32 %v290, %v290
  %v295 = vmul.f32 %v291, %v291
  %v296 = vmul.f32 %v292, %v292
  %v297 = vmul.f32 %v293, %v293
  %v298 = vsel %vm203, %v294, 0.0
  %299 = vadd.xlane.f32.xlu0 %v298
  %v300 = vpop.xlane.xlu0 %299
  %v301 = vsel %vm203, %v295, 0.0
  %302 = vadd.xlane.f32.xlu0 %v301
  %v303 = vpop.xlane.xlu0 %302
  %v304 = vsel %vm203, %v296, 0.0
  %305 = vadd.xlane.f32.xlu0 %v304
  %v306 = vpop.xlane.xlu0 %305
  %v307 = vsel %vm203, %v297, 0.0
  %308 = vadd.xlane.f32.xlu0 %v307
  %v309 = vpop.xlane.xlu0 %308
  %v310 = vmul.f32 %v300, %v285
  %v311 = vmul.f32 %v303, %v285
  %v312 = vmul.f32 %v306, %v285
  %v313 = vmul.f32 %v309, %v285
  %v314 = vadd.f32 %v310, 1e-05
  %v315 = vadd.f32 %v311, 1e-05
  %v316 = vadd.f32 %v312, 1e-05
  %v317 = vadd.f32 %v313, 1e-05
  %v318 = vrsqrt.pop %v314
  %v319 = vmul.f32 %v318, %v314
  %v320 = vmul.f32 %v319, %v318
  %v321 = vmul.f32 0.5, %v320
  %v322 = vsub.f32 1.5, %v321
  %v323 = vmul.f32 %v318, %v322
  %vm324 = vweird.f32 %v314
  %vm325 = vweird.f32 %v318
  %vm326 = vmor %vm324, %vm325
  %v327 = vsel %vm326, %v318, %v323
  %v328 = vrsqrt.pop %v315
  %v329 = vmul.f32 %v328, %v315
  %v330 = vmul.f32 %v329, %v328
  %v331 = vmul.f32 0.5, %v330
  %v332 = vsub.f32 1.5, %v331
  %v333 = vmul.f32 %v328, %v332
  %vm334 = vweird.f32 %v315
  %vm335 = vweird.f32 %v328
  %vm336 = vmor %vm334, %vm335
  %v337 = vsel %vm336, %v328, %v333
  %v338 = vrsqrt.pop %v316
  %v339 = vmul.f32 %v338, %v316
  %v340 = vmul.f32 %v339, %v338
  %v341 = vmul.f32 0.5, %v340
  %v342 = vsub.f32 1.5, %v341
  %v343 = vmul.f32 %v338, %v342
  %vm344 = vweird.f32 %v316
  %vm345 = vweird.f32 %v338
  %vm346 = vmor %vm344, %vm345
  %v347 = vsel %vm346, %v338, %v343
  %v348 = vrsqrt.pop %v317
  %v349 = vmul.f32 %v348, %v317
  %v350 = vmul.f32 %v349, %v348
  %v351 = vmul.f32 0.5, %v350
  %v352 = vsub.f32 1.5, %v351
  %v353 = vmul.f32 %v348, %v352
  %vm354 = vweird.f32 %v317
  %vm355 = vweird.f32 %v348
  %vm356 = vmor %vm354, %vm355
  %v357 = vsel %vm356, %v348, %v353
  %v358 = vmul.f32 %v290, %v327
  %v359 = vmul.f32 %v291, %v337
  %v360 = vmul.f32 %v292, %v347
  %v361 = vmul.f32 %v293, %v357
  %v362 = vld [vmem:[%s2] sm:$0xff]
  %v363 = vld [vmem:[%s2 + $0x8] sm:$0xff]
  %v364 = vld [vmem:[%s2 + $0x10] sm:$0xff]
  %v365 = vld [vmem:[%s2 + $0x18] sm:$0xff]
  %367 = vset.pattern.permute.xlu0 0
  %368 = vperm.xlu0 %367, %v362
  %v369 = vpop.permute.xlu0 %368
  %372 = vset.pattern.permute.xlu0 0
  %373 = vperm.xlu0 %372, %v363
  %v374 = vpop.permute.xlu0 %373
  %377 = vset.pattern.permute.xlu0 0
  %378 = vperm.xlu0 %377, %v364
  %v379 = vpop.permute.xlu0 %378
  %382 = vset.pattern.permute.xlu0 0
  %383 = vperm.xlu0 %382, %v365
  %v384 = vpop.permute.xlu0 %383
  %v386 = vmul.f32 %v358, %v369
  %v387 = vmul.f32 %v359, %v374
  %v388 = vmul.f32 %v360, %v379
  %v389 = vmul.f32 %v361, %v384
  %v390 = vld [vmem:[%s3] sm:$0xff]
  %v391 = vld [vmem:[%s3 + $0x8] sm:$0xff]
  %v392 = vld [vmem:[%s3 + $0x10] sm:$0xff]
  %v393 = vld [vmem:[%s3 + $0x18] sm:$0xff]
  %395 = vset.pattern.permute.xlu0 0
  %396 = vperm.xlu0 %395, %v390
  %v397 = vpop.permute.xlu0 %396
  %400 = vset.pattern.permute.xlu0 0
  %401 = vperm.xlu0 %400, %v391
  %v402 = vpop.permute.xlu0 %401
  %405 = vset.pattern.permute.xlu0 0
  %406 = vperm.xlu0 %405, %v392
  %v407 = vpop.permute.xlu0 %406
  %410 = vset.pattern.permute.xlu0 0
  %411 = vperm.xlu0 %410, %v393
  %v412 = vpop.permute.xlu0 %411
  %v414 = vadd.f32 %v386, %v397
  %v415 = vadd.f32 %v387, %v402
  %v416 = vadd.f32 %v388, %v407
  %v417 = vadd.f32 %v389, %v412
  %v418 = vld [vmem:[%s4] sm:$0xff]
  %v419 = vld [vmem:[%s4 + $0x8] sm:$0xff]
  %v420 = vld [vmem:[%s4 + $0x10] sm:$0xff]
  %v421 = vld [vmem:[%s4 + $0x18] sm:$0xff]
  %v422 = vadd.f32 %v414, %v418
  %v423 = vadd.f32 %v415, %v419
  %v424 = vadd.f32 %v416, %v420
  %v425 = vadd.f32 %v417, %v421
  %426 = vst.msk [vmem:[%s5] sm:$0xff] %vm203, %v422
  %427 = vst.msk [vmem:[%s5 + $0x8] sm:$0xff] %vm203, %v423
  %428 = vst.msk [vmem:[%s5 + $0x10] sm:$0xff] %vm203, %v424
  %429 = vst.msk [vmem:[%s5 + $0x18] sm:$0xff] %vm203, %v425
  // Predicated region
  $region22: #{generator_forward.16} parent=0 // pred_check
    _
  $region23: #{generator_forward.16} parent=0 // pred_check_branch
    %431 = sbr.rel (0) target = $region25
  $region24: #{generator_forward.16} parent=0 // pred_region
    _
  $region25: #{generator_forward.16} parent=0 // pred_fallthru
    _
  // Predicated region
  $region26: #{generator_forward.16} parent=0 // pred_check
    _
  $region27: #{generator_forward.16} parent=0 // pred_check_branch
    %433 = sbr.rel (0) target = $region29
  $region28: #{generator_forward.16} parent=0 // pred_region
    _
  $region29: #{generator_forward.16} parent=0 // pred_fallthru
    _

// kernel: generator_forward.17
$region0: #{generator_forward.17}
  #allocation0 [shape = 'u32[]', space=smem, size = 0x4, offset = 0x4, fixed_abs, tag = 'smem constant byte address 0x4 - core index']
  #allocation1 [shape = 'u32[72,128]{1,0:T(1,128)}', space=vmem, size = 0x9000, scoped, tag = 'internal scratch']
  %s0 = inlined_call_operand.vmem [shape: bf16[288,32], index: 0, kind: input, shape index: {}]
  %s1 = inlined_call_operand.vmem [shape: bf16[32,288], index: 1, kind: input, shape index: {}]
  %s2 = inlined_call_operand.vmem [shape: f32[32,1], index: 2, kind: input, shape index: {}]
  %s3 = inlined_call_operand.vmem [shape: f32[32,1], index: 3, kind: input, shape index: {}]
  %s4 = inlined_call_operand.vmem [shape: f32[32,32], index: 4, kind: output, shape index: {}]
  %s5 = sld [smem:[#allocation0]]
  $region26: #{generator_forward.17} parent=0
    _
  %s7 = ssub.s32 1, %s5
  %s8 = scalar_select 0, %s7, %s5
  // Predicated region
  $region2: #{generator_forward.17} parent=0 // pred_check
    _
  $region3: #{generator_forward.17} parent=0 // pred_check_branch
    %10 = sbr.rel (0) target = $region5
  $region4: #{generator_forward.17} parent=0 // pred_region
    _
  $region5: #{generator_forward.17} parent=0 // pred_fallthru
    _
  // Predicated region
  $region6: #{generator_forward.17} parent=0 // pred_check
    _
  $region7: #{generator_forward.17} parent=0 // pred_check_branch
    %12 = sbr.rel (0) target = $region9
  $region8: #{generator_forward.17} parent=0 // pred_region
    _
  $region9: #{generator_forward.17} parent=0 // pred_fallthru
    _
  // Predicated region
  $region10: #{generator_forward.17} parent=0 // pred_check
    _
  $region11: #{generator_forward.17} parent=0 // pred_check_branch
    %14 = sbr.rel (0) target = $region13
  $region12: #{generator_forward.17} parent=0 // pred_region
    _
  $region13: #{generator_forward.17} parent=0 // pred_fallthru
    _
  // Predicated region
  $region14: #{generator_forward.17} parent=0 // pred_check
    _
  $region15: #{generator_forward.17} parent=0 // pred_check_branch
    %16 = sbr.rel (0) target = $region17
  $region16: #{generator_forward.17} parent=0 // pred_region
    _
  $region17: #{generator_forward.17} parent=0 // pred_fallthru
    _
  %v18 = vld [vmem:[%s1] sm:$0xff]
  %v19 = vld [vmem:[%s1 + $0x8] sm:$0xf]
  %v20 = vld [vmem:[%s1 + $0xc] sm:$0xff]
  %v21 = vld [vmem:[%s1 + $0x14] sm:$0xf]
  %v22 = vld [vmem:[%s1 + $0x18] sm:$0xff]
  %v23 = vld [vmem:[%s1 + $0x20] sm:$0xf]
  %v24 = vld [vmem:[%s1 + $0x24] sm:$0xff]
  %v25 = vld [vmem:[%s1 + $0x2c] sm:$0xf]
  %v26 = vld [vmem:[%s0] sm:$0xf]
  %v27 = vld [vmem:[%s0 + $0x4] sm:$0xf]
  %v28 = vld [vmem:[%s0 + $0x8] sm:$0xf]
  %v29 = vld [vmem:[%s0 + $0xc] sm:$0xf]
  %v30 = vld [vmem:[%s0 + $0x10] sm:$0xf]
  %v31 = vld [vmem:[%s0 + $0x14] sm:$0xf]
  %v32 = vld [vmem:[%s0 + $0x18] sm:$0xf]
  %v33 = vld [vmem:[%s0 + $0x1c] sm:$0xf]
  %v34 = vld [vmem:[%s0 + $0x20] sm:$0xf]
  %v35 = vld [vmem:[%s0 + $0x24] sm:$0xf]
  %v36 = vld [vmem:[%s0 + $0x28] sm:$0xf]
  %v37 = vld [vmem:[%s0 + $0x2c] sm:$0xf]
  %v38 = vld [vmem:[%s0 + $0x30] sm:$0xf]
  %v39 = vld [vmem:[%s0 + $0x34] sm:$0xf]
  %v40 = vld [vmem:[%s0 + $0x38] sm:$0xf]
  %v41 = vld [vmem:[%s0 + $0x3c] sm:$0xf]
  %v42 = vld [vmem:[%s0 + $0x40] sm:$0xf]
  %v43 = vld [vmem:[%s0 + $0x44] sm:$0xf]
  %v44 = vld [vmem:[%s0 + $0x48] sm:$0xf]
  %v45 = vld [vmem:[%s0 + $0x4c] sm:$0xf]
  %v46 = vld [vmem:[%s0 + $0x50] sm:$0xf]
  %v47 = vld [vmem:[%s0 + $0x54] sm:$0xf]
  %v48 = vld [vmem:[%s0 + $0x58] sm:$0xf]
  %v49 = vld [vmem:[%s0 + $0x5c] sm:$0xf]
  %v50 = vld [vmem:[%s0 + $0x60] sm:$0xf]
  %v51 = vld [vmem:[%s0 + $0x64] sm:$0xf]
  %v52 = vld [vmem:[%s0 + $0x68] sm:$0xf]
  %v53 = vld [vmem:[%s0 + $0x6c] sm:$0xf]
  %v54 = vld [vmem:[%s0 + $0x70] sm:$0xf]
  %v55 = vld [vmem:[%s0 + $0x74] sm:$0xf]
  %v56 = vld [vmem:[%s0 + $0x78] sm:$0xf]
  %v57 = vld [vmem:[%s0 + $0x7c] sm:$0xf]
  %v58 = vld [vmem:[%s0 + $0x80] sm:$0xf]
  %v59 = vld [vmem:[%s0 + $0x84] sm:$0xf]
  %v60 = vld [vmem:[%s0 + $0x88] sm:$0xf]
  %v61 = vld [vmem:[%s0 + $0x8c] sm:$0xf]
  %v70 = vunpack.c.l.b16 %v18
  %v71 = vunpack.c.h.b16 %v18
  %v72 = vunpack.c.l.b16 %v19
  %v73 = vunpack.c.l.b16 %v20
  %v74 = vunpack.c.h.b16 %v20
  %v75 = vunpack.c.l.b16 %v21
  %v76 = vunpack.c.l.b16 %v22
  %v77 = vunpack.c.h.b16 %v22
  %v78 = vunpack.c.l.b16 %v23
  %v79 = vunpack.c.l.b16 %v24
  %v80 = vunpack.c.h.b16 %v24
  %v81 = vunpack.c.l.b16 %v25
  %v82 = vpack.c.b16 %v73, %v70
  %v83 = vpack.c.b16 %v74, %v71
  %v84 = vpack.c.b16 %v75, %v72
  %v85 = vpack.c.b16 %v79, %v76
  %v86 = vpack.c.b16 %v80, %v77
  %v87 = vpack.c.b16 %v81, %v78
  %v128 = vunpack.c.l.b16 %v26
  %v129 = vunpack.c.l.b16 %v27
  %v130 = vunpack.c.l.b16 %v28
  %v131 = vunpack.c.l.b16 %v29
  %v132 = vunpack.c.l.b16 %v30
  %v133 = vunpack.c.l.b16 %v31
  %v134 = vunpack.c.l.b16 %v32
  %v135 = vunpack.c.l.b16 %v33
  %v136 = vunpack.c.l.b16 %v34
  %v137 = vunpack.c.l.b16 %v35
  %v138 = vunpack.c.l.b16 %v36
  %v139 = vunpack.c.l.b16 %v37
  %v140 = vunpack.c.l.b16 %v38
  %v141 = vunpack.c.l.b16 %v39
  %v142 = vunpack.c.l.b16 %v40
  %v143 = vunpack.c.l.b16 %v41
  %v144 = vunpack.c.l.b16 %v42
  %v145 = vunpack.c.l.b16 %v43
  %v146 = vunpack.c.l.b16 %v44
  %v147 = vunpack.c.l.b16 %v45
  %v148 = vunpack.c.l.b16 %v46
  %v149 = vunpack.c.l.b16 %v47
  %v150 = vunpack.c.l.b16 %v48
  %v151 = vunpack.c.l.b16 %v49
  %v152 = vunpack.c.l.b16 %v50
  %v153 = vunpack.c.l.b16 %v51
  %v154 = vunpack.c.l.b16 %v52
  %v155 = vunpack.c.l.b16 %v53
  %v156 = vunpack.c.l.b16 %v54
  %v157 = vunpack.c.l.b16 %v55
  %v158 = vunpack.c.l.b16 %v56
  %v159 = vunpack.c.l.b16 %v57
  %v160 = vunpack.c.l.b16 %v58
  %v161 = vunpack.c.l.b16 %v59
  %v162 = vunpack.c.l.b16 %v60
  %v163 = vunpack.c.l.b16 %v61
  %v164 = vpack.c.b16 %v129, %v128
  %v165 = vpack.c.b16 %v131, %v130
  %v166 = vpack.c.b16 %v133, %v132
  %v167 = vpack.c.b16 %v135, %v134
  %v168 = vpack.c.b16 %v137, %v136
  %v169 = vpack.c.b16 %v139, %v138
  %v170 = vpack.c.b16 %v141, %v140
  %v171 = vpack.c.b16 %v143, %v142
  %v172 = vpack.c.b16 %v145, %v144
  %v173 = vpack.c.b16 %v147, %v146
  %v174 = vpack.c.b16 %v149, %v148
  %v175 = vpack.c.b16 %v151, %v150
  %v176 = vpack.c.b16 %v153, %v152
  %v177 = vpack.c.b16 %v155, %v154
  %v178 = vpack.c.b16 %v157, %v156
  %v179 = vpack.c.b16 %v159, %v158
  %v180 = vpack.c.b16 %v161, %v160
  %v181 = vpack.c.b16 %v163, %v162
  %vm200 = vcmask 261120
  %v202 = vsel %vm200, %v84, 0
  %v205 = vsel %vm200, %v87, 0
  %207 = vmatpush.bf16.msra.mxu0 %v171
  %208 = vmatpush.bf16.msra.mxu0 %v170
  %209 = vmatpush.bf16.msra.mxu0 %v169
  %210 = vmatpush.bf16.msra.mxu0 %v168
  %211 = vmatpush.bf16.msra.mxu0 %v167
  %212 = vmatpush.bf16.msra.mxu0 %v166
  %213 = vmatpush.bf16.msra.mxu0 %v165
  %214 = vmatpush.bf16.msra.mxu0 %v164
  %215 = vmatmul.bf16.gmra.mxu0 %v82
  %v216 = vpop.f32.mrf.mxu0
  %v217 = vadd.f32 0.0, %v216
  %v218 = vpop.f32.mrf.mxu0
  %v219 = vadd.f32 0.0, %v218
  %220 = vmatmul.bf16.gmra.mxu0 %v85
  %v221 = vpop.f32.mrf.mxu0
  %v222 = vadd.f32 0.0, %v221
  %v223 = vpop.f32.mrf.mxu0
  %v224 = vadd.f32 0.0, %v223
  %225 = vdwg.mxu0
  %226 = vmatpush.bf16.msra.mxu0 %v179
  %227 = vmatpush.bf16.msra.mxu0 %v178
  %228 = vmatpush.bf16.msra.mxu0 %v177
  %229 = vmatpush.bf16.msra.mxu0 %v176
  %230 = vmatpush.bf16.msra.mxu0 %v175
  %231 = vmatpush.bf16.msra.mxu0 %v174
  %232 = vmatpush.bf16.msra.mxu0 %v173
  %233 = vmatpush.bf16.msra.mxu0 %v172
  %234 = vmatmul.bf16.gmra.mxu0 %v83
  %v235 = vpop.f32.mrf.mxu0
  %v236 = vadd.f32 %v217, %v235
  %v237 = vpop.f32.mrf.mxu0
  %v238 = vadd.f32 %v219, %v237
  %239 = vmatmul.bf16.gmra.mxu0 %v86
  %v240 = vpop.f32.mrf.mxu0
  %v241 = vadd.f32 %v222, %v240
  %v242 = vpop.f32.mrf.mxu0
  %v243 = vadd.f32 %v224, %v242
  %244 = vdwg.mxu0
  %245 = vmatpush.bf16.msra.mxu0 0
  %246 = vmatpush.bf16.msra.mxu0 0
  %247 = vmatpush.bf16.msra.mxu0 0
  %248 = vmatpush.bf16.msra.mxu0 0
  %249 = vmatpush.bf16.msra.mxu0 0
  %250 = vmatpush.bf16.msra.mxu0 0
  %251 = vmatpush.bf16.msra.mxu0 %v181
  %252 = vmatpush.bf16.msra.mxu0 %v180
  %253 = vmatmul.bf16.gmra.mxu0 %v202
  %v254 = vpop.f32.mrf.mxu0
  %v255 = vadd.f32 %v236, %v254
  %v256 = vpop.f32.mrf.mxu0
  %v257 = vadd.f32 %v238, %v256
  %258 = vmatmul.bf16.gmra.mxu0 %v205
  %v259 = vpop.f32.mrf.mxu0
  %v260 = vadd.f32 %v241, %v259
  %v261 = vpop.f32.mrf.mxu0
  %v262 = vadd.f32 %v243, %v261
  %263 = vdwg.mxu0
  %v264 = vsel %vm200, %v255, 0.0
  %265 = vadd.xlane.f32.xlu0 %v264
  %v266 = vpop.xlane.xlu0 %265
  %v267 = vsel %vm200, %v257, 0.0
  %268 = vadd.xlane.f32.xlu0 %v267
  %v269 = vpop.xlane.xlu0 %268
  %v270 = vsel %vm200, %v260, 0.0
  %271 = vadd.xlane.f32.xlu0 %v270
  %v272 = vpop.xlane.xlu0 %271
  %v273 = vsel %vm200, %v262, 0.0
  %274 = vadd.xlane.f32.xlu0 %v273
  %v275 = vpop.xlane.xlu0 %274
  %v276 = vrcp.pop 32.0
  %v277 = vmul.f32 32.0, %v276
  %v278 = vsub.f32 1.0, %v277
  %v279 = vmul.f32 %v276, %v278
  %v280 = vadd.f32 %v276, %v279
  %vm281 = vweird.f32 %v276
  %v282 = vsel %vm281, %v276, %v280
  %v283 = vmul.f32 %v266, %v282
  %v284 = vmul.f32 %v269, %v282
  %v285 = vmul.f32 %v272, %v282
  %v286 = vmul.f32 %v275, %v282
  %v287 = vsub.f32 %v255, %v283
  %v288 = vsub.f32 %v257, %v284
  %v289 = vsub.f32 %v260, %v285
  %v290 = vsub.f32 %v262, %v286
  %v291 = vmul.f32 %v287, %v287
  %v292 = vmul.f32 %v288, %v288
  %v293 = vmul.f32 %v289, %v289
  %v294 = vmul.f32 %v290, %v290
  %v295 = vsel %vm200, %v291, 0.0
  %296 = vadd.xlane.f32.xlu0 %v295
  %v297 = vpop.xlane.xlu0 %296
  %v298 = vsel %vm200, %v292, 0.0
  %299 = vadd.xlane.f32.xlu0 %v298
  %v300 = vpop.xlane.xlu0 %299
  %v301 = vsel %vm200, %v293, 0.0
  %302 = vadd.xlane.f32.xlu0 %v301
  %v303 = vpop.xlane.xlu0 %302
  %v304 = vsel %vm200, %v294, 0.0
  %305 = vadd.xlane.f32.xlu0 %v304
  %v306 = vpop.xlane.xlu0 %305
  %v307 = vmul.f32 %v297, %v282
  %v308 = vmul.f32 %v300, %v282
  %v309 = vmul.f32 %v303, %v282
  %v310 = vmul.f32 %v306, %v282
  %v311 = vadd.f32 %v307, 1e-05
  %v312 = vadd.f32 %v308, 1e-05
  %v313 = vadd.f32 %v309, 1e-05
  %v314 = vadd.f32 %v310, 1e-05
  %v315 = vrsqrt.pop %v311
  %v316 = vmul.f32 %v315, %v311
  %v317 = vmul.f32 %v316, %v315
  %v318 = vmul.f32 0.5, %v317
  %v319 = vsub.f32 1.5, %v318
  %v320 = vmul.f32 %v315, %v319
  %vm321 = vweird.f32 %v311
  %vm322 = vweird.f32 %v315
  %vm323 = vmor %vm321, %vm322
  %v324 = vsel %vm323, %v315, %v320
  %v325 = vrsqrt.pop %v312
  %v326 = vmul.f32 %v325, %v312
  %v327 = vmul.f32 %v326, %v325
  %v328 = vmul.f32 0.5, %v327
  %v329 = vsub.f32 1.5, %v328
  %v330 = vmul.f32 %v325, %v329
  %vm331 = vweird.f32 %v312
  %vm332 = vweird.f32 %v325
  %vm333 = vmor %vm331, %vm332
  %v334 = vsel %vm333, %v325, %v330
  %v335 = vrsqrt.pop %v313
  %v336 = vmul.f32 %v335, %v313
  %v337 = vmul.f32 %v336, %v335
  %v338 = vmul.f32 0.5, %v337
  %v339 = vsub.f32 1.5, %v338
  %v340 = vmul.f32 %v335, %v339
  %vm341 = vweird.f32 %v313
  %vm342 = vweird.f32 %v335
  %vm343 = vmor %vm341, %vm342
  %v344 = vsel %vm343, %v335, %v340
  %v345 = vrsqrt.pop %v314
  %v346 = vmul.f32 %v345, %v314
  %v347 = vmul.f32 %v346, %v345
  %v348 = vmul.f32 0.5, %v347
  %v349 = vsub.f32 1.5, %v348
  %v350 = vmul.f32 %v345, %v349
  %vm351 = vweird.f32 %v314
  %vm352 = vweird.f32 %v345
  %vm353 = vmor %vm351, %vm352
  %v354 = vsel %vm353, %v345, %v350
  %v355 = vmul.f32 %v287, %v324
  %v356 = vmul.f32 %v288, %v334
  %v357 = vmul.f32 %v289, %v344
  %v358 = vmul.f32 %v290, %v354
  %v359 = vld [vmem:[%s2] sm:$0xff]
  %v360 = vld [vmem:[%s2 + $0x8] sm:$0xff]
  %v361 = vld [vmem:[%s2 + $0x10] sm:$0xff]
  %v362 = vld [vmem:[%s2 + $0x18] sm:$0xff]
  %364 = vset.pattern.permute.xlu0 0
  %365 = vperm.xlu0 %364, %v359
  %v366 = vpop.permute.xlu0 %365
  %369 = vset.pattern.permute.xlu0 0
  %370 = vperm.xlu0 %369, %v360
  %v371 = vpop.permute.xlu0 %370
  %374 = vset.pattern.permute.xlu0 0
  %375 = vperm.xlu0 %374, %v361
  %v376 = vpop.permute.xlu0 %375
  %379 = vset.pattern.permute.xlu0 0
  %380 = vperm.xlu0 %379, %v362
  %v381 = vpop.permute.xlu0 %380
  %v383 = vmul.f32 %v355, %v366
  %v384 = vmul.f32 %v356, %v371
  %v385 = vmul.f32 %v357, %v376
  %v386 = vmul.f32 %v358, %v381
  %v387 = vld [vmem:[%s3] sm:$0xff]
  %v388 = vld [vmem:[%s3 + $0x8] sm:$0xff]
  %v389 = vld [vmem:[%s3 + $0x10] sm:$0xff]
  %v390 = vld [vmem:[%s3 + $0x18] sm:$0xff]
  %392 = vset.pattern.permute.xlu0 0
  %393 = vperm.xlu0 %392, %v387
  %v394 = vpop.permute.xlu0 %393
  %397 = vset.pattern.permute.xlu0 0
  %398 = vperm.xlu0 %397, %v388
  %v399 = vpop.permute.xlu0 %398
  %402 = vset.pattern.permute.xlu0 0
  %403 = vperm.xlu0 %402, %v389
  %v404 = vpop.permute.xlu0 %403
  %407 = vset.pattern.permute.xlu0 0
  %408 = vperm.xlu0 %407, %v390
  %v409 = vpop.permute.xlu0 %408
  %v411 = vadd.f32 %v383, %v394
  %v412 = vadd.f32 %v384, %v399
  %v413 = vadd.f32 %v385, %v404
  %v414 = vadd.f32 %v386, %v409
  %v415 = vmax.f32 %v411, 0.0
  %v416 = vmax.f32 %v412, 0.0
  %v417 = vmax.f32 %v413, 0.0
  %v418 = vmax.f32 %v414, 0.0
  %419 = vst.msk [vmem:[%s4] sm:$0xff] %vm200, %v415
  %420 = vst.msk [vmem:[%s4 + $0x8] sm:$0xff] %vm200, %v416
  %421 = vst.msk [vmem:[%s4 + $0x10] sm:$0xff] %vm200, %v417
  %422 = vst.msk [vmem:[%s4 + $0x18] sm:$0xff] %vm200, %v418
  // Predicated region
  $region18: #{generator_forward.17} parent=0 // pred_check
    _
  $region19: #{generator_forward.17} parent=0 // pred_check_branch
    %424 = sbr.rel (0) target = $region21
  $region20: #{generator_forward.17} parent=0 // pred_region
    _
  $region21: #{generator_forward.17} parent=0 // pred_fallthru
    _
  // Predicated region
  $region22: #{generator_forward.17} parent=0 // pred_check
    _
  $region23: #{generator_forward.17} parent=0 // pred_check_branch
    %426 = sbr.rel (0) target = $region25
  $region24: #{generator_forward.17} parent=0 // pred_region
    _
  $region25: #{generator_forward.17} parent=0 // pred_fallthru
    _

// kernel: generator_forward.19
$region0: #{generator_forward.19}
  #allocation0 [shape = 'u32[]', space=smem, size = 0x4, offset = 0x4, fixed_abs, tag = 'smem constant byte address 0x4 - core index']
  #allocation1 [shape = 'u32[72,128]{1,0:T(1,128)}', space=vmem, size = 0x9000, scoped, tag = 'internal scratch']
  %s0 = inlined_call_operand.vmem [shape: bf16[288,32], index: 0, kind: input, shape index: {}]
  %s1 = inlined_call_operand.vmem [shape: bf16[64,288], index: 1, kind: input, shape index: {}]
  %s2 = inlined_call_operand.vmem [shape: f32[64,1], index: 2, kind: input, shape index: {}]
  %s3 = inlined_call_operand.vmem [shape: f32[64,1], index: 3, kind: input, shape index: {}]
  %s4 = inlined_call_operand.vmem [shape: f32[64,64], index: 4, kind: input, shape index: {}]
  %s5 = inlined_call_operand.vmem [shape: f32[64,32], index: 5, kind: output, shape index: {}]
  %s6 = sld [smem:[#allocation0]]
  $region30: #{generator_forward.19} parent=0
    _
  %s8 = ssub.s32 1, %s6
  %s9 = scalar_select 0, %s8, %s6
  // Predicated region
  $region2: #{generator_forward.19} parent=0 // pred_check
    _
  $region3: #{generator_forward.19} parent=0 // pred_check_branch
    %11 = sbr.rel (0) target = $region5
  $region4: #{generator_forward.19} parent=0 // pred_region
    _
  $region5: #{generator_forward.19} parent=0 // pred_fallthru
    _
  // Predicated region
  $region6: #{generator_forward.19} parent=0 // pred_check
    _
  $region7: #{generator_forward.19} parent=0 // pred_check_branch
    %13 = sbr.rel (0) target = $region9
  $region8: #{generator_forward.19} parent=0 // pred_region
    _
  $region9: #{generator_forward.19} parent=0 // pred_fallthru
    _
  // Predicated region
  $region10: #{generator_forward.19} parent=0 // pred_check
    _
  $region11: #{generator_forward.19} parent=0 // pred_check_branch
    %15 = sbr.rel (0) target = $region13
  $region12: #{generator_forward.19} parent=0 // pred_region
    _
  $region13: #{generator_forward.19} parent=0 // pred_fallthru
    _
  // Predicated region
  $region14: #{generator_forward.19} parent=0 // pred_check
    _
  $region15: #{generator_forward.19} parent=0 // pred_check_branch
    %17 = sbr.rel (0) target = $region17
  $region16: #{generator_forward.19} parent=0 // pred_region
    _
  $region17: #{generator_forward.19} parent=0 // pred_fallthru
    _
  // Predicated region
  $region18: #{generator_forward.19} parent=0 // pred_check
    _
  $region19: #{generator_forward.19} parent=0 // pred_check_branch
    %19 = sbr.rel (0) target = $region21
  $region20: #{generator_forward.19} parent=0 // pred_region
    _
  $region21: #{generator_forward.19} parent=0 // pred_fallthru
    _
  %v21 = vld [vmem:[%s1] sm:$0xff]
  %v22 = vld [vmem:[%s1 + $0x8] sm:$0xf]
  %v23 = vld [vmem:[%s1 + $0xc] sm:$0xff]
  %v24 = vld [vmem:[%s1 + $0x14] sm:$0xf]
  %v25 = vld [vmem:[%s1 + $0x18] sm:$0xff]
  %v26 = vld [vmem:[%s1 + $0x20] sm:$0xf]
  %v27 = vld [vmem:[%s1 + $0x24] sm:$0xff]
  %v28 = vld [vmem:[%s1 + $0x2c] sm:$0xf]
  %v29 = vld [vmem:[%s1 + $0x30] sm:$0xff]
  %v30 = vld [vmem:[%s1 + $0x38] sm:$0xf]
  %v31 = vld [vmem:[%s1 + $0x3c] sm:$0xff]
  %v32 = vld [vmem:[%s1 + $0x44] sm:$0xf]
  %v33 = vld [vmem:[%s1 + $0x48] sm:$0xff]
  %v34 = vld [vmem:[%s1 + $0x50] sm:$0xf]
  %v35 = vld [vmem:[%s1 + $0x54] sm:$0xff]
  %v36 = vld [vmem:[%s1 + $0x5c] sm:$0xf]
  %v37 = vld [vmem:[%s0] sm:$0xf]
  %v38 = vld [vmem:[%s0 + $0x4] sm:$0xf]
  %v39 = vld [vmem:[%s0 + $0x8] sm:$0xf]
  %v40 = vld [vmem:[%s0 + $0xc] sm:$0xf]
  %v41 = vld [vmem:[%s0 + $0x10] sm:$0xf]
  %v42 = vld [vmem:[%s0 + $0x14] sm:$0xf]
  %v43 = vld [vmem:[%s0 + $0x18] sm:$0xf]
  %v44 = vld [vmem:[%s0 + $0x1c] sm:$0xf]
  %v45 = vld [vmem:[%s0 + $0x20] sm:$0xf]
  %v46 = vld [vmem:[%s0 + $0x24] sm:$0xf]
  %v47 = vld [vmem:[%s0 + $0x28] sm:$0xf]
  %v48 = vld [vmem:[%s0 + $0x2c] sm:$0xf]
  %v49 = vld [vmem:[%s0 + $0x30] sm:$0xf]
  %v50 = vld [vmem:[%s0 + $0x34] sm:$0xf]
  %v51 = vld [vmem:[%s0 + $0x38] sm:$0xf]
  %v52 = vld [vmem:[%s0 + $0x3c] sm:$0xf]
  %v53 = vld [vmem:[%s0 + $0x40] sm:$0xf]
  %v54 = vld [vmem:[%s0 + $0x44] sm:$0xf]
  %v55 = vld [vmem:[%s0 + $0x48] sm:$0xf]
  %v56 = vld [vmem:[%s0 + $0x4c] sm:$0xf]
  %v57 = vld [vmem:[%s0 + $0x50] sm:$0xf]
  %v58 = vld [vmem:[%s0 + $0x54] sm:$0xf]
  %v59 = vld [vmem:[%s0 + $0x58] sm:$0xf]
  %v60 = vld [vmem:[%s0 + $0x5c] sm:$0xf]
  %v61 = vld [vmem:[%s0 + $0x60] sm:$0xf]
  %v62 = vld [vmem:[%s0 + $0x64] sm:$0xf]
  %v63 = vld [vmem:[%s0 + $0x68] sm:$0xf]
  %v64 = vld [vmem:[%s0 + $0x6c] sm:$0xf]
  %v65 = vld [vmem:[%s0 + $0x70] sm:$0xf]
  %v66 = vld [vmem:[%s0 + $0x74] sm:$0xf]
  %v67 = vld [vmem:[%s0 + $0x78] sm:$0xf]
  %v68 = vld [vmem:[%s0 + $0x7c] sm:$0xf]
  %v69 = vld [vmem:[%s0 + $0x80] sm:$0xf]
  %v70 = vld [vmem:[%s0 + $0x84] sm:$0xf]
  %v71 = vld [vmem:[%s0 + $0x88] sm:$0xf]
  %v72 = vld [vmem:[%s0 + $0x8c] sm:$0xf]
  %v89 = vunpack.c.l.b16 %v21
  %v90 = vunpack.c.h.b16 %v21
  %v91 = vunpack.c.l.b16 %v22
  %v92 = vunpack.c.l.b16 %v23
  %v93 = vunpack.c.h.b16 %v23
  %v94 = vunpack.c.l.b16 %v24
  %v95 = vunpack.c.l.b16 %v25
  %v96 = vunpack.c.h.b16 %v25
  %v97 = vunpack.c.l.b16 %v26
  %v98 = vunpack.c.l.b16 %v27
  %v99 = vunpack.c.h.b16 %v27
  %v100 = vunpack.c.l.b16 %v28
  %v101 = vunpack.c.l.b16 %v29
  %v102 = vunpack.c.h.b16 %v29
  %v103 = vunpack.c.l.b16 %v30
  %v104 = vunpack.c.l.b16 %v31
  %v105 = vunpack.c.h.b16 %v31
  %v106 = vunpack.c.l.b16 %v32
  %v107 = vunpack.c.l.b16 %v33
  %v108 = vunpack.c.h.b16 %v33
  %v109 = vunpack.c.l.b16 %v34
  %v110 = vunpack.c.l.b16 %v35
  %v111 = vunpack.c.h.b16 %v35
  %v112 = vunpack.c.l.b16 %v36
  %v113 = vpack.c.b16 %v92, %v89
  %v114 = vpack.c.b16 %v93, %v90
  %v115 = vpack.c.b16 %v94, %v91
  %v116 = vpack.c.b16 %v98, %v95
  %v117 = vpack.c.b16 %v99, %v96
  %v118 = vpack.c.b16 %v100, %v97
  %v119 = vpack.c.b16 %v104, %v101
  %v120 = vpack.c.b16 %v105, %v102
  %v121 = vpack.c.b16 %v106, %v103
  %v122 = vpack.c.b16 %v110, %v107
  %v123 = vpack.c.b16 %v111, %v108
  %v124 = vpack.c.b16 %v112, %v109
  %v169 = vunpack.c.l.b16 %v37
  %v170 = vunpack.c.l.b16 %v38
  %v171 = vunpack.c.l.b16 %v39
  %v172 = vunpack.c.l.b16 %v40
  %v173 = vunpack.c.l.b16 %v41
  %v174 = vunpack.c.l.b16 %v42
  %v175 = vunpack.c.l.b16 %v43
  %v176 = vunpack.c.l.b16 %v44
  %v177 = vunpack.c.l.b16 %v45
  %v178 = vunpack.c.l.b16 %v46
  %v179 = vunpack.c.l.b16 %v47
  %v180 = vunpack.c.l.b16 %v48
  %v181 = vunpack.c.l.b16 %v49
  %v182 = vunpack.c.l.b16 %v50
  %v183 = vunpack.c.l.b16 %v51
  %v184 = vunpack.c.l.b16 %v52
  %v185 = vunpack.c.l.b16 %v53
  %v186 = vunpack.c.l.b16 %v54
  %v187 = vunpack.c.l.b16 %v55
  %v188 = vunpack.c.l.b16 %v56
  %v189 = vunpack.c.l.b16 %v57
  %v190 = vunpack.c.l.b16 %v58
  %v191 = vunpack.c.l.b16 %v59
  %v192 = vunpack.c.l.b16 %v60
  %v193 = vunpack.c.l.b16 %v61
  %v194 = vunpack.c.l.b16 %v62
  %v195 = vunpack.c.l.b16 %v63
  %v196 = vunpack.c.l.b16 %v64
  %v197 = vunpack.c.l.b16 %v65
  %v198 = vunpack.c.l.b16 %v66
  %v199 = vunpack.c.l.b16 %v67
  %v200 = vunpack.c.l.b16 %v68
  %v201 = vunpack.c.l.b16 %v69
  %v202 = vunpack.c.l.b16 %v70
  %v203 = vunpack.c.l.b16 %v71
  %v204 = vunpack.c.l.b16 %v72
  %v205 = vpack.c.b16 %v170, %v169
  %v206 = vpack.c.b16 %v172, %v171
  %v207 = vpack.c.b16 %v174, %v173
  %v208 = vpack.c.b16 %v176, %v175
  %v209 = vpack.c.b16 %v178, %v177
  %v210 = vpack.c.b16 %v180, %v179
  %v211 = vpack.c.b16 %v182, %v181
  %v212 = vpack.c.b16 %v184, %v183
  %v213 = vpack.c.b16 %v186, %v185
  %v214 = vpack.c.b16 %v188, %v187
  %v215 = vpack.c.b16 %v190, %v189
  %v216 = vpack.c.b16 %v192, %v191
  %v217 = vpack.c.b16 %v194, %v193
  %v218 = vpack.c.b16 %v196, %v195
  %v219 = vpack.c.b16 %v198, %v197
  %v220 = vpack.c.b16 %v200, %v199
  %v221 = vpack.c.b16 %v202, %v201
  %v222 = vpack.c.b16 %v204, %v203
  %vm241 = vcmask 261120
  %v243 = vsel %vm241, %v115, 0
  %v246 = vsel %vm241, %v118, 0
  %v249 = vsel %vm241, %v121, 0
  %v252 = vsel %vm241, %v124, 0
  %254 = vmatpush.bf16.msra.mxu0 %v212
  %255 = vmatpush.bf16.msra.mxu0 %v211
  %256 = vmatpush.bf16.msra.mxu0 %v210
  %257 = vmatpush.bf16.msra.mxu0 %v209
  %258 = vmatpush.bf16.msra.mxu0 %v208
  %259 = vmatpush.bf16.msra.mxu0 %v207
  %260 = vmatpush.bf16.msra.mxu0 %v206
  %261 = vmatpush.bf16.msra.mxu0 %v205
  %262 = vmatmul.bf16.gmra.mxu0 %v113
  %v263 = vpop.f32.mrf.mxu0
  %v264 = vadd.f32 0.0, %v263
  %v265 = vpop.f32.mrf.mxu0
  %v266 = vadd.f32 0.0, %v265
  %267 = vmatmul.bf16.gmra.mxu0 %v116
  %v268 = vpop.f32.mrf.mxu0
  %v269 = vadd.f32 0.0, %v268
  %v270 = vpop.f32.mrf.mxu0
  %v271 = vadd.f32 0.0, %v270
  %272 = vmatmul.bf16.gmra.mxu0 %v119
  %v273 = vpop.f32.mrf.mxu0
  %v274 = vadd.f32 0.0, %v273
  %v275 = vpop.f32.mrf.mxu0
  %v276 = vadd.f32 0.0, %v275
  %277 = vmatmul.bf16.gmra.mxu0 %v122
  %v278 = vpop.f32.mrf.mxu0
  %v279 = vadd.f32 0.0, %v278
  %v280 = vpop.f32.mrf.mxu0
  %v281 = vadd.f32 0.0, %v280
  %282 = vdwg.mxu0
  %283 = vmatpush.bf16.msra.mxu0 %v220
  %284 = vmatpush.bf16.msra.mxu0 %v219
  %285 = vmatpush.bf16.msra.mxu0 %v218
  %286 = vmatpush.bf16.msra.mxu0 %v217
  %287 = vmatpush.bf16.msra.mxu0 %v216
  %288 = vmatpush.bf16.msra.mxu0 %v215
  %289 = vmatpush.bf16.msra.mxu0 %v214
  %290 = vmatpush.bf16.msra.mxu0 %v213
  %291 = vmatmul.bf16.gmra.mxu0 %v114
  %v292 = vpop.f32.mrf.mxu0
  %v293 = vadd.f32 %v264, %v292
  %v294 = vpop.f32.mrf.mxu0
  %v295 = vadd.f32 %v266, %v294
  %296 = vmatmul.bf16.gmra.mxu0 %v117
  %v297 = vpop.f32.mrf.mxu0
  %v298 = vadd.f32 %v269, %v297
  %v299 = vpop.f32.mrf.mxu0
  %v300 = vadd.f32 %v271, %v299
  %301 = vmatmul.bf16.gmra.mxu0 %v120
  %v302 = vpop.f32.mrf.mxu0
  %v303 = vadd.f32 %v274, %v302
  %v304 = vpop.f32.mrf.mxu0
  %v305 = vadd.f32 %v276, %v304
  %306 = vmatmul.bf16.gmra.mxu0 %v123
  %v307 = vpop.f32.mrf.mxu0
  %v308 = vadd.f32 %v279, %v307
  %v309 = vpop.f32.mrf.mxu0
  %v310 = vadd.f32 %v281, %v309
  %311 = vdwg.mxu0
  %312 = vmatpush.bf16.msra.mxu0 0
  %313 = vmatpush.bf16.msra.mxu0 0
  %314 = vmatpush.bf16.msra.mxu0 0
  %315 = vmatpush.bf16.msra.mxu0 0
  %316 = vmatpush.bf16.msra.mxu0 0
  %317 = vmatpush.bf16.msra.mxu0 0
  %318 = vmatpush.bf16.msra.mxu0 %v222
  %319 = vmatpush.bf16.msra.mxu0 %v221
  %320 = vmatmul.bf16.gmra.mxu0 %v243
  %v321 = vpop.f32.mrf.mxu0
  %v322 = vadd.f32 %v293, %v321
  %v323 = vpop.f32.mrf.mxu0
  %v324 = vadd.f32 %v295, %v323
  %325 = vmatmul.bf16.gmra.mxu0 %v246
  %v326 = vpop.f32.mrf.mxu0
  %v327 = vadd.f32 %v298, %v326
  %v328 = vpop.f32.mrf.mxu0
  %v329 = vadd.f32 %v300, %v328
  %330 = vmatmul.bf16.gmra.mxu0 %v249
  %v331 = vpop.f32.mrf.mxu0
  %v332 = vadd.f32 %v303, %v331
  %v333 = vpop.f32.mrf.mxu0
  %v334 = vadd.f32 %v305, %v333
  %335 = vmatmul.bf16.gmra.mxu0 %v252
  %v336 = vpop.f32.mrf.mxu0
  %v337 = vadd.f32 %v308, %v336
  %v338 = vpop.f32.mrf.mxu0
  %v339 = vadd.f32 %v310, %v338
  %340 = vdwg.mxu0
  %v341 = vld [vmem:[%s4] sm:$0xff]
  %v342 = vld [vmem:[%s4 + $0x8] sm:$0xff]
  %v343 = vld [vmem:[%s4 + $0x10] sm:$0xff]
  %v344 = vld [vmem:[%s4 + $0x18] sm:$0xff]
  %v345 = vld [vmem:[%s4 + $0x20] sm:$0xff]
  %v346 = vld [vmem:[%s4 + $0x28] sm:$0xff]
  %v347 = vld [vmem:[%s4 + $0x30] sm:$0xff]
  %v348 = vld [vmem:[%s4 + $0x38] sm:$0xff]
  %vm349 = vcmask 523264
  %v351 = vsel %vm349, %v341, 0
  %v354 = vsel %vm349, %v342, 0
  %v357 = vsel %vm349, %v343, 0
  %v360 = vsel %vm349, %v344, 0
  %v363 = vsel %vm349, %v345, 0
  %v366 = vsel %vm349, %v346, 0
  %v369 = vsel %vm349, %v347, 0
  %v372 = vsel %vm349, %v348, 0
  %374 = vmatpush.msra.mxu0 0.0
  %375 = vmatpush.msra.mxu0 0.0
  %376 = vmatpush.msra.mxu0 0.0
  %377 = vmatpush.msra.mxu0 0.0
  %378 = vmatpush.msra.mxu0 0.0
  %379 = vmatpush.msra.mxu0 0.0
  %380 = vmatpush.msra.mxu0 0.0
  %381 = vmatpush.msra.mxu0 0.0
  %382 = vmatpush.msra.mxu0 %v339
  %383 = vmatpush.msra.mxu0 %v337
  %384 = vmatpush.msra.mxu0 %v334
  %385 = vmatpush.msra.mxu0 %v332
  %386 = vmatpush.msra.mxu0 %v329
  %387 = vmatpush.msra.mxu0 %v327
  %388 = vmatpush.msra.mxu0 %v324
  %389 = vmatpush.msra.mxu0 %v322
  %390 = vmatmul.f32.gmra.mxu0 %v351
  %v391 = vpop.f32.mrf.mxu0
  %v392 = vadd.f32 0.0, %v391
  %393 = vmatmul.f32.gmra.mxu0 %v354
  %v394 = vpop.f32.mrf.mxu0
  %v395 = vadd.f32 0.0, %v394
  %396 = vmatmul.f32.gmra.mxu0 %v357
  %v397 = vpop.f32.mrf.mxu0
  %v398 = vadd.f32 0.0, %v397
  %399 = vmatmul.f32.gmra.mxu0 %v360
  %v400 = vpop.f32.mrf.mxu0
  %v401 = vadd.f32 0.0, %v400
  %402 = vmatmul.f32.gmra.mxu0 %v363
  %v403 = vpop.f32.mrf.mxu0
  %v404 = vadd.f32 0.0, %v403
  %405 = vmatmul.f32.gmra.mxu0 %v366
  %v406 = vpop.f32.mrf.mxu0
  %v407 = vadd.f32 0.0, %v406
  %408 = vmatmul.f32.gmra.mxu0 %v369
  %v409 = vpop.f32.mrf.mxu0
  %v410 = vadd.f32 0.0, %v409
  %411 = vmatmul.f32.gmra.mxu0 %v372
  %v412 = vpop.f32.mrf.mxu0
  %v413 = vadd.f32 0.0, %v412
  %414 = vdwg.mxu0
  %v415 = vsel %vm241, %v392, 0.0
  %416 = vadd.xlane.f32.xlu0 %v415
  %v417 = vpop.xlane.xlu0 %416
  %v418 = vsel %vm241, %v395, 0.0
  %419 = vadd.xlane.f32.xlu0 %v418
  %v420 = vpop.xlane.xlu0 %419
  %v421 = vsel %vm241, %v398, 0.0
  %422 = vadd.xlane.f32.xlu0 %v421
  %v423 = vpop.xlane.xlu0 %422
  %v424 = vsel %vm241, %v401, 0.0
  %425 = vadd.xlane.f32.xlu0 %v424
  %v426 = vpop.xlane.xlu0 %425
  %v427 = vsel %vm241, %v404, 0.0
  %428 = vadd.xlane.f32.xlu0 %v427
  %v429 = vpop.xlane.xlu0 %428
  %v430 = vsel %vm241, %v407, 0.0
  %431 = vadd.xlane.f32.xlu0 %v430
  %v432 = vpop.xlane.xlu0 %431
  %v433 = vsel %vm241, %v410, 0.0
  %434 = vadd.xlane.f32.xlu0 %v433
  %v435 = vpop.xlane.xlu0 %434
  %v436 = vsel %vm241, %v413, 0.0
  %437 = vadd.xlane.f32.xlu0 %v436
  %v438 = vpop.xlane.xlu0 %437
  %v439 = vrcp.pop 32.0
  %v440 = vmul.f32 32.0, %v439
  %v441 = vsub.f32 1.0, %v440
  %v442 = vmul.f32 %v439, %v441
  %v443 = vadd.f32 %v439, %v442
  %vm444 = vweird.f32 %v439
  %v445 = vsel %vm444, %v439, %v443
  %v446 = vmul.f32 %v417, %v445
  %v447 = vmul.f32 %v420, %v445
  %v448 = vmul.f32 %v423, %v445
  %v449 = vmul.f32 %v426, %v445
  %v450 = vmul.f32 %v429, %v445
  %v451 = vmul.f32 %v432, %v445
  %v452 = vmul.f32 %v435, %v445
  %v453 = vmul.f32 %v438, %v445
  %v454 = vmul.f32 %v446, 0.25
  %v455 = vmul.f32 %v447, 0.25
  %v456 = vmul.f32 %v448, 0.25
  %v457 = vmul.f32 %v449, 0.25
  %v458 = vmul.f32 %v450, 0.25
  %v459 = vmul.f32 %v451, 0.25
  %v460 = vmul.f32 %v452, 0.25
  %v461 = vmul.f32 %v453, 0.25
  %v462 = vsub.f32 %v322, %v454
  %v463 = vsub.f32 %v324, %v455
  %v464 = vsub.f32 %v327, %v456
  %v465 = vsub.f32 %v329, %v457
  %v466 = vsub.f32 %v332, %v458
  %v467 = vsub.f32 %v334, %v459
  %v468 = vsub.f32 %v337, %v460
  %v469 = vsub.f32 %v339, %v461
  %v470 = vmul.f32 %v462, %v462
  %v471 = vmul.f32 %v463, %v463
  %v472 = vmul.f32 %v464, %v464
  %v473 = vmul.f32 %v465, %v465
  %v474 = vmul.f32 %v466, %v466
  %v475 = vmul.f32 %v467, %v467
  %v476 = vmul.f32 %v468, %v468
  %v477 = vmul.f32 %v469, %v469
  %478 = vmatpush.msra.mxu0 0.0
  %479 = vmatpush.msra.mxu0 0.0
  %480 = vmatpush.msra.mxu0 0.0
  %481 = vmatpush.msra.mxu0 0.0
  %482 = vmatpush.msra.mxu0 0.0
  %483 = vmatpush.msra.mxu0 0.0
  %484 = vmatpush.msra.mxu0 0.0
  %485 = vmatpush.msra.mxu0 0.0
  %486 = vmatpush.msra.mxu0 %v477
  %487 = vmatpush.msra.mxu0 %v476
  %488 = vmatpush.msra.mxu0 %v475
  %489 = vmatpush.msra.mxu0 %v474
  %490 = vmatpush.msra.mxu0 %v473
  %491 = vmatpush.msra.mxu0 %v472
  %492 = vmatpush.msra.mxu0 %v471
  %493 = vmatpush.msra.mxu0 %v470
  %494 = vmatmul.f32.gmra.mxu0 %v351
  %v495 = vpop.f32.mrf.mxu0
  %v496 = vadd.f32 0.0, %v495
  %497 = vmatmul.f32.gmra.mxu0 %v354
  %v498 = vpop.f32.mrf.mxu0
  %v499 = vadd.f32 0.0, %v498
  %500 = vmatmul.f32.gmra.mxu0 %v357
  %v501 = vpop.f32.mrf.mxu0
  %v502 = vadd.f32 0.0, %v501
  %503 = vmatmul.f32.gmra.mxu0 %v360
  %v504 = vpop.f32.mrf.mxu0
  %v505 = vadd.f32 0.0, %v504
  %506 = vmatmul.f32.gmra.mxu0 %v363
  %v507 = vpop.f32.mrf.mxu0
  %v508 = vadd.f32 0.0, %v507
  %509 = vmatmul.f32.gmra.mxu0 %v366
  %v510 = vpop.f32.mrf.mxu0
  %v511 = vadd.f32 0.0, %v510
  %512 = vmatmul.f32.gmra.mxu0 %v369
  %v513 = vpop.f32.mrf.mxu0
  %v514 = vadd.f32 0.0, %v513
  %515 = vmatmul.f32.gmra.mxu0 %v372
  %v516 = vpop.f32.mrf.mxu0
  %v517 = vadd.f32 0.0, %v516
  %518 = vdwg.mxu0
  %v519 = vsel %vm241, %v496, 0.0
  %520 = vadd.xlane.f32.xlu0 %v519
  %v521 = vpop.xlane.xlu0 %520
  %v522 = vsel %vm241, %v499, 0.0
  %523 = vadd.xlane.f32.xlu0 %v522
  %v524 = vpop.xlane.xlu0 %523
  %v525 = vsel %vm241, %v502, 0.0
  %526 = vadd.xlane.f32.xlu0 %v525
  %v527 = vpop.xlane.xlu0 %526
  %v528 = vsel %vm241, %v505, 0.0
  %529 = vadd.xlane.f32.xlu0 %v528
  %v530 = vpop.xlane.xlu0 %529
  %v531 = vsel %vm241, %v508, 0.0
  %532 = vadd.xlane.f32.xlu0 %v531
  %v533 = vpop.xlane.xlu0 %532
  %v534 = vsel %vm241, %v511, 0.0
  %535 = vadd.xlane.f32.xlu0 %v534
  %v536 = vpop.xlane.xlu0 %535
  %v537 = vsel %vm241, %v514, 0.0
  %538 = vadd.xlane.f32.xlu0 %v537
  %v539 = vpop.xlane.xlu0 %538
  %v540 = vsel %vm241, %v517, 0.0
  %541 = vadd.xlane.f32.xlu0 %v540
  %v542 = vpop.xlane.xlu0 %541
  %v543 = vmul.f32 %v521, %v445
  %v544 = vmul.f32 %v524, %v445
  %v545 = vmul.f32 %v527, %v445
  %v546 = vmul.f32 %v530, %v445
  %v547 = vmul.f32 %v533, %v445
  %v548 = vmul.f32 %v536, %v445
  %v549 = vmul.f32 %v539, %v445
  %v550 = vmul.f32 %v542, %v445
  %v551 = vmul.f32 %v543, 0.25
  %v552 = vmul.f32 %v544, 0.25
  %v553 = vmul.f32 %v545, 0.25
  %v554 = vmul.f32 %v546, 0.25
  %v555 = vmul.f32 %v547, 0.25
  %v556 = vmul.f32 %v548, 0.25
  %v557 = vmul.f32 %v549, 0.25
  %v558 = vmul.f32 %v550, 0.25
  %v559 = vadd.f32 %v551, 1e-05
  %v560 = vadd.f32 %v552, 1e-05
  %v561 = vadd.f32 %v553, 1e-05
  %v562 = vadd.f32 %v554, 1e-05
  %v563 = vadd.f32 %v555, 1e-05
  %v564 = vadd.f32 %v556, 1e-05
  %v565 = vadd.f32 %v557, 1e-05
  %v566 = vadd.f32 %v558, 1e-05
  %v567 = vrsqrt.pop %v559
  %v568 = vmul.f32 %v567, %v559
  %v569 = vmul.f32 %v568, %v567
  %v570 = vmul.f32 0.5, %v569
  %v571 = vsub.f32 1.5, %v570
  %v572 = vmul.f32 %v567, %v571
  %vm573 = vweird.f32 %v559
  %vm574 = vweird.f32 %v567
  %vm575 = vmor %vm573, %vm574
  %v576 = vsel %vm575, %v567, %v572
  %v577 = vrsqrt.pop %v560
  %v578 = vmul.f32 %v577, %v560
  %v579 = vmul.f32 %v578, %v577
  %v580 = vmul.f32 0.5, %v579
  %v581 = vsub.f32 1.5, %v580
  %v582 = vmul.f32 %v577, %v581
  %vm583 = vweird.f32 %v560
  %vm584 = vweird.f32 %v577
  %vm585 = vmor %vm583, %vm584
  %v586 = vsel %vm585, %v577, %v582
  %v587 = vrsqrt.pop %v561
  %v588 = vmul.f32 %v587, %v561
  %v589 = vmul.f32 %v588, %v587
  %v590 = vmul.f32 0.5, %v589
  %v591 = vsub.f32 1.5, %v590
  %v592 = vmul.f32 %v587, %v591
  %vm593 = vweird.f32 %v561
  %vm594 = vweird.f32 %v587
  %vm595 = vmor %vm593, %vm594
  %v596 = vsel %vm595, %v587, %v592
  %v597 = vrsqrt.pop %v562
  %v598 = vmul.f32 %v597, %v562
  %v599 = vmul.f32 %v598, %v597
  %v600 = vmul.f32 0.5, %v599
  %v601 = vsub.f32 1.5, %v600
  %v602 = vmul.f32 %v597, %v601
  %vm603 = vweird.f32 %v562
  %vm604 = vweird.f32 %v597
  %vm605 = vmor %vm603, %vm604
  %v606 = vsel %vm605, %v597, %v602
  %v607 = vrsqrt.pop %v563
  %v608 = vmul.f32 %v607, %v563
  %v609 = vmul.f32 %v608, %v607
  %v610 = vmul.f32 0.5, %v609
  %v611 = vsub.f32 1.5, %v610
  %v612 = vmul.f32 %v607, %v611
  %vm613 = vweird.f32 %v563
  %vm614 = vweird.f32 %v607
  %vm615 = vmor %vm613, %vm614
  %v616 = vsel %vm615, %v607, %v612
  %v617 = vrsqrt.pop %v564
  %v618 = vmul.f32 %v617, %v564
  %v619 = vmul.f32 %v618, %v617
  %v620 = vmul.f32 0.5, %v619
  %v621 = vsub.f32 1.5, %v620
  %v622 = vmul.f32 %v617, %v621
  %vm623 = vweird.f32 %v564
  %vm624 = vweird.f32 %v617
  %vm625 = vmor %vm623, %vm624
  %v626 = vsel %vm625, %v617, %v622
  %v627 = vrsqrt.pop %v565
  %v628 = vmul.f32 %v627, %v565
  %v629 = vmul.f32 %v628, %v627
  %v630 = vmul.f32 0.5, %v629
  %v631 = vsub.f32 1.5, %v630
  %v632 = vmul.f32 %v627, %v631
  %vm633 = vweird.f32 %v565
  %vm634 = vweird.f32 %v627
  %vm635 = vmor %vm633, %vm634
  %v636 = vsel %vm635, %v627, %v632
  %v637 = vrsqrt.pop %v566
  %v638 = vmul.f32 %v637, %v566
  %v639 = vmul.f32 %v638, %v637
  %v640 = vmul.f32 0.5, %v639
  %v641 = vsub.f32 1.5, %v640
  %v642 = vmul.f32 %v637, %v641
  %vm643 = vweird.f32 %v566
  %vm644 = vweird.f32 %v637
  %vm645 = vmor %vm643, %vm644
  %v646 = vsel %vm645, %v637, %v642
  %v647 = vmul.f32 %v462, %v576
  %v648 = vmul.f32 %v463, %v586
  %v649 = vmul.f32 %v464, %v596
  %v650 = vmul.f32 %v465, %v606
  %v651 = vmul.f32 %v466, %v616
  %v652 = vmul.f32 %v467, %v626
  %v653 = vmul.f32 %v468, %v636
  %v654 = vmul.f32 %v469, %v646
  %v655 = vld [vmem:[%s2] sm:$0xff]
  %v656 = vld [vmem:[%s2 + $0x8] sm:$0xff]
  %v657 = vld [vmem:[%s2 + $0x10] sm:$0xff]
  %v658 = vld [vmem:[%s2 + $0x18] sm:$0xff]
  %v659 = vld [vmem:[%s2 + $0x20] sm:$0xff]
  %v660 = vld [vmem:[%s2 + $0x28] sm:$0xff]
  %v661 = vld [vmem:[%s2 + $0x30] sm:$0xff]
  %v662 = vld [vmem:[%s2 + $0x38] sm:$0xff]
  %664 = vset.pattern.permute.xlu0 0
  %665 = vperm.xlu0 %664, %v655
  %v666 = vpop.permute.xlu0 %665
  %669 = vset.pattern.permute.xlu0 0
  %670 = vperm.xlu0 %669, %v656
  %v671 = vpop.permute.xlu0 %670
  %674 = vset.pattern.permute.xlu0 0
  %675 = vperm.xlu0 %674, %v657
  %v676 = vpop.permute.xlu0 %675
  %679 = vset.pattern.permute.xlu0 0
  %680 = vperm.xlu0 %679, %v658
  %v681 = vpop.permute.xlu0 %680
  %684 = vset.pattern.permute.xlu0 0
  %685 = vperm.xlu0 %684, %v659
  %v686 = vpop.permute.xlu0 %685
  %689 = vset.pattern.permute.xlu0 0
  %690 = vperm.xlu0 %689, %v660
  %v691 = vpop.permute.xlu0 %690
  %694 = vset.pattern.permute.xlu0 0
  %695 = vperm.xlu0 %694, %v661
  %v696 = vpop.permute.xlu0 %695
  %699 = vset.pattern.permute.xlu0 0
  %700 = vperm.xlu0 %699, %v662
  %v701 = vpop.permute.xlu0 %700
  %v703 = vmul.f32 %v647, %v666
  %v704 = vmul.f32 %v648, %v671
  %v705 = vmul.f32 %v649, %v676
  %v706 = vmul.f32 %v650, %v681
  %v707 = vmul.f32 %v651, %v686
  %v708 = vmul.f32 %v652, %v691
  %v709 = vmul.f32 %v653, %v696
  %v710 = vmul.f32 %v654, %v701
  %v711 = vld [vmem:[%s3] sm:$0xff]
  %v712 = vld [vmem:[%s3 + $0x8] sm:$0xff]
  %v713 = vld [vmem:[%s3 + $0x10] sm:$0xff]
  %v714 = vld [vmem:[%s3 + $0x18] sm:$0xff]
  %v715 = vld [vmem:[%s3 + $0x20] sm:$0xff]
  %v716 = vld [vmem:[%s3 + $0x28] sm:$0xff]
  %v717 = vld [vmem:[%s3 + $0x30] sm:$0xff]
  %v718 = vld [vmem:[%s3 + $0x38] sm:$0xff]
  %720 = vset.pattern.permute.xlu0 0
  %721 = vperm.xlu0 %720, %v711
  %v722 = vpop.permute.xlu0 %721
  %725 = vset.pattern.permute.xlu0 0
  %726 = vperm.xlu0 %725, %v712
  %v727 = vpop.permute.xlu0 %726
  %730 = vset.pattern.permute.xlu0 0
  %731 = vperm.xlu0 %730, %v713
  %v732 = vpop.permute.xlu0 %731
  %735 = vset.pattern.permute.xlu0 0
  %736 = vperm.xlu0 %735, %v714
  %v737 = vpop.permute.xlu0 %736
  %740 = vset.pattern.permute.xlu0 0
  %741 = vperm.xlu0 %740, %v715
  %v742 = vpop.permute.xlu0 %741
  %745 = vset.pattern.permute.xlu0 0
  %746 = vperm.xlu0 %745, %v716
  %v747 = vpop.permute.xlu0 %746
  %750 = vset.pattern.permute.xlu0 0
  %751 = vperm.xlu0 %750, %v717
  %v752 = vpop.permute.xlu0 %751
  %755 = vset.pattern.permute.xlu0 0
  %756 = vperm.xlu0 %755, %v718
  %v757 = vpop.permute.xlu0 %756
  %v759 = vadd.f32 %v703, %v722
  %v760 = vadd.f32 %v704, %v727
  %v761 = vadd.f32 %v705, %v732
  %v762 = vadd.f32 %v706, %v737
  %v763 = vadd.f32 %v707, %v742
  %v764 = vadd.f32 %v708, %v747
  %v765 = vadd.f32 %v709, %v752
  %v766 = vadd.f32 %v710, %v757
  %v767 = vmax.f32 %v759, 0.0
  %v768 = vmax.f32 %v760, 0.0
  %v769 = vmax.f32 %v761, 0.0
  %v770 = vmax.f32 %v762, 0.0
  %v771 = vmax.f32 %v763, 0.0
  %v772 = vmax.f32 %v764, 0.0
  %v773 = vmax.f32 %v765, 0.0
  %v774 = vmax.f32 %v766, 0.0
  %775 = vst.msk [vmem:[%s5] sm:$0xff] %vm241, %v767
  %776 = vst.msk [vmem:[%s5 + $0x8] sm:$0xff] %vm241, %v768
  %777 = vst.msk [vmem:[%s5 + $0x10] sm:$0xff] %vm241, %v769
  %778 = vst.msk [vmem:[%s5 + $0x18] sm:$0xff] %vm241, %v770
  %779 = vst.msk [vmem:[%s5 + $0x20] sm:$0xff] %vm241, %v771
  %780 = vst.msk [vmem:[%s5 + $0x28] sm:$0xff] %vm241, %v772
  %781 = vst.msk [vmem:[%s5 + $0x30] sm:$0xff] %vm241, %v773
  %782 = vst.msk [vmem:[%s5 + $0x38] sm:$0xff] %vm241, %v774
  // Predicated region
  $region22: #{generator_forward.19} parent=0 // pred_check
    _
  $region23: #{generator_forward.19} parent=0 // pred_check_branch
    %784 = sbr.rel (0) target = $region25
  $region24: #{generator_forward.19} parent=0 // pred_region
    _
  $region25: #{generator_forward.19} parent=0 // pred_fallthru
    _
  // Predicated region
  $region26: #{generator_forward.19} parent=0 // pred_check
    _
  $region27: #{generator_forward.19} parent=0 // pred_check_branch
    %786 = sbr.rel (0) target = $region29
  $region28: #{generator_forward.19} parent=0 // pred_region
    _
  $region29: #{generator_forward.19} parent=0 // pred_fallthru
    _

// kernel: generator_forward.20
$region0: #{generator_forward.20}
  #allocation0 [shape = 'u32[]', space=smem, size = 0x4, offset = 0x4, fixed_abs, tag = 'smem constant byte address 0x4 - core index']
  #allocation1 [shape = 'u32[72,128]{1,0:T(1,128)}', space=vmem, size = 0x9000, scoped, tag = 'internal scratch']
  %s0 = inlined_call_operand.vmem [shape: bf16[144,128], index: 0, kind: input, shape index: {}]
  %s1 = inlined_call_operand.vmem [shape: bf16[32,144], index: 1, kind: input, shape index: {}]
  %s2 = inlined_call_operand.vmem [shape: f32[32,1], index: 2, kind: input, shape index: {}]
  %s3 = inlined_call_operand.vmem [shape: f32[32,1], index: 3, kind: input, shape index: {}]
  %s4 = inlined_call_operand.vmem [shape: f32[32,32], index: 4, kind: input, shape index: {}]
  %s5 = inlined_call_operand.vmem [shape: f32[32,128], index: 5, kind: output, shape index: {}]
  %s6 = sld [smem:[#allocation0]]
  $region30: #{generator_forward.20} parent=0
    _
  %s8 = ssub.s32 1, %s6
  %s9 = scalar_select 0, %s8, %s6
  // Predicated region
  $region2: #{generator_forward.20} parent=0 // pred_check
    _
  $region3: #{generator_forward.20} parent=0 // pred_check_branch
    %11 = sbr.rel (0) target = $region5
  $region4: #{generator_forward.20} parent=0 // pred_region
    _
  $region5: #{generator_forward.20} parent=0 // pred_fallthru
    _
  // Predicated region
  $region6: #{generator_forward.20} parent=0 // pred_check
    _
  $region7: #{generator_forward.20} parent=0 // pred_check_branch
    %13 = sbr.rel (0) target = $region9
  $region8: #{generator_forward.20} parent=0 // pred_region
    _
  $region9: #{generator_forward.20} parent=0 // pred_fallthru
    _
  // Predicated region
  $region10: #{generator_forward.20} parent=0 // pred_check
    _
  $region11: #{generator_forward.20} parent=0 // pred_check_branch
    %15 = sbr.rel (0) target = $region13
  $region12: #{generator_forward.20} parent=0 // pred_region
    _
  $region13: #{generator_forward.20} parent=0 // pred_fallthru
    _
  // Predicated region
  $region14: #{generator_forward.20} parent=0 // pred_check
    _
  $region15: #{generator_forward.20} parent=0 // pred_check_branch
    %17 = sbr.rel (0) target = $region17
  $region16: #{generator_forward.20} parent=0 // pred_region
    _
  $region17: #{generator_forward.20} parent=0 // pred_fallthru
    _
  // Predicated region
  $region18: #{generator_forward.20} parent=0 // pred_check
    _
  $region19: #{generator_forward.20} parent=0 // pred_check_branch
    %19 = sbr.rel (0) target = $region21
  $region20: #{generator_forward.20} parent=0 // pred_region
    _
  $region21: #{generator_forward.20} parent=0 // pred_fallthru
    _
  %v21 = vld [vmem:[%s1] sm:$0xff]
  %v22 = vld [vmem:[%s1 + $0x8] sm:$0xff]
  %v23 = vld [vmem:[%s1 + $0x10] sm:$0xff]
  %v24 = vld [vmem:[%s1 + $0x18] sm:$0xff]
  %v25 = vld [vmem:[%s0] sm:$0xf]
  %v26 = vld [vmem:[%s0 + $0x4] sm:$0xf]
  %v27 = vld [vmem:[%s0 + $0x8] sm:$0xf]
  %v28 = vld [vmem:[%s0 + $0xc] sm:$0xf]
  %v29 = vld [vmem:[%s0 + $0x10] sm:$0xf]
  %v30 = vld [vmem:[%s0 + $0x14] sm:$0xf]
  %v31 = vld [vmem:[%s0 + $0x18] sm:$0xf]
  %v32 = vld [vmem:[%s0 + $0x1c] sm:$0xf]
  %v33 = vld [vmem:[%s0 + $0x20] sm:$0xf]
  %v34 = vld [vmem:[%s0 + $0x24] sm:$0xf]
  %v35 = vld [vmem:[%s0 + $0x28] sm:$0xf]
  %v36 = vld [vmem:[%s0 + $0x2c] sm:$0xf]
  %v37 = vld [vmem:[%s0 + $0x30] sm:$0xf]
  %v38 = vld [vmem:[%s0 + $0x34] sm:$0xf]
  %v39 = vld [vmem:[%s0 + $0x38] sm:$0xf]
  %v40 = vld [vmem:[%s0 + $0x3c] sm:$0xf]
  %v41 = vld [vmem:[%s0 + $0x40] sm:$0xf]
  %v42 = vld [vmem:[%s0 + $0x44] sm:$0xf]
  %v47 = vunpack.c.l.b16 %v21
  %v48 = vunpack.c.h.b16 %v21
  %v49 = vunpack.c.l.b16 %v22
  %v50 = vunpack.c.h.b16 %v22
  %v51 = vunpack.c.l.b16 %v23
  %v52 = vunpack.c.h.b16 %v23
  %v53 = vunpack.c.l.b16 %v24
  %v54 = vunpack.c.h.b16 %v24
  %v55 = vpack.c.b16 %v49, %v47
  %v56 = vpack.c.b16 %v50, %v48
  %v57 = vpack.c.b16 %v53, %v51
  %v58 = vpack.c.b16 %v54, %v52
  %v79 = vunpack.c.l.b16 %v25
  %v80 = vunpack.c.l.b16 %v26
  %v81 = vunpack.c.l.b16 %v27
  %v82 = vunpack.c.l.b16 %v28
  %v83 = vunpack.c.l.b16 %v29
  %v84 = vunpack.c.l.b16 %v30
  %v85 = vunpack.c.l.b16 %v31
  %v86 = vunpack.c.l.b16 %v32
  %v87 = vunpack.c.l.b16 %v33
  %v88 = vunpack.c.l.b16 %v34
  %v89 = vunpack.c.l.b16 %v35
  %v90 = vunpack.c.l.b16 %v36
  %v91 = vunpack.c.l.b16 %v37
  %v92 = vunpack.c.l.b16 %v38
  %v93 = vunpack.c.l.b16 %v39
  %v94 = vunpack.c.l.b16 %v40
  %v95 = vunpack.c.l.b16 %v41
  %v96 = vunpack.c.l.b16 %v42
  %v97 = vpack.c.b16 %v80, %v79
  %v98 = vpack.c.b16 %v82, %v81
  %v99 = vpack.c.b16 %v84, %v83
  %v100 = vpack.c.b16 %v86, %v85
  %v101 = vpack.c.b16 %v88, %v87
  %v102 = vpack.c.b16 %v90, %v89
  %v103 = vpack.c.b16 %v92, %v91
  %v104 = vpack.c.b16 %v94, %v93
  %v105 = vpack.c.b16 %v96, %v95
  %vm115 = vcmask 130048
  %v117 = vsel %vm115, %v56, 0
  %v120 = vsel %vm115, %v58, 0
  %122 = vmatpush.bf16.msra.mxu0 %v104
  %123 = vmatpush.bf16.msra.mxu0 %v103
  %124 = vmatpush.bf16.msra.mxu0 %v102
  %125 = vmatpush.bf16.msra.mxu0 %v101
  %126 = vmatpush.bf16.msra.mxu0 %v100
  %127 = vmatpush.bf16.msra.mxu0 %v99
  %128 = vmatpush.bf16.msra.mxu0 %v98
  %129 = vmatpush.bf16.msra.mxu0 %v97
  %130 = vmatmul.bf16.gmra.mxu0 %v55
  %v131 = vpop.f32.mrf.mxu0
  %v132 = vadd.f32 0.0, %v131
  %v133 = vpop.f32.mrf.mxu0
  %v134 = vadd.f32 0.0, %v133
  %135 = vmatmul.bf16.gmra.mxu0 %v57
  %v136 = vpop.f32.mrf.mxu0
  %v137 = vadd.f32 0.0, %v136
  %v138 = vpop.f32.mrf.mxu0
  %v139 = vadd.f32 0.0, %v138
  %140 = vdwg.mxu0
  %141 = vmatpush.bf16.msra.mxu0 0
  %142 = vmatpush.bf16.msra.mxu0 0
  %143 = vmatpush.bf16.msra.mxu0 0
  %144 = vmatpush.bf16.msra.mxu0 0
  %145 = vmatpush.bf16.msra.mxu0 0
  %146 = vmatpush.bf16.msra.mxu0 0
  %147 = vmatpush.bf16.msra.mxu0 0
  %148 = vmatpush.bf16.msra.mxu0 %v105
  %149 = vmatmul.bf16.gmra.mxu0 %v117
  %v150 = vpop.f32.mrf.mxu0
  %v151 = vadd.f32 %v132, %v150
  %v152 = vpop.f32.mrf.mxu0
  %v153 = vadd.f32 %v134, %v152
  %154 = vmatmul.bf16.gmra.mxu0 %v120
  %v155 = vpop.f32.mrf.mxu0
  %v156 = vadd.f32 %v137, %v155
  %v157 = vpop.f32.mrf.mxu0
  %v158 = vadd.f32 %v139, %v157
  %159 = vdwg.mxu0
  %v160 = vld [vmem:[%s4] sm:$0xff]
  %v161 = vld [vmem:[%s4 + $0x8] sm:$0xff]
  %v162 = vld [vmem:[%s4 + $0x10] sm:$0xff]
  %v163 = vld [vmem:[%s4 + $0x18] sm:$0xff]
  %vm164 = vcmask 261120
  %v166 = vsel %vm164, %v160, 0
  %v169 = vsel %vm164, %v161, 0
  %v172 = vsel %vm164, %v162, 0
  %v175 = vsel %vm164, %v163, 0
  %177 = vmatpush.msra.mxu0 0.0
  %178 = vmatpush.msra.mxu0 0.0
  %179 = vmatpush.msra.mxu0 0.0
  %180 = vmatpush.msra.mxu0 0.0
  %181 = vmatpush.msra.mxu0 0.0
  %182 = vmatpush.msra.mxu0 0.0
  %183 = vmatpush.msra.mxu0 0.0
  %184 = vmatpush.msra.mxu0 0.0
  %185 = vmatpush.msra.mxu0 0.0
  %186 = vmatpush.msra.mxu0 0.0
  %187 = vmatpush.msra.mxu0 0.0
  %188 = vmatpush.msra.mxu0 0.0
  %189 = vmatpush.msra.mxu0 %v158
  %190 = vmatpush.msra.mxu0 %v156
  %191 = vmatpush.msra.mxu0 %v153
  %192 = vmatpush.msra.mxu0 %v151
  %193 = vmatmul.f32.gmra.mxu0 %v166
  %v194 = vpop.f32.mrf.mxu0
  %v195 = vadd.f32 0.0, %v194
  %196 = vmatmul.f32.gmra.mxu0 %v169
  %v197 = vpop.f32.mrf.mxu0
  %v198 = vadd.f32 0.0, %v197
  %199 = vmatmul.f32.gmra.mxu0 %v172
  %v200 = vpop.f32.mrf.mxu0
  %v201 = vadd.f32 0.0, %v200
  %202 = vmatmul.f32.gmra.mxu0 %v175
  %v203 = vpop.f32.mrf.mxu0
  %v204 = vadd.f32 0.0, %v203
  %205 = vdwg.mxu0
  %206 = vadd.xlane.f32.xlu0 %v195
  %v207 = vpop.xlane.xlu0 %206
  %208 = vadd.xlane.f32.xlu0 %v198
  %v209 = vpop.xlane.xlu0 %208
  %210 = vadd.xlane.f32.xlu0 %v201
  %v211 = vpop.xlane.xlu0 %210
  %212 = vadd.xlane.f32.xlu0 %v204
  %v213 = vpop.xlane.xlu0 %212
  %v214 = vrcp.pop 128.0
  %v215 = vmul.f32 128.0, %v214
  %v216 = vsub.f32 1.0, %v215
  %v217 = vmul.f32 %v214, %v216
  %v218 = vadd.f32 %v214, %v217
  %vm219 = vweird.f32 %v214
  %v220 = vsel %vm219, %v214, %v218
  %v221 = vmul.f32 %v207, %v220
  %v222 = vmul.f32 %v209, %v220
  %v223 = vmul.f32 %v211, %v220
  %v224 = vmul.f32 %v213, %v220
  %v225 = vmul.f32 %v221, 0.25
  %v226 = vmul.f32 %v222, 0.25
  %v227 = vmul.f32 %v223, 0.25
  %v228 = vmul.f32 %v224, 0.25
  %v229 = vsub.f32 %v151, %v225
  %v230 = vsub.f32 %v153, %v226
  %v231 = vsub.f32 %v156, %v227
  %v232 = vsub.f32 %v158, %v228
  %v233 = vmul.f32 %v229, %v229
  %v234 = vmul.f32 %v230, %v230
  %v235 = vmul.f32 %v231, %v231
  %v236 = vmul.f32 %v232, %v232
  %237 = vmatpush.msra.mxu0 0.0
  %238 = vmatpush.msra.mxu0 0.0
  %239 = vmatpush.msra.mxu0 0.0
  %240 = vmatpush.msra.mxu0 0.0
  %241 = vmatpush.msra.mxu0 0.0
  %242 = vmatpush.msra.mxu0 0.0
  %243 = vmatpush.msra.mxu0 0.0
  %244 = vmatpush.msra.mxu0 0.0
  %245 = vmatpush.msra.mxu0 0.0
  %246 = vmatpush.msra.mxu0 0.0
  %247 = vmatpush.msra.mxu0 0.0
  %248 = vmatpush.msra.mxu0 0.0
  %249 = vmatpush.msra.mxu0 %v236
  %250 = vmatpush.msra.mxu0 %v235
  %251 = vmatpush.msra.mxu0 %v234
  %252 = vmatpush.msra.mxu0 %v233
  %253 = vmatmul.f32.gmra.mxu0 %v166
  %v254 = vpop.f32.mrf.mxu0
  %v255 = vadd.f32 0.0, %v254
  %256 = vmatmul.f32.gmra.mxu0 %v169
  %v257 = vpop.f32.mrf.mxu0
  %v258 = vadd.f32 0.0, %v257
  %259 = vmatmul.f32.gmra.mxu0 %v172
  %v260 = vpop.f32.mrf.mxu0
  %v261 = vadd.f32 0.0, %v260
  %262 = vmatmul.f32.gmra.mxu0 %v175
  %v263 = vpop.f32.mrf.mxu0
  %v264 = vadd.f32 0.0, %v263
  %265 = vdwg.mxu0
  %266 = vadd.xlane.f32.xlu0 %v255
  %v267 = vpop.xlane.xlu0 %266
  %268 = vadd.xlane.f32.xlu0 %v258
  %v269 = vpop.xlane.xlu0 %268
  %270 = vadd.xlane.f32.xlu0 %v261
  %v271 = vpop.xlane.xlu0 %270
  %272 = vadd.xlane.f32.xlu0 %v264
  %v273 = vpop.xlane.xlu0 %272
  %v274 = vmul.f32 %v267, %v220
  %v275 = vmul.f32 %v269, %v220
  %v276 = vmul.f32 %v271, %v220
  %v277 = vmul.f32 %v273, %v220
  %v278 = vmul.f32 %v274, 0.25
  %v279 = vmul.f32 %v275, 0.25
  %v280 = vmul.f32 %v276, 0.25
  %v281 = vmul.f32 %v277, 0.25
  %v282 = vadd.f32 %v278, 1e-05
  %v283 = vadd.f32 %v279, 1e-05
  %v284 = vadd.f32 %v280, 1e-05
  %v285 = vadd.f32 %v281, 1e-05
  %v286 = vrsqrt.pop %v282
  %v287 = vmul.f32 %v286, %v282
  %v288 = vmul.f32 %v287, %v286
  %v289 = vmul.f32 0.5, %v288
  %v290 = vsub.f32 1.5, %v289
  %v291 = vmul.f32 %v286, %v290
  %vm292 = vweird.f32 %v282
  %vm293 = vweird.f32 %v286
  %vm294 = vmor %vm292, %vm293
  %v295 = vsel %vm294, %v286, %v291
  %v296 = vrsqrt.pop %v283
  %v297 = vmul.f32 %v296, %v283
  %v298 = vmul.f32 %v297, %v296
  %v299 = vmul.f32 0.5, %v298
  %v300 = vsub.f32 1.5, %v299
  %v301 = vmul.f32 %v296, %v300
  %vm302 = vweird.f32 %v283
  %vm303 = vweird.f32 %v296
  %vm304 = vmor %vm302, %vm303
  %v305 = vsel %vm304, %v296, %v301
  %v306 = vrsqrt.pop %v284
  %v307 = vmul.f32 %v306, %v284
  %v308 = vmul.f32 %v307, %v306
  %v309 = vmul.f32 0.5, %v308
  %v310 = vsub.f32 1.5, %v309
  %v311 = vmul.f32 %v306, %v310
  %vm312 = vweird.f32 %v284
  %vm313 = vweird.f32 %v306
  %vm314 = vmor %vm312, %vm313
  %v315 = vsel %vm314, %v306, %v311
  %v316 = vrsqrt.pop %v285
  %v317 = vmul.f32 %v316, %v285
  %v318 = vmul.f32 %v317, %v316
  %v319 = vmul.f32 0.5, %v318
  %v320 = vsub.f32 1.5, %v319
  %v321 = vmul.f32 %v316, %v320
  %vm322 = vweird.f32 %v285
  %vm323 = vweird.f32 %v316
  %vm324 = vmor %vm322, %vm323
  %v325 = vsel %vm324, %v316, %v321
  %v326 = vmul.f32 %v229, %v295
  %v327 = vmul.f32 %v230, %v305
  %v328 = vmul.f32 %v231, %v315
  %v329 = vmul.f32 %v232, %v325
  %v330 = vld [vmem:[%s2] sm:$0xff]
  %v331 = vld [vmem:[%s2 + $0x8] sm:$0xff]
  %v332 = vld [vmem:[%s2 + $0x10] sm:$0xff]
  %v333 = vld [vmem:[%s2 + $0x18] sm:$0xff]
  %335 = vset.pattern.permute.xlu0 0
  %336 = vperm.xlu0 %335, %v330
  %v337 = vpop.permute.xlu0 %336
  %340 = vset.pattern.permute.xlu0 0
  %341 = vperm.xlu0 %340, %v331
  %v342 = vpop.permute.xlu0 %341
  %345 = vset.pattern.permute.xlu0 0
  %346 = vperm.xlu0 %345, %v332
  %v347 = vpop.permute.xlu0 %346
  %350 = vset.pattern.permute.xlu0 0
  %351 = vperm.xlu0 %350, %v333
  %v352 = vpop.permute.xlu0 %351
  %v354 = vmul.f32 %v326, %v337
  %v355 = vmul.f32 %v327, %v342
  %v356 = vmul.f32 %v328, %v347
  %v357 = vmul.f32 %v329, %v352
  %v358 = vld [vmem:[%s3] sm:$0xff]
  %v359 = vld [vmem:[%s3 + $0x8] sm:$0xff]
  %v360 = vld [vmem:[%s3 + $0x10] sm:$0xff]
  %v361 = vld [vmem:[%s3 + $0x18] sm:$0xff]
  %363 = vset.pattern.permute.xlu0 0
  %364 = vperm.xlu0 %363, %v358
  %v365 = vpop.permute.xlu0 %364
  %368 = vset.pattern.permute.xlu0 0
  %369 = vperm.xlu0 %368, %v359
  %v370 = vpop.permute.xlu0 %369
  %373 = vset.pattern.permute.xlu0 0
  %374 = vperm.xlu0 %373, %v360
  %v375 = vpop.permute.xlu0 %374
  %378 = vset.pattern.permute.xlu0 0
  %379 = vperm.xlu0 %378, %v361
  %v380 = vpop.permute.xlu0 %379
  %v382 = vadd.f32 %v354, %v365
  %v383 = vadd.f32 %v355, %v370
  %v384 = vadd.f32 %v356, %v375
  %v385 = vadd.f32 %v357, %v380
  %v386 = vmax.f32 %v382, 0.0
  %v387 = vmax.f32 %v383, 0.0
  %v388 = vmax.f32 %v384, 0.0
  %v389 = vmax.f32 %v385, 0.0
  %390 = vst [vmem:[%s5] sm:$0xff] %v386
  %391 = vst [vmem:[%s5 + $0x8] sm:$0xff] %v387
  %392 = vst [vmem:[%s5 + $0x10] sm:$0xff] %v388
  %393 = vst [vmem:[%s5 + $0x18] sm:$0xff] %v389
  // Predicated region
  $region22: #{generator_forward.20} parent=0 // pred_check
    _
  $region23: #{generator_forward.20} parent=0 // pred_check_branch
    %395 = sbr.rel (0) target = $region25
  $region24: #{generator_forward.20} parent=0 // pred_region
    _
  $region25: #{generator_forward.20} parent=0 // pred_fallthru
    _
  // Predicated region
  $region26: #{generator_forward.20} parent=0 // pred_check
    _
  $region27: #{generator_forward.20} parent=0 // pred_check_branch
    %397 = sbr.rel (0) target = $region29
  $region28: #{generator_forward.20} parent=0 // pred_region
    _
  $region29: #{generator_forward.20} parent=0 // pred_fallthru
    _

// kernel: generator_forward.23
$region0: #{generator_forward.23}
  #allocation0 [shape = 'u32[]', space=smem, size = 0x4, offset = 0x4, fixed_abs, tag = 'smem constant byte address 0x4 - core index']
  #allocation1 [shape = 'u32[72,128]{1,0:T(1,128)}', space=vmem, size = 0x9000, scoped, tag = 'internal scratch']
  %s0 = inlined_call_operand.vmem [shape: bf16[784,512], index: 0, kind: input, shape index: {}]
  %s1 = inlined_call_operand.vmem [shape: bf16[4,784], index: 1, kind: input, shape index: {}]
  %s2 = inlined_call_operand.vmem [shape: f32[4,1], index: 2, kind: input, shape index: {}]
  %s3 = inlined_call_operand.vmem [shape: f32[4,512], index: 3, kind: output, shape index: {}]
  %s4 = sld [smem:[#allocation0]]
  $region22: #{generator_forward.23} parent=0
    _
  %s6 = ssub.s32 1, %s4
  %s7 = scalar_select 0, %s6, %s4
  // Predicated region
  $region2: #{generator_forward.23} parent=0 // pred_check
    _
  $region3: #{generator_forward.23} parent=0 // pred_check_branch
    %9 = sbr.rel (0) target = $region5
  $region4: #{generator_forward.23} parent=0 // pred_region
    _
  $region5: #{generator_forward.23} parent=0 // pred_fallthru
    _
  // Predicated region
  $region6: #{generator_forward.23} parent=0 // pred_check
    _
  $region7: #{generator_forward.23} parent=0 // pred_check_branch
    %11 = sbr.rel (0) target = $region9
  $region8: #{generator_forward.23} parent=0 // pred_region
    _
  $region9: #{generator_forward.23} parent=0 // pred_fallthru
    _
  // Predicated region
  $region10: #{generator_forward.23} parent=0 // pred_check
    _
  $region11: #{generator_forward.23} parent=0 // pred_check_branch
    %13 = sbr.rel (0) target = $region13
  $region12: #{generator_forward.23} parent=0 // pred_region
    _
  $region13: #{generator_forward.23} parent=0 // pred_fallthru
    _
  %v15 = vld [vmem:[%s1] sm:$0xff]
  %v16 = vld [vmem:[%s1 + $0x8] sm:$0x3f]
  %v17 = vld [vmem:[%s0] sm:$0xff]
  %v18 = vld [vmem:[%s0 + $0x8] sm:$0xff]
  %v19 = vld [vmem:[%s0 + $0x10] sm:$0xff]
  %v20 = vld [vmem:[%s0 + $0x18] sm:$0xff]
  %v21 = vld [vmem:[%s0 + $0x20] sm:$0xff]
  %v22 = vld [vmem:[%s0 + $0x28] sm:$0xff]
  %v23 = vld [vmem:[%s0 + $0x30] sm:$0xff]
  %v24 = vld [vmem:[%s0 + $0x38] sm:$0xff]
  %v25 = vld [vmem:[%s0 + $0x40] sm:$0xff]
  %v26 = vld [vmem:[%s0 + $0x48] sm:$0xff]
  %v27 = vld [vmem:[%s0 + $0x50] sm:$0xff]
  %v28 = vld [vmem:[%s0 + $0x58] sm:$0xff]
  %v29 = vld [vmem:[%s0 + $0x60] sm:$0xff]
  %v30 = vld [vmem:[%s0 + $0x68] sm:$0xff]
  %v31 = vld [vmem:[%s0 + $0x70] sm:$0xff]
  %v32 = vld [vmem:[%s0 + $0x78] sm:$0xff]
  %v33 = vld [vmem:[%s0 + $0x80] sm:$0xff]
  %v34 = vld [vmem:[%s0 + $0x88] sm:$0xff]
  %v35 = vld [vmem:[%s0 + $0x90] sm:$0xff]
  %v36 = vld [vmem:[%s0 + $0x98] sm:$0xff]
  %v37 = vld [vmem:[%s0 + $0xa0] sm:$0xff]
  %v38 = vld [vmem:[%s0 + $0xa8] sm:$0xff]
  %v39 = vld [vmem:[%s0 + $0xb0] sm:$0xff]
  %v40 = vld [vmem:[%s0 + $0xb8] sm:$0xff]
  %v41 = vld [vmem:[%s0 + $0xc0] sm:$0xff]
  %v42 = vld [vmem:[%s0 + $0xc8] sm:$0xff]
  %v43 = vld [vmem:[%s0 + $0xd0] sm:$0xff]
  %v44 = vld [vmem:[%s0 + $0xd8] sm:$0xff]
  %v45 = vld [vmem:[%s0 + $0xe0] sm:$0xff]
  %v46 = vld [vmem:[%s0 + $0xe8] sm:$0xff]
  %v47 = vld [vmem:[%s0 + $0xf0] sm:$0xff]
  %v48 = vld [vmem:[%s0 + $0xf8] sm:$0xff]
  %v49 = vld [vmem:[%s0 + $0x100] sm:$0xff]
  %v50 = vld [vmem:[%s0 + $0x108] sm:$0xff]
  %v51 = vld [vmem:[%s0 + $0x110] sm:$0xff]
  %v52 = vld [vmem:[%s0 + $0x118] sm:$0xff]
  %v53 = vld [vmem:[%s0 + $0x120] sm:$0xff]
  %v54 = vld [vmem:[%s0 + $0x128] sm:$0xff]
  %v55 = vld [vmem:[%s0 + $0x130] sm:$0xff]
  %v56 = vld [vmem:[%s0 + $0x138] sm:$0xff]
  %v57 = vld [vmem:[%s0 + $0x140] sm:$0xff]
  %v58 = vld [vmem:[%s0 + $0x148] sm:$0xff]
  %v59 = vld [vmem:[%s0 + $0x150] sm:$0xff]
  %v60 = vld [vmem:[%s0 + $0x158] sm:$0xff]
  %v61 = vld [vmem:[%s0 + $0x160] sm:$0xff]
  %v62 = vld [vmem:[%s0 + $0x168] sm:$0xff]
  %v63 = vld [vmem:[%s0 + $0x170] sm:$0xff]
  %v64 = vld [vmem:[%s0 + $0x178] sm:$0xff]
  %v65 = vld [vmem:[%s0 + $0x180] sm:$0xff]
  %v66 = vld [vmem:[%s0 + $0x188] sm:$0xff]
  %v67 = vld [vmem:[%s0 + $0x190] sm:$0xff]
  %v68 = vld [vmem:[%s0 + $0x198] sm:$0xff]
  %v69 = vld [vmem:[%s0 + $0x1a0] sm:$0xff]
  %v70 = vld [vmem:[%s0 + $0x1a8] sm:$0xff]
  %v71 = vld [vmem:[%s0 + $0x1b0] sm:$0xff]
  %v72 = vld [vmem:[%s0 + $0x1b8] sm:$0xff]
  %v73 = vld [vmem:[%s0 + $0x1c0] sm:$0xff]
  %v74 = vld [vmem:[%s0 + $0x1c8] sm:$0xff]
  %v75 = vld [vmem:[%s0 + $0x1d0] sm:$0xff]
  %v76 = vld [vmem:[%s0 + $0x1d8] sm:$0xff]
  %v77 = vld [vmem:[%s0 + $0x1e0] sm:$0xff]
  %v78 = vld [vmem:[%s0 + $0x1e8] sm:$0xff]
  %v79 = vld [vmem:[%s0 + $0x1f0] sm:$0xff]
  %v80 = vld [vmem:[%s0 + $0x1f8] sm:$0xff]
  %v81 = vld [vmem:[%s0 + $0x200] sm:$0xff]
  %v82 = vld [vmem:[%s0 + $0x208] sm:$0xff]
  %v83 = vld [vmem:[%s0 + $0x210] sm:$0xff]
  %v84 = vld [vmem:[%s0 + $0x218] sm:$0xff]
  %v85 = vld [vmem:[%s0 + $0x220] sm:$0xff]
  %v86 = vld [vmem:[%s0 + $0x228] sm:$0xff]
  %v87 = vld [vmem:[%s0 + $0x230] sm:$0xff]
  %v88 = vld [vmem:[%s0 + $0x238] sm:$0xff]
  %v89 = vld [vmem:[%s0 + $0x240] sm:$0xff]
  %v90 = vld [vmem:[%s0 + $0x248] sm:$0xff]
  %v91 = vld [vmem:[%s0 + $0x250] sm:$0xff]
  %v92 = vld [vmem:[%s0 + $0x258] sm:$0xff]
  %v93 = vld [vmem:[%s0 + $0x260] sm:$0xff]
  %v94 = vld [vmem:[%s0 + $0x268] sm:$0xff]
  %v95 = vld [vmem:[%s0 + $0x270] sm:$0xff]
  %v96 = vld [vmem:[%s0 + $0x278] sm:$0xff]
  %v97 = vld [vmem:[%s0 + $0x280] sm:$0xff]
  %v98 = vld [vmem:[%s0 + $0x288] sm:$0xff]
  %v99 = vld [vmem:[%s0 + $0x290] sm:$0xff]
  %v100 = vld [vmem:[%s0 + $0x298] sm:$0xff]
  %v101 = vld [vmem:[%s0 + $0x2a0] sm:$0xff]
  %v102 = vld [vmem:[%s0 + $0x2a8] sm:$0xff]
  %v103 = vld [vmem:[%s0 + $0x2b0] sm:$0xff]
  %v104 = vld [vmem:[%s0 + $0x2b8] sm:$0xff]
  %v105 = vld [vmem:[%s0 + $0x2c0] sm:$0xff]
  %v106 = vld [vmem:[%s0 + $0x2c8] sm:$0xff]
  %v107 = vld [vmem:[%s0 + $0x2d0] sm:$0xff]
  %v108 = vld [vmem:[%s0 + $0x2d8] sm:$0xff]
  %v109 = vld [vmem:[%s0 + $0x2e0] sm:$0xff]
  %v110 = vld [vmem:[%s0 + $0x2e8] sm:$0xff]
  %v111 = vld [vmem:[%s0 + $0x2f0] sm:$0xff]
  %v112 = vld [vmem:[%s0 + $0x2f8] sm:$0xff]
  %v113 = vld [vmem:[%s0 + $0x300] sm:$0xff]
  %v114 = vld [vmem:[%s0 + $0x308] sm:$0xff]
  %v115 = vld [vmem:[%s0 + $0x310] sm:$0xff]
  %v116 = vld [vmem:[%s0 + $0x318] sm:$0xff]
  %v117 = vld [vmem:[%s0 + $0x320] sm:$0xff]
  %v118 = vld [vmem:[%s0 + $0x328] sm:$0xff]
  %v119 = vld [vmem:[%s0 + $0x330] sm:$0xff]
  %v120 = vld [vmem:[%s0 + $0x338] sm:$0xff]
  %v121 = vld [vmem:[%s0 + $0x340] sm:$0xff]
  %v122 = vld [vmem:[%s0 + $0x348] sm:$0xff]
  %v123 = vld [vmem:[%s0 + $0x350] sm:$0xff]
  %v124 = vld [vmem:[%s0 + $0x358] sm:$0xff]
  %v125 = vld [vmem:[%s0 + $0x360] sm:$0xff]
  %v126 = vld [vmem:[%s0 + $0x368] sm:$0xff]
  %v127 = vld [vmem:[%s0 + $0x370] sm:$0xff]
  %v128 = vld [vmem:[%s0 + $0x378] sm:$0xff]
  %v129 = vld [vmem:[%s0 + $0x380] sm:$0xff]
  %v130 = vld [vmem:[%s0 + $0x388] sm:$0xff]
  %v131 = vld [vmem:[%s0 + $0x390] sm:$0xff]
  %v132 = vld [vmem:[%s0 + $0x398] sm:$0xff]
  %v133 = vld [vmem:[%s0 + $0x3a0] sm:$0xff]
  %v134 = vld [vmem:[%s0 + $0x3a8] sm:$0xff]
  %v135 = vld [vmem:[%s0 + $0x3b0] sm:$0xff]
  %v136 = vld [vmem:[%s0 + $0x3b8] sm:$0xff]
  %v137 = vld [vmem:[%s0 + $0x3c0] sm:$0xff]
  %v138 = vld [vmem:[%s0 + $0x3c8] sm:$0xff]
  %v139 = vld [vmem:[%s0 + $0x3d0] sm:$0xff]
  %v140 = vld [vmem:[%s0 + $0x3d8] sm:$0xff]
  %v141 = vld [vmem:[%s0 + $0x3e0] sm:$0xff]
  %v142 = vld [vmem:[%s0 + $0x3e8] sm:$0xff]
  %v143 = vld [vmem:[%s0 + $0x3f0] sm:$0xff]
  %v144 = vld [vmem:[%s0 + $0x3f8] sm:$0xff]
  %v145 = vld [vmem:[%s0 + $0x400] sm:$0xff]
  %v146 = vld [vmem:[%s0 + $0x408] sm:$0xff]
  %v147 = vld [vmem:[%s0 + $0x410] sm:$0xff]
  %v148 = vld [vmem:[%s0 + $0x418] sm:$0xff]
  %v149 = vld [vmem:[%s0 + $0x420] sm:$0xff]
  %v150 = vld [vmem:[%s0 + $0x428] sm:$0xff]
  %v151 = vld [vmem:[%s0 + $0x430] sm:$0xff]
  %v152 = vld [vmem:[%s0 + $0x438] sm:$0xff]
  %v153 = vld [vmem:[%s0 + $0x440] sm:$0xff]
  %v154 = vld [vmem:[%s0 + $0x448] sm:$0xff]
  %v155 = vld [vmem:[%s0 + $0x450] sm:$0xff]
  %v156 = vld [vmem:[%s0 + $0x458] sm:$0xff]
  %v157 = vld [vmem:[%s0 + $0x460] sm:$0xff]
  %v158 = vld [vmem:[%s0 + $0x468] sm:$0xff]
  %v159 = vld [vmem:[%s0 + $0x470] sm:$0xff]
  %v160 = vld [vmem:[%s0 + $0x478] sm:$0xff]
  %v161 = vld [vmem:[%s0 + $0x480] sm:$0xff]
  %v162 = vld [vmem:[%s0 + $0x488] sm:$0xff]
  %v163 = vld [vmem:[%s0 + $0x490] sm:$0xff]
  %v164 = vld [vmem:[%s0 + $0x498] sm:$0xff]
  %v165 = vld [vmem:[%s0 + $0x4a0] sm:$0xff]
  %v166 = vld [vmem:[%s0 + $0x4a8] sm:$0xff]
  %v167 = vld [vmem:[%s0 + $0x4b0] sm:$0xff]
  %v168 = vld [vmem:[%s0 + $0x4b8] sm:$0xff]
  %v169 = vld [vmem:[%s0 + $0x4c0] sm:$0xff]
  %v170 = vld [vmem:[%s0 + $0x4c8] sm:$0xff]
  %v171 = vld [vmem:[%s0 + $0x4d0] sm:$0xff]
  %v172 = vld [vmem:[%s0 + $0x4d8] sm:$0xff]
  %v173 = vld [vmem:[%s0 + $0x4e0] sm:$0xff]
  %v174 = vld [vmem:[%s0 + $0x4e8] sm:$0xff]
  %v175 = vld [vmem:[%s0 + $0x4f0] sm:$0xff]
  %v176 = vld [vmem:[%s0 + $0x4f8] sm:$0xff]
  %v177 = vld [vmem:[%s0 + $0x500] sm:$0xff]
  %v178 = vld [vmem:[%s0 + $0x508] sm:$0xff]
  %v179 = vld [vmem:[%s0 + $0x510] sm:$0xff]
  %v180 = vld [vmem:[%s0 + $0x518] sm:$0xff]
  %v181 = vld [vmem:[%s0 + $0x520] sm:$0xff]
  %v182 = vld [vmem:[%s0 + $0x528] sm:$0xff]
  %v183 = vld [vmem:[%s0 + $0x530] sm:$0xff]
  %v184 = vld [vmem:[%s0 + $0x538] sm:$0xff]
  %v185 = vld [vmem:[%s0 + $0x540] sm:$0xff]
  %v186 = vld [vmem:[%s0 + $0x548] sm:$0xff]
  %v187 = vld [vmem:[%s0 + $0x550] sm:$0xff]
  %v188 = vld [vmem:[%s0 + $0x558] sm:$0xff]
  %v189 = vld [vmem:[%s0 + $0x560] sm:$0xff]
  %v190 = vld [vmem:[%s0 + $0x568] sm:$0xff]
  %v191 = vld [vmem:[%s0 + $0x570] sm:$0xff]
  %v192 = vld [vmem:[%s0 + $0x578] sm:$0xff]
  %v193 = vld [vmem:[%s0 + $0x580] sm:$0xff]
  %v194 = vld [vmem:[%s0 + $0x588] sm:$0xff]
  %v195 = vld [vmem:[%s0 + $0x590] sm:$0xff]
  %v196 = vld [vmem:[%s0 + $0x598] sm:$0xff]
  %v197 = vld [vmem:[%s0 + $0x5a0] sm:$0xff]
  %v198 = vld [vmem:[%s0 + $0x5a8] sm:$0xff]
  %v199 = vld [vmem:[%s0 + $0x5b0] sm:$0xff]
  %v200 = vld [vmem:[%s0 + $0x5b8] sm:$0xff]
  %v201 = vld [vmem:[%s0 + $0x5c0] sm:$0xff]
  %v202 = vld [vmem:[%s0 + $0x5c8] sm:$0xff]
  %v203 = vld [vmem:[%s0 + $0x5d0] sm:$0xff]
  %v204 = vld [vmem:[%s0 + $0x5d8] sm:$0xff]
  %v205 = vld [vmem:[%s0 + $0x5e0] sm:$0xff]
  %v206 = vld [vmem:[%s0 + $0x5e8] sm:$0xff]
  %v207 = vld [vmem:[%s0 + $0x5f0] sm:$0xff]
  %v208 = vld [vmem:[%s0 + $0x5f8] sm:$0xff]
  %v209 = vld [vmem:[%s0 + $0x600] sm:$0xff]
  %v210 = vld [vmem:[%s0 + $0x608] sm:$0xff]
  %v211 = vld [vmem:[%s0 + $0x610] sm:$0xff]
  %v212 = vld [vmem:[%s0 + $0x618] sm:$0xff]
  %v213 = vld [vmem:[%s2] sm:$0xf]
  %215 = vset.pattern.permute.xlu0 0
  %216 = vperm.xlu0 %215, %v213
  %v217 = vpop.permute.xlu0 %216
  %220 = vst [vmem:[#allocation1] ss:$4 sm:$0xff] %v15
  %s222 = scalar_lea.vmem [#allocation1], 32
  %223 = vst [vmem:[%s222] ss:$4 sm:$0xff] %v16
  %v224 = vld.sshfl [vmem:[#allocation1] sm:$0xff pattern:$0x73625140]
  %v225 = vld.sshfl [vmem:[#allocation1 + $0x8] sm:$0xff pattern:$0x73625140]
  %v226 = vld.sshfl [vmem:[#allocation1 + $0x10] sm:$0xff pattern:$0x73625140]
  %v227 = vld.sshfl [vmem:[#allocation1 + $0x18] sm:$0xff pattern:$0x73625140]
  %v228 = vld.sshfl [vmem:[#allocation1 + $0x20] sm:$0xff pattern:$0x73625140]
  %v229 = vld.sshfl [vmem:[#allocation1 + $0x28] sm:$0xff pattern:$0x73625140]
  %v230 = vld.sshfl [vmem:[#allocation1 + $0x30] sm:$0xff pattern:$0x73625140]
  %v433 = vunpack.c.l.b16 %v17
  %v434 = vunpack.c.h.b16 %v17
  %v435 = vunpack.c.l.b16 %v18
  %v436 = vunpack.c.h.b16 %v18
  %v437 = vunpack.c.l.b16 %v19
  %v438 = vunpack.c.h.b16 %v19
  %v439 = vunpack.c.l.b16 %v20
  %v440 = vunpack.c.h.b16 %v20
  %v441 = vunpack.c.l.b16 %v21
  %v442 = vunpack.c.h.b16 %v21
  %v443 = vunpack.c.l.b16 %v22
  %v444 = vunpack.c.h.b16 %v22
  %v445 = vunpack.c.l.b16 %v23
  %v446 = vunpack.c.h.b16 %v23
  %v447 = vunpack.c.l.b16 %v24
  %v448 = vunpack.c.h.b16 %v24
  %v449 = vunpack.c.l.b16 %v25
  %v450 = vunpack.c.h.b16 %v25
  %v451 = vunpack.c.l.b16 %v26
  %v452 = vunpack.c.h.b16 %v26
  %v453 = vunpack.c.l.b16 %v27
  %v454 = vunpack.c.h.b16 %v27
  %v455 = vunpack.c.l.b16 %v28
  %v456 = vunpack.c.h.b16 %v28
  %v457 = vunpack.c.l.b16 %v29
  %v458 = vunpack.c.h.b16 %v29
  %v459 = vunpack.c.l.b16 %v30
  %v460 = vunpack.c.h.b16 %v30
  %v461 = vunpack.c.l.b16 %v31
  %v462 = vunpack.c.h.b16 %v31
  %v463 = vunpack.c.l.b16 %v32
  %v464 = vunpack.c.h.b16 %v32
  %v465 = vunpack.c.l.b16 %v33
  %v466 = vunpack.c.h.b16 %v33
  %v467 = vunpack.c.l.b16 %v34
  %v468 = vunpack.c.h.b16 %v34
  %v469 = vunpack.c.l.b16 %v35
  %v470 = vunpack.c.h.b16 %v35
  %v471 = vunpack.c.l.b16 %v36
  %v472 = vunpack.c.h.b16 %v36
  %v473 = vunpack.c.l.b16 %v37
  %v474 = vunpack.c.h.b16 %v37
  %v475 = vunpack.c.l.b16 %v38
  %v476 = vunpack.c.h.b16 %v38
  %v477 = vunpack.c.l.b16 %v39
  %v478 = vunpack.c.h.b16 %v39
  %v479 = vunpack.c.l.b16 %v40
  %v480 = vunpack.c.h.b16 %v40
  %v481 = vunpack.c.l.b16 %v41
  %v482 = vunpack.c.h.b16 %v41
  %v483 = vunpack.c.l.b16 %v42
  %v484 = vunpack.c.h.b16 %v42
  %v485 = vunpack.c.l.b16 %v43
  %v486 = vunpack.c.h.b16 %v43
  %v487 = vunpack.c.l.b16 %v44
  %v488 = vunpack.c.h.b16 %v44
  %v489 = vunpack.c.l.b16 %v45
  %v490 = vunpack.c.h.b16 %v45
  %v491 = vunpack.c.l.b16 %v46
  %v492 = vunpack.c.h.b16 %v46
  %v493 = vunpack.c.l.b16 %v47
  %v494 = vunpack.c.h.b16 %v47
  %v495 = vunpack.c.l.b16 %v48
  %v496 = vunpack.c.h.b16 %v48
  %v497 = vunpack.c.l.b16 %v49
  %v498 = vunpack.c.h.b16 %v49
  %v499 = vunpack.c.l.b16 %v50
  %v500 = vunpack.c.h.b16 %v50
  %v501 = vunpack.c.l.b16 %v51
  %v502 = vunpack.c.h.b16 %v51
  %v503 = vunpack.c.l.b16 %v52
  %v504 = vunpack.c.h.b16 %v52
  %v505 = vunpack.c.l.b16 %v53
  %v506 = vunpack.c.h.b16 %v53
  %v507 = vunpack.c.l.b16 %v54
  %v508 = vunpack.c.h.b16 %v54
  %v509 = vunpack.c.l.b16 %v55
  %v510 = vunpack.c.h.b16 %v55
  %v511 = vunpack.c.l.b16 %v56
  %v512 = vunpack.c.h.b16 %v56
  %v513 = vunpack.c.l.b16 %v57
  %v514 = vunpack.c.h.b16 %v57
  %v515 = vunpack.c.l.b16 %v58
  %v516 = vunpack.c.h.b16 %v58
  %v517 = vunpack.c.l.b16 %v59
  %v518 = vunpack.c.h.b16 %v59
  %v519 = vunpack.c.l.b16 %v60
  %v520 = vunpack.c.h.b16 %v60
  %v521 = vunpack.c.l.b16 %v61
  %v522 = vunpack.c.h.b16 %v61
  %v523 = vunpack.c.l.b16 %v62
  %v524 = vunpack.c.h.b16 %v62
  %v525 = vunpack.c.l.b16 %v63
  %v526 = vunpack.c.h.b16 %v63
  %v527 = vunpack.c.l.b16 %v64
  %v528 = vunpack.c.h.b16 %v64
  %v529 = vunpack.c.l.b16 %v65
  %v530 = vunpack.c.h.b16 %v65
  %v531 = vunpack.c.l.b16 %v66
  %v532 = vunpack.c.h.b16 %v66
  %v533 = vunpack.c.l.b16 %v67
  %v534 = vunpack.c.h.b16 %v67
  %v535 = vunpack.c.l.b16 %v68
  %v536 = vunpack.c.h.b16 %v68
  %v537 = vunpack.c.l.b16 %v69
  %v538 = vunpack.c.h.b16 %v69
  %v539 = vunpack.c.l.b16 %v70
  %v540 = vunpack.c.h.b16 %v70
  %v541 = vunpack.c.l.b16 %v71
  %v542 = vunpack.c.h.b16 %v71
  %v543 = vunpack.c.l.b16 %v72
  %v544 = vunpack.c.h.b16 %v72
  %v545 = vunpack.c.l.b16 %v73
  %v546 = vunpack.c.h.b16 %v73
  %v547 = vunpack.c.l.b16 %v74
  %v548 = vunpack.c.h.b16 %v74
  %v549 = vunpack.c.l.b16 %v75
  %v550 = vunpack.c.h.b16 %v75
  %v551 = vunpack.c.l.b16 %v76
  %v552 = vunpack.c.h.b16 %v76
  %v553 = vunpack.c.l.b16 %v77
  %v554 = vunpack.c.h.b16 %v77
  %v555 = vunpack.c.l.b16 %v78
  %v556 = vunpack.c.h.b16 %v78
  %v557 = vunpack.c.l.b16 %v79
  %v558 = vunpack.c.h.b16 %v79
  %v559 = vunpack.c.l.b16 %v80
  %v560 = vunpack.c.h.b16 %v80
  %v561 = vunpack.c.l.b16 %v81
  %v562 = vunpack.c.h.b16 %v81
  %v563 = vunpack.c.l.b16 %v82
  %v564 = vunpack.c.h.b16 %v82
  %v565 = vunpack.c.l.b16 %v83
  %v566 = vunpack.c.h.b16 %v83
  %v567 = vunpack.c.l.b16 %v84
  %v568 = vunpack.c.h.b16 %v84
  %v569 = vunpack.c.l.b16 %v85
  %v570 = vunpack.c.h.b16 %v85
  %v571 = vunpack.c.l.b16 %v86
  %v572 = vunpack.c.h.b16 %v86
  %v573 = vunpack.c.l.b16 %v87
  %v574 = vunpack.c.h.b16 %v87
  %v575 = vunpack.c.l.b16 %v88
  %v576 = vunpack.c.h.b16 %v88
  %v577 = vunpack.c.l.b16 %v89
  %v578 = vunpack.c.h.b16 %v89
  %v579 = vunpack.c.l.b16 %v90
  %v580 = vunpack.c.h.b16 %v90
  %v581 = vunpack.c.l.b16 %v91
  %v582 = vunpack.c.h.b16 %v91
  %v583 = vunpack.c.l.b16 %v92
  %v584 = vunpack.c.h.b16 %v92
  %v585 = vunpack.c.l.b16 %v93
  %v586 = vunpack.c.h.b16 %v93
  %v587 = vunpack.c.l.b16 %v94
  %v588 = vunpack.c.h.b16 %v94
  %v589 = vunpack.c.l.b16 %v95
  %v590 = vunpack.c.h.b16 %v95
  %v591 = vunpack.c.l.b16 %v96
  %v592 = vunpack.c.h.b16 %v96
  %v593 = vunpack.c.l.b16 %v97
  %v594 = vunpack.c.h.b16 %v97
  %v595 = vunpack.c.l.b16 %v98
  %v596 = vunpack.c.h.b16 %v98
  %v597 = vunpack.c.l.b16 %v99
  %v598 = vunpack.c.h.b16 %v99
  %v599 = vunpack.c.l.b16 %v100
  %v600 = vunpack.c.h.b16 %v100
  %v601 = vunpack.c.l.b16 %v101
  %v602 = vunpack.c.h.b16 %v101
  %v603 = vunpack.c.l.b16 %v102
  %v604 = vunpack.c.h.b16 %v102
  %v605 = vunpack.c.l.b16 %v103
  %v606 = vunpack.c.h.b16 %v103
  %v607 = vunpack.c.l.b16 %v104
  %v608 = vunpack.c.h.b16 %v104
  %v609 = vunpack.c.l.b16 %v105
  %v610 = vunpack.c.h.b16 %v105
  %v611 = vunpack.c.l.b16 %v106
  %v612 = vunpack.c.h.b16 %v106
  %v613 = vunpack.c.l.b16 %v107
  %v614 = vunpack.c.h.b16 %v107
  %v615 = vunpack.c.l.b16 %v108
  %v616 = vunpack.c.h.b16 %v108
  %v617 = vunpack.c.l.b16 %v109
  %v618 = vunpack.c.h.b16 %v109
  %v619 = vunpack.c.l.b16 %v110
  %v620 = vunpack.c.h.b16 %v110
  %v621 = vunpack.c.l.b16 %v111
  %v622 = vunpack.c.h.b16 %v111
  %v623 = vunpack.c.l.b16 %v112
  %v624 = vunpack.c.h.b16 %v112
  %v625 = vunpack.c.l.b16 %v113
  %v626 = vunpack.c.h.b16 %v113
  %v627 = vunpack.c.l.b16 %v114
  %v628 = vunpack.c.h.b16 %v114
  %v629 = vunpack.c.l.b16 %v115
  %v630 = vunpack.c.h.b16 %v115
  %v631 = vunpack.c.l.b16 %v116
  %v632 = vunpack.c.h.b16 %v116
  %v633 = vunpack.c.l.b16 %v117
  %v634 = vunpack.c.h.b16 %v117
  %v635 = vunpack.c.l.b16 %v118
  %v636 = vunpack.c.h.b16 %v118
  %v637 = vunpack.c.l.b16 %v119
  %v638 = vunpack.c.h.b16 %v119
  %v639 = vunpack.c.l.b16 %v120
  %v640 = vunpack.c.h.b16 %v120
  %v641 = vunpack.c.l.b16 %v121
  %v642 = vunpack.c.h.b16 %v121
  %v643 = vunpack.c.l.b16 %v122
  %v644 = vunpack.c.h.b16 %v122
  %v645 = vunpack.c.l.b16 %v123
  %v646 = vunpack.c.h.b16 %v123
  %v647 = vunpack.c.l.b16 %v124
  %v648 = vunpack.c.h.b16 %v124
  %v649 = vunpack.c.l.b16 %v125
  %v650 = vunpack.c.h.b16 %v125
  %v651 = vunpack.c.l.b16 %v126
  %v652 = vunpack.c.h.b16 %v126
  %v653 = vunpack.c.l.b16 %v127
  %v654 = vunpack.c.h.b16 %v127
  %v655 = vunpack.c.l.b16 %v128
  %v656 = vunpack.c.h.b16 %v128
  %v657 = vunpack.c.l.b16 %v129
  %v658 = vunpack.c.h.b16 %v129
  %v659 = vunpack.c.l.b16 %v130
  %v660 = vunpack.c.h.b16 %v130
  %v661 = vunpack.c.l.b16 %v131
  %v662 = vunpack.c.h.b16 %v131
  %v663 = vunpack.c.l.b16 %v132
  %v664 = vunpack.c.h.b16 %v132
  %v665 = vunpack.c.l.b16 %v133
  %v666 = vunpack.c.h.b16 %v133
  %v667 = vunpack.c.l.b16 %v134
  %v668 = vunpack.c.h.b16 %v134
  %v669 = vunpack.c.l.b16 %v135
  %v670 = vunpack.c.h.b16 %v135
  %v671 = vunpack.c.l.b16 %v136
  %v672 = vunpack.c.h.b16 %v136
  %v673 = vunpack.c.l.b16 %v137
  %v674 = vunpack.c.h.b16 %v137
  %v675 = vunpack.c.l.b16 %v138
  %v676 = vunpack.c.h.b16 %v138
  %v677 = vunpack.c.l.b16 %v139
  %v678 = vunpack.c.h.b16 %v139
  %v679 = vunpack.c.l.b16 %v140
  %v680 = vunpack.c.h.b16 %v140
  %v681 = vunpack.c.l.b16 %v141
  %v682 = vunpack.c.h.b16 %v141
  %v683 = vunpack.c.l.b16 %v142
  %v684 = vunpack.c.h.b16 %v142
  %v685 = vunpack.c.l.b16 %v143
  %v686 = vunpack.c.h.b16 %v143
  %v687 = vunpack.c.l.b16 %v144
  %v688 = vunpack.c.h.b16 %v144
  %v689 = vunpack.c.l.b16 %v145
  %v690 = vunpack.c.h.b16 %v145
  %v691 = vunpack.c.l.b16 %v146
  %v692 = vunpack.c.h.b16 %v146
  %v693 = vunpack.c.l.b16 %v147
  %v694 = vunpack.c.h.b16 %v147
  %v695 = vunpack.c.l.b16 %v148
  %v696 = vunpack.c.h.b16 %v148
  %v697 = vunpack.c.l.b16 %v149
  %v698 = vunpack.c.h.b16 %v149
  %v699 = vunpack.c.l.b16 %v150
  %v700 = vunpack.c.h.b16 %v150
  %v701 = vunpack.c.l.b16 %v151
  %v702 = vunpack.c.h.b16 %v151
  %v703 = vunpack.c.l.b16 %v152
  %v704 = vunpack.c.h.b16 %v152
  %v705 = vunpack.c.l.b16 %v153
  %v706 = vunpack.c.h.b16 %v153
  %v707 = vunpack.c.l.b16 %v154
  %v708 = vunpack.c.h.b16 %v154
  %v709 = vunpack.c.l.b16 %v155
  %v710 = vunpack.c.h.b16 %v155
  %v711 = vunpack.c.l.b16 %v156
  %v712 = vunpack.c.h.b16 %v156
  %v713 = vunpack.c.l.b16 %v157
  %v714 = vunpack.c.h.b16 %v157
  %v715 = vunpack.c.l.b16 %v158
  %v716 = vunpack.c.h.b16 %v158
  %v717 = vunpack.c.l.b16 %v159
  %v718 = vunpack.c.h.b16 %v159
  %v719 = vunpack.c.l.b16 %v160
  %v720 = vunpack.c.h.b16 %v160
  %v721 = vunpack.c.l.b16 %v161
  %v722 = vunpack.c.h.b16 %v161
  %v723 = vunpack.c.l.b16 %v162
  %v724 = vunpack.c.h.b16 %v162
  %v725 = vunpack.c.l.b16 %v163
  %v726 = vunpack.c.h.b16 %v163
  %v727 = vunpack.c.l.b16 %v164
  %v728 = vunpack.c.h.b16 %v164
  %v729 = vunpack.c.l.b16 %v165
  %v730 = vunpack.c.h.b16 %v165
  %v731 = vunpack.c.l.b16 %v166
  %v732 = vunpack.c.h.b16 %v166
  %v733 = vunpack.c.l.b16 %v167
  %v734 = vunpack.c.h.b16 %v167
  %v735 = vunpack.c.l.b16 %v168
  %v736 = vunpack.c.h.b16 %v168
  %v737 = vunpack.c.l.b16 %v169
  %v738 = vunpack.c.h.b16 %v169
  %v739 = vunpack.c.l.b16 %v170
  %v740 = vunpack.c.h.b16 %v170
  %v741 = vunpack.c.l.b16 %v171
  %v742 = vunpack.c.h.b16 %v171
  %v743 = vunpack.c.l.b16 %v172
  %v744 = vunpack.c.h.b16 %v172
  %v745 = vunpack.c.l.b16 %v173
  %v746 = vunpack.c.h.b16 %v173
  %v747 = vunpack.c.l.b16 %v174
  %v748 = vunpack.c.h.b16 %v174
  %v749 = vunpack.c.l.b16 %v175
  %v750 = vunpack.c.h.b16 %v175
  %v751 = vunpack.c.l.b16 %v176
  %v752 = vunpack.c.h.b16 %v176
  %v753 = vunpack.c.l.b16 %v177
  %v754 = vunpack.c.h.b16 %v177
  %v755 = vunpack.c.l.b16 %v178
  %v756 = vunpack.c.h.b16 %v178
  %v757 = vunpack.c.l.b16 %v179
  %v758 = vunpack.c.h.b16 %v179
  %v759 = vunpack.c.l.b16 %v180
  %v760 = vunpack.c.h.b16 %v180
  %v761 = vunpack.c.l.b16 %v181
  %v762 = vunpack.c.h.b16 %v181
  %v763 = vunpack.c.l.b16 %v182
  %v764 = vunpack.c.h.b16 %v182
  %v765 = vunpack.c.l.b16 %v183
  %v766 = vunpack.c.h.b16 %v183
  %v767 = vunpack.c.l.b16 %v184
  %v768 = vunpack.c.h.b16 %v184
  %v769 = vunpack.c.l.b16 %v185
  %v770 = vunpack.c.h.b16 %v185
  %v771 = vunpack.c.l.b16 %v186
  %v772 = vunpack.c.h.b16 %v186
  %v773 = vunpack.c.l.b16 %v187
  %v774 = vunpack.c.h.b16 %v187
  %v775 = vunpack.c.l.b16 %v188
  %v776 = vunpack.c.h.b16 %v188
  %v777 = vunpack.c.l.b16 %v189
  %v778 = vunpack.c.h.b16 %v189
  %v779 = vunpack.c.l.b16 %v190
  %v780 = vunpack.c.h.b16 %v190
  %v781 = vunpack.c.l.b16 %v191
  %v782 = vunpack.c.h.b16 %v191
  %v783 = vunpack.c.l.b16 %v192
  %v784 = vunpack.c.h.b16 %v192
  %v785 = vunpack.c.l.b16 %v193
  %v786 = vunpack.c.h.b16 %v193
  %v787 = vunpack.c.l.b16 %v194
  %v788 = vunpack.c.h.b16 %v194
  %v789 = vunpack.c.l.b16 %v195
  %v790 = vunpack.c.h.b16 %v195
  %v791 = vunpack.c.l.b16 %v196
  %v792 = vunpack.c.h.b16 %v196
  %v793 = vunpack.c.l.b16 %v197
  %v794 = vunpack.c.h.b16 %v197
  %v795 = vunpack.c.l.b16 %v198
  %v796 = vunpack.c.h.b16 %v198
  %v797 = vunpack.c.l.b16 %v199
  %v798 = vunpack.c.h.b16 %v199
  %v799 = vunpack.c.l.b16 %v200
  %v800 = vunpack.c.h.b16 %v200
  %v801 = vunpack.c.l.b16 %v201
  %v802 = vunpack.c.h.b16 %v201
  %v803 = vunpack.c.l.b16 %v202
  %v804 = vunpack.c.h.b16 %v202
  %v805 = vunpack.c.l.b16 %v203
  %v806 = vunpack.c.h.b16 %v203
  %v807 = vunpack.c.l.b16 %v204
  %v808 = vunpack.c.h.b16 %v204
  %v809 = vunpack.c.l.b16 %v205
  %v810 = vunpack.c.h.b16 %v205
  %v811 = vunpack.c.l.b16 %v206
  %v812 = vunpack.c.h.b16 %v206
  %v813 = vunpack.c.l.b16 %v207
  %v814 = vunpack.c.h.b16 %v207
  %v815 = vunpack.c.l.b16 %v208
  %v816 = vunpack.c.h.b16 %v208
  %v817 = vunpack.c.l.b16 %v209
  %v818 = vunpack.c.h.b16 %v209
  %v819 = vunpack.c.l.b16 %v210
  %v820 = vunpack.c.h.b16 %v210
  %v821 = vunpack.c.l.b16 %v211
  %v822 = vunpack.c.h.b16 %v211
  %v823 = vunpack.c.l.b16 %v212
  %v824 = vunpack.c.h.b16 %v212
  %v825 = vpack.c.b16 %v437, %v433
  %v826 = vpack.c.b16 %v438, %v434
  %v827 = vpack.c.b16 %v439, %v435
  %v828 = vpack.c.b16 %v440, %v436
  %v829 = vpack.c.b16 %v445, %v441
  %v830 = vpack.c.b16 %v446, %v442
  %v831 = vpack.c.b16 %v447, %v443
  %v832 = vpack.c.b16 %v448, %v444
  %v833 = vpack.c.b16 %v453, %v449
  %v834 = vpack.c.b16 %v454, %v450
  %v835 = vpack.c.b16 %v455, %v451
  %v836 = vpack.c.b16 %v456, %v452
  %v837 = vpack.c.b16 %v461, %v457
  %v838 = vpack.c.b16 %v462, %v458
  %v839 = vpack.c.b16 %v463, %v459
  %v840 = vpack.c.b16 %v464, %v460
  %v841 = vpack.c.b16 %v469, %v465
  %v842 = vpack.c.b16 %v470, %v466
  %v843 = vpack.c.b16 %v471, %v467
  %v844 = vpack.c.b16 %v472, %v468
  %v845 = vpack.c.b16 %v477, %v473
  %v846 = vpack.c.b16 %v478, %v474
  %v847 = vpack.c.b16 %v479, %v475
  %v848 = vpack.c.b16 %v480, %v476
  %v849 = vpack.c.b16 %v485, %v481
  %v850 = vpack.c.b16 %v486, %v482
  %v851 = vpack.c.b16 %v487, %v483
  %v852 = vpack.c.b16 %v488, %v484
  %v853 = vpack.c.b16 %v493, %v489
  %v854 = vpack.c.b16 %v494, %v490
  %v855 = vpack.c.b16 %v495, %v491
  %v856 = vpack.c.b16 %v496, %v492
  %v857 = vpack.c.b16 %v501, %v497
  %v858 = vpack.c.b16 %v502, %v498
  %v859 = vpack.c.b16 %v503, %v499
  %v860 = vpack.c.b16 %v504, %v500
  %v861 = vpack.c.b16 %v509, %v505
  %v862 = vpack.c.b16 %v510, %v506
  %v863 = vpack.c.b16 %v511, %v507
  %v864 = vpack.c.b16 %v512, %v508
  %v865 = vpack.c.b16 %v517, %v513
  %v866 = vpack.c.b16 %v518, %v514
  %v867 = vpack.c.b16 %v519, %v515
  %v868 = vpack.c.b16 %v520, %v516
  %v869 = vpack.c.b16 %v525, %v521
  %v870 = vpack.c.b16 %v526, %v522
  %v871 = vpack.c.b16 %v527, %v523
  %v872 = vpack.c.b16 %v528, %v524
  %v873 = vpack.c.b16 %v533, %v529
  %v874 = vpack.c.b16 %v534, %v530
  %v875 = vpack.c.b16 %v535, %v531
  %v876 = vpack.c.b16 %v536, %v532
  %v877 = vpack.c.b16 %v541, %v537
  %v878 = vpack.c.b16 %v542, %v538
  %v879 = vpack.c.b16 %v543, %v539
  %v880 = vpack.c.b16 %v544, %v540
  %v881 = vpack.c.b16 %v549, %v545
  %v882 = vpack.c.b16 %v550, %v546
  %v883 = vpack.c.b16 %v551, %v547
  %v884 = vpack.c.b16 %v552, %v548
  %v885 = vpack.c.b16 %v557, %v553
  %v886 = vpack.c.b16 %v558, %v554
  %v887 = vpack.c.b16 %v559, %v555
  %v888 = vpack.c.b16 %v560, %v556
  %v889 = vpack.c.b16 %v565, %v561
  %v890 = vpack.c.b16 %v566, %v562
  %v891 = vpack.c.b16 %v567, %v563
  %v892 = vpack.c.b16 %v568, %v564
  %v893 = vpack.c.b16 %v573, %v569
  %v894 = vpack.c.b16 %v574, %v570
  %v895 = vpack.c.b16 %v575, %v571
  %v896 = vpack.c.b16 %v576, %v572
  %v897 = vpack.c.b16 %v581, %v577
  %v898 = vpack.c.b16 %v582, %v578
  %v899 = vpack.c.b16 %v583, %v579
  %v900 = vpack.c.b16 %v584, %v580
  %v901 = vpack.c.b16 %v589, %v585
  %v902 = vpack.c.b16 %v590, %v586
  %v903 = vpack.c.b16 %v591, %v587
  %v904 = vpack.c.b16 %v592, %v588
  %v905 = vpack.c.b16 %v597, %v593
  %v906 = vpack.c.b16 %v598, %v594
  %v907 = vpack.c.b16 %v599, %v595
  %v908 = vpack.c.b16 %v600, %v596
  %v909 = vpack.c.b16 %v605, %v601
  %v910 = vpack.c.b16 %v606, %v602
  %v911 = vpack.c.b16 %v607, %v603
  %v912 = vpack.c.b16 %v608, %v604
  %v913 = vpack.c.b16 %v613, %v609
  %v914 = vpack.c.b16 %v614, %v610
  %v915 = vpack.c.b16 %v615, %v611
  %v916 = vpack.c.b16 %v616, %v612
  %v917 = vpack.c.b16 %v621, %v617
  %v918 = vpack.c.b16 %v622, %v618
  %v919 = vpack.c.b16 %v623, %v619
  %v920 = vpack.c.b16 %v624, %v620
  %v921 = vpack.c.b16 %v629, %v625
  %v922 = vpack.c.b16 %v630, %v626
  %v923 = vpack.c.b16 %v631, %v627
  %v924 = vpack.c.b16 %v632, %v628
  %v925 = vpack.c.b16 %v637, %v633
  %v926 = vpack.c.b16 %v638, %v634
  %v927 = vpack.c.b16 %v639, %v635
  %v928 = vpack.c.b16 %v640, %v636
  %v929 = vpack.c.b16 %v645, %v641
  %v930 = vpack.c.b16 %v646, %v642
  %v931 = vpack.c.b16 %v647, %v643
  %v932 = vpack.c.b16 %v648, %v644
  %v933 = vpack.c.b16 %v653, %v649
  %v934 = vpack.c.b16 %v654, %v650
  %v935 = vpack.c.b16 %v655, %v651
  %v936 = vpack.c.b16 %v656, %v652
  %v937 = vpack.c.b16 %v661, %v657
  %v938 = vpack.c.b16 %v662, %v658
  %v939 = vpack.c.b16 %v663, %v659
  %v940 = vpack.c.b16 %v664, %v660
  %v941 = vpack.c.b16 %v669, %v665
  %v942 = vpack.c.b16 %v670, %v666
  %v943 = vpack.c.b16 %v671, %v667
  %v944 = vpack.c.b16 %v672, %v668
  %v945 = vpack.c.b16 %v677, %v673
  %v946 = vpack.c.b16 %v678, %v674
  %v947 = vpack.c.b16 %v679, %v675
  %v948 = vpack.c.b16 %v680, %v676
  %v949 = vpack.c.b16 %v685, %v681
  %v950 = vpack.c.b16 %v686, %v682
  %v951 = vpack.c.b16 %v687, %v683
  %v952 = vpack.c.b16 %v688, %v684
  %v953 = vpack.c.b16 %v693, %v689
  %v954 = vpack.c.b16 %v694, %v690
  %v955 = vpack.c.b16 %v695, %v691
  %v956 = vpack.c.b16 %v696, %v692
  %v957 = vpack.c.b16 %v701, %v697
  %v958 = vpack.c.b16 %v702, %v698
  %v959 = vpack.c.b16 %v703, %v699
  %v960 = vpack.c.b16 %v704, %v700
  %v961 = vpack.c.b16 %v709, %v705
  %v962 = vpack.c.b16 %v710, %v706
  %v963 = vpack.c.b16 %v711, %v707
  %v964 = vpack.c.b16 %v712, %v708
  %v965 = vpack.c.b16 %v717, %v713
  %v966 = vpack.c.b16 %v718, %v714
  %v967 = vpack.c.b16 %v719, %v715
  %v968 = vpack.c.b16 %v720, %v716
  %v969 = vpack.c.b16 %v725, %v721
  %v970 = vpack.c.b16 %v726, %v722
  %v971 = vpack.c.b16 %v727, %v723
  %v972 = vpack.c.b16 %v728, %v724
  %v973 = vpack.c.b16 %v733, %v729
  %v974 = vpack.c.b16 %v734, %v730
  %v975 = vpack.c.b16 %v735, %v731
  %v976 = vpack.c.b16 %v736, %v732
  %v977 = vpack.c.b16 %v741, %v737
  %v978 = vpack.c.b16 %v742, %v738
  %v979 = vpack.c.b16 %v743, %v739
  %v980 = vpack.c.b16 %v744, %v740
  %v981 = vpack.c.b16 %v749, %v745
  %v982 = vpack.c.b16 %v750, %v746
  %v983 = vpack.c.b16 %v751, %v747
  %v984 = vpack.c.b16 %v752, %v748
  %v985 = vpack.c.b16 %v757, %v753
  %v986 = vpack.c.b16 %v758, %v754
  %v987 = vpack.c.b16 %v759, %v755
  %v988 = vpack.c.b16 %v760, %v756
  %v989 = vpack.c.b16 %v765, %v761
  %v990 = vpack.c.b16 %v766, %v762
  %v991 = vpack.c.b16 %v767, %v763
  %v992 = vpack.c.b16 %v768, %v764
  %v993 = vpack.c.b16 %v773, %v769
  %v994 = vpack.c.b16 %v774, %v770
  %v995 = vpack.c.b16 %v775, %v771
  %v996 = vpack.c.b16 %v776, %v772
  %v997 = vpack.c.b16 %v781, %v777
  %v998 = vpack.c.b16 %v782, %v778
  %v999 = vpack.c.b16 %v783, %v779
  %v1000 = vpack.c.b16 %v784, %v780
  %v1001 = vpack.c.b16 %v789, %v785
  %v1002 = vpack.c.b16 %v790, %v786
  %v1003 = vpack.c.b16 %v791, %v787
  %v1004 = vpack.c.b16 %v792, %v788
  %v1005 = vpack.c.b16 %v797, %v793
  %v1006 = vpack.c.b16 %v798, %v794
  %v1007 = vpack.c.b16 %v799, %v795
  %v1008 = vpack.c.b16 %v800, %v796
  %v1009 = vpack.c.b16 %v805, %v801
  %v1010 = vpack.c.b16 %v806, %v802
  %v1011 = vpack.c.b16 %v807, %v803
  %v1012 = vpack.c.b16 %v808, %v804
  %v1013 = vpack.c.b16 %v813, %v809
  %v1014 = vpack.c.b16 %v814, %v810
  %v1015 = vpack.c.b16 %v815, %v811
  %v1016 = vpack.c.b16 %v816, %v812
  %v1017 = vpack.c.b16 %v821, %v817
  %v1018 = vpack.c.b16 %v822, %v818
  %v1019 = vpack.c.b16 %v823, %v819
  %v1020 = vpack.c.b16 %v824, %v820
  %vm1217 = vcmask 130048
  %v1218 = vsel %vm1217, %v230, 0
  %1220 = vmatpush.bf16.msra.mxu0 %v853
  %1221 = vmatpush.bf16.msra.mxu0 %v849
  %1222 = vmatpush.bf16.msra.mxu0 %v845
  %1223 = vmatpush.bf16.msra.mxu0 %v841
  %1224 = vmatpush.bf16.msra.mxu0 %v837
  %1225 = vmatpush.bf16.msra.mxu0 %v833
  %1226 = vmatpush.bf16.msra.mxu0 %v829
  %1227 = vmatpush.bf16.msra.mxu0 %v825
  %1228 = vmatmul.bf16.gmra.mxu0 %v224
  %v1229 = vpop.f32.mrf.mxu0
  %v1230 = vadd.f32 %v217, %v1229
  %v1231 = vpop.f32.mrf.mxu0
  %1232 = vdwg.mxu0
  %1233 = vmatpush.bf16.msra.mxu0 %v885
  %1234 = vmatpush.bf16.msra.mxu0 %v881
  %1235 = vmatpush.bf16.msra.mxu0 %v877
  %1236 = vmatpush.bf16.msra.mxu0 %v873
  %1237 = vmatpush.bf16.msra.mxu0 %v869
  %1238 = vmatpush.bf16.msra.mxu0 %v865
  %1239 = vmatpush.bf16.msra.mxu0 %v861
  %1240 = vmatpush.bf16.msra.mxu0 %v857
  %1241 = vmatmul.bf16.gmra.mxu0 %v225
  %v1242 = vpop.f32.mrf.mxu0
  %v1243 = vadd.f32 %v1230, %v1242
  %v1244 = vpop.f32.mrf.mxu0
  %1245 = vdwg.mxu0
  %1246 = vmatpush.bf16.msra.mxu0 %v917
  %1247 = vmatpush.bf16.msra.mxu0 %v913
  %1248 = vmatpush.bf16.msra.mxu0 %v909
  %1249 = vmatpush.bf16.msra.mxu0 %v905
  %1250 = vmatpush.bf16.msra.mxu0 %v901
  %1251 = vmatpush.bf16.msra.mxu0 %v897
  %1252 = vmatpush.bf16.msra.mxu0 %v893
  %1253 = vmatpush.bf16.msra.mxu0 %v889
  %1254 = vmatmul.bf16.gmra.mxu0 %v226
  %v1255 = vpop.f32.mrf.mxu0
  %v1256 = vadd.f32 %v1243, %v1255
  %v1257 = vpop.f32.mrf.mxu0
  %1258 = vdwg.mxu0
  %1259 = vmatpush.bf16.msra.mxu0 %v949
  %1260 = vmatpush.bf16.msra.mxu0 %v945
  %1261 = vmatpush.bf16.msra.mxu0 %v941
  %1262 = vmatpush.bf16.msra.mxu0 %v937
  %1263 = vmatpush.bf16.msra.mxu0 %v933
  %1264 = vmatpush.bf16.msra.mxu0 %v929
  %1265 = vmatpush.bf16.msra.mxu0 %v925
  %1266 = vmatpush.bf16.msra.mxu0 %v921
  %1267 = vmatmul.bf16.gmra.mxu0 %v227
  %v1268 = vpop.f32.mrf.mxu0
  %v1269 = vadd.f32 %v1256, %v1268
  %v1270 = vpop.f32.mrf.mxu0
  %1271 = vdwg.mxu0
  %1272 = vmatpush.bf16.msra.mxu0 %v981
  %1273 = vmatpush.bf16.msra.mxu0 %v977
  %1274 = vmatpush.bf16.msra.mxu0 %v973
  %1275 = vmatpush.bf16.msra.mxu0 %v969
  %1276 = vmatpush.bf16.msra.mxu0 %v965
  %1277 = vmatpush.bf16.msra.mxu0 %v961
  %1278 = vmatpush.bf16.msra.mxu0 %v957
  %1279 = vmatpush.bf16.msra.mxu0 %v953
  %1280 = vmatmul.bf16.gmra.mxu0 %v228
  %v1281 = vpop.f32.mrf.mxu0
  %v1282 = vadd.f32 %v1269, %v1281
  %v1283 = vpop.f32.mrf.mxu0
  %1284 = vdwg.mxu0
  %1285 = vmatpush.bf16.msra.mxu0 %v1013
  %1286 = vmatpush.bf16.msra.mxu0 %v1009
  %1287 = vmatpush.bf16.msra.mxu0 %v1005
  %1288 = vmatpush.bf16.msra.mxu0 %v1001
  %1289 = vmatpush.bf16.msra.mxu0 %v997
  %1290 = vmatpush.bf16.msra.mxu0 %v993
  %1291 = vmatpush.bf16.msra.mxu0 %v989
  %1292 = vmatpush.bf16.msra.mxu0 %v985
  %1293 = vmatmul.bf16.gmra.mxu0 %v229
  %v1294 = vpop.f32.mrf.mxu0
  %v1295 = vadd.f32 %v1282, %v1294
  %v1296 = vpop.f32.mrf.mxu0
  %1297 = vdwg.mxu0
  %1298 = vmatpush.bf16.msra.mxu0 0
  %1299 = vmatpush.bf16.msra.mxu0 0
  %1300 = vmatpush.bf16.msra.mxu0 0
  %1301 = vmatpush.bf16.msra.mxu0 0
  %1302 = vmatpush.bf16.msra.mxu0 0
  %1303 = vmatpush.bf16.msra.mxu0 0
  %1304 = vmatpush.bf16.msra.mxu0 0
  %1305 = vmatpush.bf16.msra.mxu0 %v1017
  %1306 = vmatmul.bf16.gmra.mxu0 %v1218
  %v1307 = vpop.f32.mrf.mxu0
  %v1308 = vadd.f32 %v1295, %v1307
  %v1309 = vpop.f32.mrf.mxu0
  %1310 = vdwg.mxu0
  %1311 = vmatpush.bf16.msra.mxu0 %v854
  %1312 = vmatpush.bf16.msra.mxu0 %v850
  %1313 = vmatpush.bf16.msra.mxu0 %v846
  %1314 = vmatpush.bf16.msra.mxu0 %v842
  %1315 = vmatpush.bf16.msra.mxu0 %v838
  %1316 = vmatpush.bf16.msra.mxu0 %v834
  %1317 = vmatpush.bf16.msra.mxu0 %v830
  %1318 = vmatpush.bf16.msra.mxu0 %v826
  %1319 = vmatmul.bf16.gmra.mxu0 %v224
  %v1320 = vpop.f32.mrf.mxu0
  %v1321 = vadd.f32 %v217, %v1320
  %v1322 = vpop.f32.mrf.mxu0
  %1323 = vdwg.mxu0
  %1324 = vmatpush.bf16.msra.mxu0 %v886
  %1325 = vmatpush.bf16.msra.mxu0 %v882
  %1326 = vmatpush.bf16.msra.mxu0 %v878
  %1327 = vmatpush.bf16.msra.mxu0 %v874
  %1328 = vmatpush.bf16.msra.mxu0 %v870
  %1329 = vmatpush.bf16.msra.mxu0 %v866
  %1330 = vmatpush.bf16.msra.mxu0 %v862
  %1331 = vmatpush.bf16.msra.mxu0 %v858
  %1332 = vmatmul.bf16.gmra.mxu0 %v225
  %v1333 = vpop.f32.mrf.mxu0
  %v1334 = vadd.f32 %v1321, %v1333
  %v1335 = vpop.f32.mrf.mxu0
  %1336 = vdwg.mxu0
  %1337 = vmatpush.bf16.msra.mxu0 %v918
  %1338 = vmatpush.bf16.msra.mxu0 %v914
  %1339 = vmatpush.bf16.msra.mxu0 %v910
  %1340 = vmatpush.bf16.msra.mxu0 %v906
  %1341 = vmatpush.bf16.msra.mxu0 %v902
  %1342 = vmatpush.bf16.msra.mxu0 %v898
  %1343 = vmatpush.bf16.msra.mxu0 %v894
  %1344 = vmatpush.bf16.msra.mxu0 %v890
  %1345 = vmatmul.bf16.gmra.mxu0 %v226
  %v1346 = vpop.f32.mrf.mxu0
  %v1347 = vadd.f32 %v1334, %v1346
  %v1348 = vpop.f32.mrf.mxu0
  %1349 = vdwg.mxu0
  %1350 = vmatpush.bf16.msra.mxu0 %v950
  %1351 = vmatpush.bf16.msra.mxu0 %v946
  %1352 = vmatpush.bf16.msra.mxu0 %v942
  %1353 = vmatpush.bf16.msra.mxu0 %v938
  %1354 = vmatpush.bf16.msra.mxu0 %v934
  %1355 = vmatpush.bf16.msra.mxu0 %v930
  %1356 = vmatpush.bf16.msra.mxu0 %v926
  %1357 = vmatpush.bf16.msra.mxu0 %v922
  %1358 = vmatmul.bf16.gmra.mxu0 %v227
  %v1359 = vpop.f32.mrf.mxu0
  %v1360 = vadd.f32 %v1347, %v1359
  %v1361 = vpop.f32.mrf.mxu0
  %1362 = vdwg.mxu0
  %1363 = vmatpush.bf16.msra.mxu0 %v982
  %1364 = vmatpush.bf16.msra.mxu0 %v978
  %1365 = vmatpush.bf16.msra.mxu0 %v974
  %1366 = vmatpush.bf16.msra.mxu0 %v970
  %1367 = vmatpush.bf16.msra.mxu0 %v966
  %1368 = vmatpush.bf16.msra.mxu0 %v962
  %1369 = vmatpush.bf16.msra.mxu0 %v958
  %1370 = vmatpush.bf16.msra.mxu0 %v954
  %1371 = vmatmul.bf16.gmra.mxu0 %v228
  %v1372 = vpop.f32.mrf.mxu0
  %v1373 = vadd.f32 %v1360, %v1372
  %v1374 = vpop.f32.mrf.mxu0
  %1375 = vdwg.mxu0
  %1376 = vmatpush.bf16.msra.mxu0 %v1014
  %1377 = vmatpush.bf16.msra.mxu0 %v1010
  %1378 = vmatpush.bf16.msra.mxu0 %v1006
  %1379 = vmatpush.bf16.msra.mxu0 %v1002
  %1380 = vmatpush.bf16.msra.mxu0 %v998
  %1381 = vmatpush.bf16.msra.mxu0 %v994
  %1382 = vmatpush.bf16.msra.mxu0 %v990
  %1383 = vmatpush.bf16.msra.mxu0 %v986
  %1384 = vmatmul.bf16.gmra.mxu0 %v229
  %v1385 = vpop.f32.mrf.mxu0
  %v1386 = vadd.f32 %v1373, %v1385
  %v1387 = vpop.f32.mrf.mxu0
  %1388 = vdwg.mxu0
  %1389 = vmatpush.bf16.msra.mxu0 0
  %1390 = vmatpush.bf16.msra.mxu0 0
  %1391 = vmatpush.bf16.msra.mxu0 0
  %1392 = vmatpush.bf16.msra.mxu0 0
  %1393 = vmatpush.bf16.msra.mxu0 0
  %1394 = vmatpush.bf16.msra.mxu0 0
  %1395 = vmatpush.bf16.msra.mxu0 0
  %1396 = vmatpush.bf16.msra.mxu0 %v1018
  %1397 = vmatmul.bf16.gmra.mxu0 %v1218
  %v1398 = vpop.f32.mrf.mxu0
  %v1399 = vadd.f32 %v1386, %v1398
  %v1400 = vpop.f32.mrf.mxu0
  %1401 = vdwg.mxu0
  %1402 = vmatpush.bf16.msra.mxu0 %v855
  %1403 = vmatpush.bf16.msra.mxu0 %v851
  %1404 = vmatpush.bf16.msra.mxu0 %v847
  %1405 = vmatpush.bf16.msra.mxu0 %v843
  %1406 = vmatpush.bf16.msra.mxu0 %v839
  %1407 = vmatpush.bf16.msra.mxu0 %v835
  %1408 = vmatpush.bf16.msra.mxu0 %v831
  %1409 = vmatpush.bf16.msra.mxu0 %v827
  %1410 = vmatmul.bf16.gmra.mxu0 %v224
  %v1411 = vpop.f32.mrf.mxu0
  %v1412 = vadd.f32 %v217, %v1411
  %v1413 = vpop.f32.mrf.mxu0
  %1414 = vdwg.mxu0
  %1415 = vmatpush.bf16.msra.mxu0 %v887
  %1416 = vmatpush.bf16.msra.mxu0 %v883
  %1417 = vmatpush.bf16.msra.mxu0 %v879
  %1418 = vmatpush.bf16.msra.mxu0 %v875
  %1419 = vmatpush.bf16.msra.mxu0 %v871
  %1420 = vmatpush.bf16.msra.mxu0 %v867
  %1421 = vmatpush.bf16.msra.mxu0 %v863
  %1422 = vmatpush.bf16.msra.mxu0 %v859
  %1423 = vmatmul.bf16.gmra.mxu0 %v225
  %v1424 = vpop.f32.mrf.mxu0
  %v1425 = vadd.f32 %v1412, %v1424
  %v1426 = vpop.f32.mrf.mxu0
  %1427 = vdwg.mxu0
  %1428 = vmatpush.bf16.msra.mxu0 %v919
  %1429 = vmatpush.bf16.msra.mxu0 %v915
  %1430 = vmatpush.bf16.msra.mxu0 %v911
  %1431 = vmatpush.bf16.msra.mxu0 %v907
  %1432 = vmatpush.bf16.msra.mxu0 %v903
  %1433 = vmatpush.bf16.msra.mxu0 %v899
  %1434 = vmatpush.bf16.msra.mxu0 %v895
  %1435 = vmatpush.bf16.msra.mxu0 %v891
  %1436 = vmatmul.bf16.gmra.mxu0 %v226
  %v1437 = vpop.f32.mrf.mxu0
  %v1438 = vadd.f32 %v1425, %v1437
  %v1439 = vpop.f32.mrf.mxu0
  %1440 = vdwg.mxu0
  %1441 = vmatpush.bf16.msra.mxu0 %v951
  %1442 = vmatpush.bf16.msra.mxu0 %v947
  %1443 = vmatpush.bf16.msra.mxu0 %v943
  %1444 = vmatpush.bf16.msra.mxu0 %v939
  %1445 = vmatpush.bf16.msra.mxu0 %v935
  %1446 = vmatpush.bf16.msra.mxu0 %v931
  %1447 = vmatpush.bf16.msra.mxu0 %v927
  %1448 = vmatpush.bf16.msra.mxu0 %v923
  %1449 = vmatmul.bf16.gmra.mxu0 %v227
  %v1450 = vpop.f32.mrf.mxu0
  %v1451 = vadd.f32 %v1438, %v1450
  %v1452 = vpop.f32.mrf.mxu0
  %1453 = vdwg.mxu0
  %1454 = vmatpush.bf16.msra.mxu0 %v983
  %1455 = vmatpush.bf16.msra.mxu0 %v979
  %1456 = vmatpush.bf16.msra.mxu0 %v975
  %1457 = vmatpush.bf16.msra.mxu0 %v971
  %1458 = vmatpush.bf16.msra.mxu0 %v967
  %1459 = vmatpush.bf16.msra.mxu0 %v963
  %1460 = vmatpush.bf16.msra.mxu0 %v959
  %1461 = vmatpush.bf16.msra.mxu0 %v955
  %1462 = vmatmul.bf16.gmra.mxu0 %v228
  %v1463 = vpop.f32.mrf.mxu0
  %v1464 = vadd.f32 %v1451, %v1463
  %v1465 = vpop.f32.mrf.mxu0
  %1466 = vdwg.mxu0
  %1467 = vmatpush.bf16.msra.mxu0 %v1015
  %1468 = vmatpush.bf16.msra.mxu0 %v1011
  %1469 = vmatpush.bf16.msra.mxu0 %v1007
  %1470 = vmatpush.bf16.msra.mxu0 %v1003
  %1471 = vmatpush.bf16.msra.mxu0 %v999
  %1472 = vmatpush.bf16.msra.mxu0 %v995
  %1473 = vmatpush.bf16.msra.mxu0 %v991
  %1474 = vmatpush.bf16.msra.mxu0 %v987
  %1475 = vmatmul.bf16.gmra.mxu0 %v229
  %v1476 = vpop.f32.mrf.mxu0
  %v1477 = vadd.f32 %v1464, %v1476
  %v1478 = vpop.f32.mrf.mxu0
  %1479 = vdwg.mxu0
  %1480 = vmatpush.bf16.msra.mxu0 0
  %1481 = vmatpush.bf16.msra.mxu0 0
  %1482 = vmatpush.bf16.msra.mxu0 0
  %1483 = vmatpush.bf16.msra.mxu0 0
  %1484 = vmatpush.bf16.msra.mxu0 0
  %1485 = vmatpush.bf16.msra.mxu0 0
  %1486 = vmatpush.bf16.msra.mxu0 0
  %1487 = vmatpush.bf16.msra.mxu0 %v1019
  %1488 = vmatmul.bf16.gmra.mxu0 %v1218
  %v1489 = vpop.f32.mrf.mxu0
  %v1490 = vadd.f32 %v1477, %v1489
  %v1491 = vpop.f32.mrf.mxu0
  %1492 = vdwg.mxu0
  %1493 = vmatpush.bf16.msra.mxu0 %v856
  %1494 = vmatpush.bf16.msra.mxu0 %v852
  %1495 = vmatpush.bf16.msra.mxu0 %v848
  %1496 = vmatpush.bf16.msra.mxu0 %v844
  %1497 = vmatpush.bf16.msra.mxu0 %v840
  %1498 = vmatpush.bf16.msra.mxu0 %v836
  %1499 = vmatpush.bf16.msra.mxu0 %v832
  %1500 = vmatpush.bf16.msra.mxu0 %v828
  %1501 = vmatmul.bf16.gmra.mxu0 %v224
  %v1502 = vpop.f32.mrf.mxu0
  %v1503 = vadd.f32 %v217, %v1502
  %v1504 = vpop.f32.mrf.mxu0
  %1505 = vdwg.mxu0
  %1506 = vmatpush.bf16.msra.mxu0 %v888
  %1507 = vmatpush.bf16.msra.mxu0 %v884
  %1508 = vmatpush.bf16.msra.mxu0 %v880
  %1509 = vmatpush.bf16.msra.mxu0 %v876
  %1510 = vmatpush.bf16.msra.mxu0 %v872
  %1511 = vmatpush.bf16.msra.mxu0 %v868
  %1512 = vmatpush.bf16.msra.mxu0 %v864
  %1513 = vmatpush.bf16.msra.mxu0 %v860
  %1514 = vmatmul.bf16.gmra.mxu0 %v225
  %v1515 = vpop.f32.mrf.mxu0
  %v1516 = vadd.f32 %v1503, %v1515
  %v1517 = vpop.f32.mrf.mxu0
  %1518 = vdwg.mxu0
  %1519 = vmatpush.bf16.msra.mxu0 %v920
  %1520 = vmatpush.bf16.msra.mxu0 %v916
  %1521 = vmatpush.bf16.msra.mxu0 %v912
  %1522 = vmatpush.bf16.msra.mxu0 %v908
  %1523 = vmatpush.bf16.msra.mxu0 %v904
  %1524 = vmatpush.bf16.msra.mxu0 %v900
  %1525 = vmatpush.bf16.msra.mxu0 %v896
  %1526 = vmatpush.bf16.msra.mxu0 %v892
  %1527 = vmatmul.bf16.gmra.mxu0 %v226
  %v1528 = vpop.f32.mrf.mxu0
  %v1529 = vadd.f32 %v1516, %v1528
  %v1530 = vpop.f32.mrf.mxu0
  %1531 = vdwg.mxu0
  %1532 = vmatpush.bf16.msra.mxu0 %v952
  %1533 = vmatpush.bf16.msra.mxu0 %v948
  %1534 = vmatpush.bf16.msra.mxu0 %v944
  %1535 = vmatpush.bf16.msra.mxu0 %v940
  %1536 = vmatpush.bf16.msra.mxu0 %v936
  %1537 = vmatpush.bf16.msra.mxu0 %v932
  %1538 = vmatpush.bf16.msra.mxu0 %v928
  %1539 = vmatpush.bf16.msra.mxu0 %v924
  %1540 = vmatmul.bf16.gmra.mxu0 %v227
  %v1541 = vpop.f32.mrf.mxu0
  %v1542 = vadd.f32 %v1529, %v1541
  %v1543 = vpop.f32.mrf.mxu0
  %1544 = vdwg.mxu0
  %1545 = vmatpush.bf16.msra.mxu0 %v984
  %1546 = vmatpush.bf16.msra.mxu0 %v980
  %1547 = vmatpush.bf16.msra.mxu0 %v976
  %1548 = vmatpush.bf16.msra.mxu0 %v972
  %1549 = vmatpush.bf16.msra.mxu0 %v968
  %1550 = vmatpush.bf16.msra.mxu0 %v964
  %1551 = vmatpush.bf16.msra.mxu0 %v960
  %1552 = vmatpush.bf16.msra.mxu0 %v956
  %1553 = vmatmul.bf16.gmra.mxu0 %v228
  %v1554 = vpop.f32.mrf.mxu0
  %v1555 = vadd.f32 %v1542, %v1554
  %v1556 = vpop.f32.mrf.mxu0
  %1557 = vdwg.mxu0
  %1558 = vmatpush.bf16.msra.mxu0 %v1016
  %1559 = vmatpush.bf16.msra.mxu0 %v1012
  %1560 = vmatpush.bf16.msra.mxu0 %v1008
  %1561 = vmatpush.bf16.msra.mxu0 %v1004
  %1562 = vmatpush.bf16.msra.mxu0 %v1000
  %1563 = vmatpush.bf16.msra.mxu0 %v996
  %1564 = vmatpush.bf16.msra.mxu0 %v992
  %1565 = vmatpush.bf16.msra.mxu0 %v988
  %1566 = vmatmul.bf16.gmra.mxu0 %v229
  %v1567 = vpop.f32.mrf.mxu0
  %v1568 = vadd.f32 %v1555, %v1567
  %v1569 = vpop.f32.mrf.mxu0
  %1570 = vdwg.mxu0
  %1571 = vmatpush.bf16.msra.mxu0 0
  %1572 = vmatpush.bf16.msra.mxu0 0
  %1573 = vmatpush.bf16.msra.mxu0 0
  %1574 = vmatpush.bf16.msra.mxu0 0
  %1575 = vmatpush.bf16.msra.mxu0 0
  %1576 = vmatpush.bf16.msra.mxu0 0
  %1577 = vmatpush.bf16.msra.mxu0 0
  %1578 = vmatpush.bf16.msra.mxu0 %v1020
  %1579 = vmatmul.bf16.gmra.mxu0 %v1218
  %v1580 = vpop.f32.mrf.mxu0
  %v1581 = vadd.f32 %v1568, %v1580
  %v1582 = vpop.f32.mrf.mxu0
  %1583 = vdwg.mxu0
  %v1584 = vtanh.pop %v1308
  %v1585 = vtanh.pop %v1399
  %v1586 = vtanh.pop %v1490
  %v1587 = vtanh.pop %v1581
  %v1592 = vrot.slane %v1585, 4
  %v1593 = vrot.slane %v1587, 4
  %vm1594 = vcmask 1043456
  %v1595 = vsel %vm1594, %v1584, %v1592
  %v1596 = vsel %vm1594, %v1586, %v1593
  %1599 = vst [vmem:[%s3] sm:$0xff] %v1595
  %1600 = vst [vmem:[%s3 + $0x8] sm:$0xff] %v1596
  // Predicated region
  $region14: #{generator_forward.23} parent=0 // pred_check
    _
  $region15: #{generator_forward.23} parent=0 // pred_check_branch
    %1602 = sbr.rel (0) target = $region17
  $region16: #{generator_forward.23} parent=0 // pred_region
    _
  $region17: #{generator_forward.23} parent=0 // pred_fallthru
    _
  // Predicated region
  $region18: #{generator_forward.23} parent=0 // pred_check
    _
  $region19: #{generator_forward.23} parent=0 // pred_check_branch
    %1604 = sbr.rel (0) target = $region21
  $region20: #{generator_forward.23} parent=0 // pred_region
    _
  $region21: #{generator_forward.23} parent=0 // pred_fallthru
    _

</llo_original>
